<compile_context>
chip_gen: v7x
topology: tpu7x:2x2x1
jax: 0.10.0
libtpu: 0.0.40
codegen_flags: <defaults>
</compile_context>

<pallas_src>
import functools
import math

import numpy as np
import jax
import jax.numpy as jnp
from jax import lax
from jax.experimental import pallas as pl
from jax.experimental.pallas import tpu as pltpu


# --------------------------------------------------------------------------- kernel

def fused_encoder_kernel(x_ref, pe_ref, kr_ref, kc_ref,
                         gcn_w_ref, gcn_b_ref,
                         wqkv_ref, bqkv_ref, wo_ref, bo_ref,
                         w1_ref, b1_ref, w2_ref, b2_ref, g_ref, beta_ref,
                         o_ref, *, num_heads, ln_eps):
    """Grid = (group, block).  The activation for the current batch group is resident in
    o_ref's VMEM block across the block axis; HBM writeback happens once per group."""
    blk = pl.program_id(1)
    B, T, D = o_ref.shape
    H = num_heads
    dh = D // H
    scale = float(D) ** 0.5
    bf16 = jnp.bfloat16

    # ---- fused prologue (block 0 only): embedding scale + sinusoidal positional encoding.
    # The reference masks the PE elementwise where the *scaled embedding* equals zero
    # (torch.where(inputs == 0, inputs, pe)); reproduced exactly.  dropout(0.1) = identity.
    @pl.when(blk == 0)
    def _():
        xe = x_ref[...] * scale
        o_ref[...] = xe + jnp.where(xe == 0.0, 0.0, pe_ref[...])

    keep_r = kr_ref[...]                                   # (B, 1, T), 1 = real token
    x = o_ref[...]                                         # (B, T, D) fp32, VMEM resident

    # ---- residual GCN, only for count > 0 (as in the reference layer).
    # TODO(synk): MultiGCNLayer source not provided; residual ReLU GCN assumed and the
    # edge-feature stream omitted (see module-level note).
    @pl.when(blk > 0)
    def _():
        adj_raw = kc_ref[...] * keep_r                     # (B, T, T) of {0, 1}
        deg = jnp.sum(adj_raw, axis=-1, keepdims=True)
        adj = adj_raw / jnp.maximum(deg, 1.0)              # exact row-normalization
        ax = jnp.einsum('bij,bjd->bid', adj.astype(bf16), x.astype(bf16),
                        preferred_element_type=jnp.float32)
        h = jnp.dot(ax.reshape(B * T, D).astype(bf16), gcn_w_ref[...],
                    preferred_element_type=jnp.float32)
        h = h.reshape(B, T, D) + gcn_b_ref[...]
        o_ref[...] = jnp.maximum(h, 0.0) + x

    x = o_ref[...]                                         # post-GCN activation

    # ---- multi-head self-attention: fused QKV projection over the folded group batch.
    # TODO(synk): MultiHeadAttention source not provided; standard key-padding-masked MHA
    # assumed (causality=0 path), edge_fea coupling omitted.  Padded query rows are not
    # re-zeroed afterwards (the reference does not visibly do so either).
    qkv = jnp.dot(x.reshape(B * T, D).astype(bf16), wqkv_ref[...],
                  preferred_element_type=jnp.float32)
    qkv = qkv.reshape(B, T, 3 * D) + bqkv_ref[...]
    bias = (keep_r - 1.0) * 1e9                            # 0 keep / -1e9 pad, (B, 1, T)
    inv_sqrt_dh = 1.0 / math.sqrt(float(dh))

    attn = None
    for h_i in range(H):                                   # static loop, H small
        q = qkv[:, :, h_i * dh:(h_i + 1) * dh].astype(bf16)
        k = qkv[:, :, D + h_i * dh:D + (h_i + 1) * dh].astype(bf16)
        v = qkv[:, :, 2 * D + h_i * dh:2 * D + (h_i + 1) * dh].astype(bf16)
        s = jnp.einsum('btd,bsd->bts', q, k,
                       preferred_element_type=jnp.float32) * inv_sqrt_dh + bias
        m = jnp.max(s, axis=-1, keepdims=True)
        p = jnp.exp(s - m)
        l = jnp.sum(p, axis=-1, keepdims=True)
        p = p * pl.reciprocal(l, approx=True)
        ctx = jnp.einsum('bts,bsd->btd', p.astype(bf16), v,
                         preferred_element_type=jnp.float32)
        # Fold this head straight into the output projection (wo pre-split (H, dh, D)):
        # no head concatenate / lane interleave needed.
        contrib = jnp.dot(ctx.reshape(B * T, dh).astype(bf16), wo_ref[h_i],
                          preferred_element_type=jnp.float32)
        attn = contrib if attn is None else attn + contrib
    y = attn.reshape(B, T, D) + bo_ref[...] + x            # out-proj bias + residual

    # ---- feed-forward + residual + LayerNorm.
    # TODO(synk): FeedForward source not provided; position-wise FFN + residual + LN assumed.
    h1 = jnp.maximum(
        jnp.dot(y.reshape(B * T, D).astype(bf16), w1_ref[...],
                preferred_element_type=jnp.float32) + b1_ref[...], 0.0)
    z = jnp.dot(h1.astype(bf16), w2_ref[...],
                preferred_element_type=jnp.float32) + b2_ref[...]
    z = z.reshape(B, T, D) + y
    mu = jnp.mean(z, axis=-1, keepdims=True)
    var = jnp.mean((z - mu) ** 2, axis=-1, keepdims=True)
    o_ref[...] = (z - mu) * lax.rsqrt(var + ln_eps) * g_ref[...] + beta_ref[...]


# --------------------------------------------------------------------------- wrapper

def sinusoid_pe_table(maxlen, E):
    pos = np.arange(maxlen, dtype=np.float64)[:, None]
    i = np.arange(E, dtype=np.float64)[None, :]
    angle = pos / np.power(10000.0, (i - (i % 2)) / float(E))
    pe = np.zeros((maxlen, E), dtype=np.float64)
    pe[:, 0::2] = np.sin(angle[:, 0::2])
    pe[:, 1::2] = np.cos(angle[:, 1::2])
    return jnp.asarray(pe, jnp.float32)


def init_params(key, d_model, num_heads, d_ff, num_blocks):
    def dense(k, shape, s=0.02):
        return s * jax.random.normal(k, shape, jnp.float32)

    H, dh = num_heads, d_model // num_heads
    keys = iter(jax.random.split(key, 7 * num_blocks))
    wqkv, wo, gcn_w, w1, w2 = [], [], [], [], []
    for _ in range(num_blocks):
        wq = dense(next(keys), (d_model, d_model))
        wk = dense(next(keys), (d_model, d_model))
        wv = dense(next(keys), (d_model, d_model))
        wqkv.append(jnp.concatenate([wq, wk, wv], axis=1))            # fused QKV (D, 3D)
        wo.append(dense(next(keys), (d_model, d_model)).reshape(H, dh, d_model))
        gcn_w.append(dense(next(keys), (d_model, d_model)))
        w1.append(dense(next(keys), (d_model, d_ff)))
        w2.append(dense(next(keys), (d_ff, d_model)))
    L = num_blocks
    zeros = lambda *s: jnp.zeros(s, jnp.float32)
    return {
        "wqkv": jnp.stack(wqkv), "bqkv": zeros(L, 1, 3 * d_model),
        "wo": jnp.stack(wo),     "bo": zeros(L, 1, d_model),
        "gcn_w": jnp.stack(gcn_w), "gcn_b": zeros(L, 1, d_model),
        "ff_w1": jnp.stack(w1),  "ff_b1": zeros(L, 1, d_ff),
        "ff_w2": jnp.stack(w2),  "ff_b2": zeros(L, 1, d_model),
        "ln_g": jnp.ones((L, 1, d_model), jnp.float32), "ln_b": zeros(L, 1, d_model),
    }


def transformer_encoder(params, embeddings, src_masks, edge_fea,
                        d_model, num_heads, maxlen, *, num_groups=1):
    """Single fused pallas_call for the scale+PE prologue and all encoder blocks.
    num_groups: leading 'parallel' grid axis. Use 1 on v5e/v6e (single TensorCore, maximal
    batch folding); use 2 on v7x to occupy both TensorCores."""
    # TODO(synk): edge_fea / semantic_sim / edge_layer path omitted: its only consumers
    # (MultiHeadAttention edge coupling, MultiGCNLayer) have no provided source and it never
    # influences the returned `enc`; previously it was dead work + the largest HBM write.
    del edge_fea

    N, T, D = embeddings.shape
    assert d_model == D
    L = params["wqkv"].shape[0]
    F = params["ff_w1"].shape[-1]
    H, dh = num_heads, D // num_heads
    assert N % num_groups == 0
    B = N // num_groups                                    # batch elements per grid step

    keep = (~src_masks).astype(jnp.float32)                # 1 = real token, 0 = padding
    keep_row = keep.reshape(N, 1, T)
    keep_col = keep.reshape(N, T, 1)
    pe = sinusoid_pe_table(maxlen, D)[:T]                  # position_ind = arange(T)

    bf = lambda w: w.astype(jnp.bfloat16)                  # MXU operands bf16, fp32 accum

    batched = lambda shape: pl.BlockSpec(shape, lambda g, b: (g, 0, 0))
    shared = lambda shape: pl.BlockSpec(shape, lambda g, b: (0,) * len(shape))

    def per_block(shape):                                  # stacked per-block weights
        zeros = (0,) * len(shape)
        return pl.BlockSpec((None,) + tuple(shape), lambda g, b: (b,) + zeros)

    return pl.pallas_call(
        functools.partial(fused_encoder_kernel, num_heads=num_heads, ln_eps=1e-5),
        out_shape=jax.ShapeDtypeStruct((N, T, D), jnp.float32),
        grid=(num_groups, L),
        in_specs=[
            batched((B, T, D)),            # embeddings
            shared((T, D)),                # positional-encoding table
            batched((B, 1, T)),            # keep mask, row form
            batched((B, T, 1)),            # keep mask, column form
            per_block((D, D)),             # gcn_w
            per_block((1, D)),             # gcn_b
            per_block((D, 3 * D)),         # wqkv (fused QKV)
            per_block((1, 3 * D)),         # bqkv
            per_block((H, dh, D)),         # wo, pre-split per head
            per_block((1, D)),             # bo
            per_block((D, F)),             # ff_w1
            per_block((1, F)),             # ff_b1
            per_block((F, D)),             # ff_w2
            per_block((1, D)),             # ff_b2
            per_block((1, D)),             # ln_g
            per_block((1, D)),             # ln_b
        ],
        out_specs=pl.BlockSpec((B, T, D), lambda g, b: (g, 0, 0)),
        compiler_params=pltpu.CompilerParams(
            dimension_semantics=("parallel", "arbitrary"),
            vmem_limit_bytes=32 * 1024 * 1024,
        ),
    )(embeddings, pe, keep_row, keep_col,
      bf(params["gcn_w"]), params["gcn_b"],
      bf(params["wqkv"]), params["bqkv"],
      bf(params["wo"]), params["bo"],
      bf(params["ff_w1"]), params["ff_b1"],
      bf(params["ff_w2"]), params["ff_b2"],
      params["ln_g"], params["ln_b"])


# --------------------------------------------------------------------------- main

if __name__ == "__main__":
    # hp: d_model=32, num_heads=4, d_ff=64, num_blocks=2, maxlen1=16
    N, T, D = 2, 8, 32
    NUM_HEADS, D_FF, NUM_BLOCKS, MAXLEN = 4, 64, 2, 16

    root = jax.random.PRNGKey(0)
    k_emb, k_edge, k_par = jax.random.split(root, 3)
    src_masks = jnp.zeros((N, T), bool).at[:, T - 2:].set(True)     # last 2 positions = padding
    embeddings = jax.random.normal(k_emb, (N, T, D), jnp.float32)
    embeddings = embeddings * (~src_masks)[..., None]               # zero padded positions
    edge_fea = jax.random.normal(k_edge, (N, T, T, 7), jnp.float32)

    params = init_params(k_par, D, NUM_HEADS, D_FF, NUM_BLOCKS)

    out = transformer_encoder(params, embeddings, src_masks, edge_fea,
                              d_model=D, num_heads=NUM_HEADS, maxlen=MAXLEN,
                              num_groups=1)   # set num_groups=2 on v7x (2 TensorCores)
    jax.block_until_ready(out)
    assert out.shape == (N, T, D)
    assert bool(jnp.all(jnp.isfinite(out)))
    print("KERNEL_OK")
</pallas_src>

<mosaic_0001>
module attributes {stable_mosaic.version = 11 : i64} {
  func.func @fused_encoder_kernel(%arg0: i32, %arg1: i32, %arg2: memref<2x8x32xf32, #tpu.memory_space<vmem>>, %arg3: memref<8x32xf32, #tpu.memory_space<vmem>>, %arg4: memref<2x1x8xf32, #tpu.memory_space<vmem>>, %arg5: memref<2x8x1xf32, #tpu.memory_space<vmem>>, %arg6: memref<1x32x32xbf16, #tpu.memory_space<vmem>>, %arg7: memref<1x1x32xf32, #tpu.memory_space<vmem>>, %arg8: memref<1x32x96xbf16, #tpu.memory_space<vmem>>, %arg9: memref<1x1x96xf32, #tpu.memory_space<vmem>>, %arg10: memref<1x4x8x32xbf16, #tpu.memory_space<vmem>>, %arg11: memref<1x1x32xf32, #tpu.memory_space<vmem>>, %arg12: memref<1x32x64xbf16, #tpu.memory_space<vmem>>, %arg13: memref<1x1x64xf32, #tpu.memory_space<vmem>>, %arg14: memref<1x64x32xbf16, #tpu.memory_space<vmem>>, %arg15: memref<1x1x32xf32, #tpu.memory_space<vmem>>, %arg16: memref<1x1x32xf32, #tpu.memory_space<vmem>>, %arg17: memref<1x1x32xf32, #tpu.memory_space<vmem>>, %arg18: memref<2x8x32xf32, #tpu.memory_space<vmem>>) attributes {dimension_semantics = [#tpu.dimension_semantics<parallel>, #tpu.dimension_semantics<arbitrary>], iteration_bounds = array<i64: 1, 2>, scalar_prefetch = 0 : i64, scratch_operands = 0 : i64, tpu.core_type = #tpu.core_type<tc>, window_params = [{transform_indices = @transform_0, window_bounds = array<i64: 2, 8, 32>}, {pipeline_mode = #tpu.pipeline_mode<synchronous>, transform_indices = @transform_1, window_bounds = array<i64: 8, 32>}, {transform_indices = @transform_2, window_bounds = array<i64: 2, 1, 8>}, {transform_indices = @transform_3, window_bounds = array<i64: 2, 8, 1>}, {transform_indices = @transform_4, window_bounds = array<i64: 1, 32, 32>}, {transform_indices = @transform_5, window_bounds = array<i64: 1, 1, 32>}, {transform_indices = @transform_6, window_bounds = array<i64: 1, 32, 96>}, {transform_indices = @transform_7, window_bounds = array<i64: 1, 1, 96>}, {transform_indices = @transform_8, window_bounds = array<i64: 1, 4, 8, 32>}, {transform_indices = @transform_9, window_bounds = array<i64: 1, 1, 32>}, {transform_indices = @transform_10, window_bounds = array<i64: 1, 32, 64>}, {transform_indices = @transform_11, window_bounds = array<i64: 1, 1, 64>}, {transform_indices = @transform_12, window_bounds = array<i64: 1, 64, 32>}, {transform_indices = @transform_13, window_bounds = array<i64: 1, 1, 32>}, {transform_indices = @transform_14, window_bounds = array<i64: 1, 1, 32>}, {transform_indices = @transform_15, window_bounds = array<i64: 1, 1, 32>}, {transform_indices = @transform_16, window_bounds = array<i64: 2, 8, 32>}]} {
    %c0_i32 = arith.constant 0 : i32
    %0 = arith.cmpi eq, %arg1, %c0_i32 : i32
    %1 = arith.extui %0 : i1 to i32
    %c0_i32_0 = arith.constant 0 : i32
    %2 = arith.cmpi ne, %1, %c0_i32_0 : i32
    scf.if %2 {
      %c0_88 = arith.constant 0 : index
      %c0_89 = arith.constant 0 : index
      %c0_90 = arith.constant 0 : index
      %196 = vector.load %arg2[%c0_88, %c0_89, %c0_90] : memref<2x8x32xf32, #tpu.memory_space<vmem>>, vector<2x8x32xf32>
      %cst_91 = arith.constant 5.65685415 : f32
      %197 = vector.broadcast %cst_91 : f32 to vector<2x8x32xf32>
      %198 = arith.mulf %196, %197 : vector<2x8x32xf32>
      %cst_92 = arith.constant 0.000000e+00 : f32
      %199 = vector.broadcast %cst_92 : f32 to vector<2x8x32xf32>
      %200 = arith.cmpf oeq, %198, %199 : vector<2x8x32xf32>
      %c0_93 = arith.constant 0 : index
      %c0_94 = arith.constant 0 : index
      %201 = vector.load %arg3[%c0_93, %c0_94] : memref<8x32xf32, #tpu.memory_space<vmem>>, vector<8x32xf32>
      %cst_95 = arith.constant 0.000000e+00 : f32
      %202 = vector.broadcast %cst_95 : f32 to vector<2x8x32xf32>
      %203 = vector.shape_cast %201 : vector<8x32xf32> to vector<1x8x32xf32>
      %204 = vector.broadcast %203 : vector<1x8x32xf32> to vector<2x8x32xf32>
      %205 = arith.select %200, %202, %204 : vector<2x8x32xi1>, vector<2x8x32xf32>
      %206 = arith.addf %198, %205 : vector<2x8x32xf32>
      %c0_96 = arith.constant 0 : index
      %c0_97 = arith.constant 0 : index
      %c0_98 = arith.constant 0 : index
      %207 = vector.load %arg18[%c0_96, %c0_97, %c0_98] : memref<2x8x32xf32, #tpu.memory_space<vmem>>, vector<2x8x32xf32>
      tpu.vector_store %arg18[%c0_96, %c0_97, %c0_98], %206 {strides = array<i32>} : memref<2x8x32xf32, #tpu.memory_space<vmem>>, vector<2x8x32xf32>,
    } else {
    }
    %c0 = arith.constant 0 : index
    %c0_1 = arith.constant 0 : index
    %c0_2 = arith.constant 0 : index
    %3 = vector.load %arg4[%c0, %c0_1, %c0_2] : memref<2x1x8xf32, #tpu.memory_space<vmem>>, vector<2x1x8xf32>
    %c0_3 = arith.constant 0 : index
    %c0_4 = arith.constant 0 : index
    %c0_5 = arith.constant 0 : index
    %4 = vector.load %arg18[%c0_3, %c0_4, %c0_5] : memref<2x8x32xf32, #tpu.memory_space<vmem>>, vector<2x8x32xf32>
    %c0_i32_6 = arith.constant 0 : i32
    %5 = arith.cmpi sgt, %arg1, %c0_i32_6 : i32
    %6 = arith.extui %5 : i1 to i32
    %c0_i32_7 = arith.constant 0 : i32
    %7 = arith.cmpi ne, %6, %c0_i32_7 : i32
    scf.if %7 {
      %c0_88 = arith.constant 0 : index
      %c0_89 = arith.constant 0 : index
      %c0_90 = arith.constant 0 : index
      %196 = vector.load %arg5[%c0_88, %c0_89, %c0_90] : memref<2x8x1xf32, #tpu.memory_space<vmem>>, vector<2x8x1xf32>
      %197 = vector.broadcast %196 : vector<2x8x1xf32> to vector<2x8x8xf32>
      %198 = vector.broadcast %3 : vector<2x1x8xf32> to vector<2x8x8xf32>
      %199 = arith.mulf %197, %198 : vector<2x8x8xf32>
      %cst_91 = arith.constant dense<0.000000e+00> : vector<2x8xf32>
      %200 = vector.multi_reduction <add>, %199, %cst_91 [2] : vector<2x8x8xf32> to vector<2x8xf32>
      %201 = vector.shape_cast %200 : vector<2x8xf32> to vector<2x8x1xf32>
      %cst_92 = arith.constant 1.000000e+00 : f32
      %202 = vector.broadcast %cst_92 : f32 to vector<2x8x1xf32>
      %203 = arith.maximumf %201, %202 : vector<2x8x1xf32>
      %204 = vector.broadcast %203 : vector<2x8x1xf32> to vector<2x8x8xf32>
      %205 = arith.divf %199, %204 : vector<2x8x8xf32>
      %206 = arith.truncf %205 : vector<2x8x8xf32> to vector<2x8x8xbf16>
      %207 = arith.truncf %4 : vector<2x8x32xf32> to vector<2x8x32xbf16>
      "tpu.trace_start"() <{level = 10 : i32, message = "bij,bjd->bid"}> : () -> ()
      %cst_93 = arith.constant dense<0.000000e+00> : vector<2x8x32xf32>
      %208 = tpu.matmul %206, %207, %cst_93 {dimension_numbers = #tpu.dot_dimension_numbers<[2], [1], [1], [2], [0, 0, 0, 1, 1, 2], [0], [0]>} : vector<2x8x8xbf16>, vector<2x8x32xbf16>, vector<2x8x32xf32> -> vector<2x8x32xf32>
      "tpu.trace_stop"() : () -> ()
      %209 = vector.shape_cast %208 : vector<2x8x32xf32> to vector<16x32xf32>
      %210 = arith.truncf %209 : vector<16x32xf32> to vector<16x32xbf16>
      %c0_94 = arith.constant 0 : index
      %c0_95 = arith.constant 0 : index
      %c0_96 = arith.constant 0 : index
      %211 = vector.load %arg6[%c0_94, %c0_95, %c0_96] : memref<1x32x32xbf16, #tpu.memory_space<vmem>>, vector<1x32x32xbf16>
      %212 = vector.shape_cast %211 : vector<1x32x32xbf16> to vector<32x32xbf16>
      %cst_97 = arith.constant dense<0.000000e+00> : vector<16x32xf32>
      %213 = tpu.matmul %210, %212, %cst_97 {dimension_numbers = #tpu.dot_dimension_numbers<[1], [0], [0], [1], [0, 0, 1, 1], [], []>} : vector<16x32xbf16>, vector<32x32xbf16>, vector<16x32xf32> -> vector<16x32xf32>
      %214 = vector.shape_cast %213 : vector<16x32xf32> to vector<2x8x32xf32>
      %c0_98 = arith.constant 0 : index
      %c0_99 = arith.constant 0 : index
      %c0_100 = arith.constant 0 : index
      %215 = vector.load %arg7[%c0_98, %c0_99, %c0_100] : memref<1x1x32xf32, #tpu.memory_space<vmem>>, vector<1x1x32xf32>
      %216 = vector.shape_cast %215 : vector<1x1x32xf32> to vector<1x32xf32>
      %217 = vector.shape_cast %216 : vector<1x32xf32> to vector<1x1x32xf32>
      %218 = vector.broadcast %217 : vector<1x1x32xf32> to vector<2x8x32xf32>
      %219 = arith.addf %214, %218 : vector<2x8x32xf32>
      %cst_101 = arith.constant 0.000000e+00 : f32
      %220 = vector.broadcast %cst_101 : f32 to vector<2x8x32xf32>
      %221 = arith.maximumf %219, %220 : vector<2x8x32xf32>
      %222 = arith.addf %221, %4 : vector<2x8x32xf32>
      %c0_102 = arith.constant 0 : index
      %c0_103 = arith.constant 0 : index
      %c0_104 = arith.constant 0 : index
      %223 = vector.load %arg18[%c0_102, %c0_103, %c0_104] : memref<2x8x32xf32, #tpu.memory_space<vmem>>, vector<2x8x32xf32>
      tpu.vector_store %arg18[%c0_102, %c0_103, %c0_104], %222 {strides = array<i32>} : memref<2x8x32xf32, #tpu.memory_space<vmem>>, vector<2x8x32xf32>,
    } else {
    }
    %c0_8 = arith.constant 0 : index
    %c0_9 = arith.constant 0 : index
    %c0_10 = arith.constant 0 : index
    %8 = vector.load %arg18[%c0_8, %c0_9, %c0_10] : memref<2x8x32xf32, #tpu.memory_space<vmem>>, vector<2x8x32xf32>
    %9 = vector.shape_cast %8 : vector<2x8x32xf32> to vector<16x32xf32>
    %10 = arith.truncf %9 : vector<16x32xf32> to vector<16x32xbf16>
    %c0_11 = arith.constant 0 : index
    %c0_12 = arith.constant 0 : index
    %c0_13 = arith.constant 0 : index
    %11 = vector.load %arg8[%c0_11, %c0_12, %c0_13] : memref<1x32x96xbf16, #tpu.memory_space<vmem>>, vector<1x32x96xbf16>
    %12 = vector.shape_cast %11 : vector<1x32x96xbf16> to vector<32x96xbf16>
    %cst = arith.constant dense<0.000000e+00> : vector<16x96xf32>
    %13 = tpu.matmul %10, %12, %cst {dimension_numbers = #tpu.dot_dimension_numbers<[1], [0], [0], [1], [0, 0, 1, 1], [], []>} : vector<16x32xbf16>, vector<32x96xbf16>, vector<16x96xf32> -> vector<16x96xf32>
    %14 = vector.shape_cast %13 : vector<16x96xf32> to vector<2x8x96xf32>
    %c0_14 = arith.constant 0 : index
    %c0_15 = arith.constant 0 : index
    %c0_16 = arith.constant 0 : index
    %15 = vector.load %arg9[%c0_14, %c0_15, %c0_16] : memref<1x1x96xf32, #tpu.memory_space<vmem>>, vector<1x1x96xf32>
    %16 = vector.shape_cast %15 : vector<1x1x96xf32> to vector<1x96xf32>
    %17 = vector.shape_cast %16 : vector<1x96xf32> to vector<1x1x96xf32>
    %18 = vector.broadcast %17 : vector<1x1x96xf32> to vector<2x8x96xf32>
    %19 = arith.addf %14, %18 : vector<2x8x96xf32>
    %cst_17 = arith.constant 1.000000e+00 : f32
    %20 = vector.broadcast %cst_17 : f32 to vector<2x1x8xf32>
    %21 = arith.subf %3, %20 : vector<2x1x8xf32>
    %cst_18 = arith.constant 1.000000e+09 : f32
    %22 = vector.broadcast %cst_18 : f32 to vector<2x1x8xf32>
    %23 = arith.mulf %21, %22 : vector<2x1x8xf32>
    %24 = vector.extract_strided_slice %19 {offsets = [0, 0, 0], sizes = [2, 8, 8], strides = [1, 1, 1]} : vector<2x8x96xf32> to vector<2x8x8xf32>
    %25 = arith.truncf %24 : vector<2x8x8xf32> to vector<2x8x8xbf16>
    %26 = vector.extract_strided_slice %19 {offsets = [0, 0, 32], sizes = [2, 8, 8], strides = [1, 1, 1]} : vector<2x8x96xf32> to vector<2x8x8xf32>
    %27 = arith.truncf %26 : vector<2x8x8xf32> to vector<2x8x8xbf16>
    %28 = vector.extract_strided_slice %19 {offsets = [0, 0, 64], sizes = [2, 8, 8], strides = [1, 1, 1]} : vector<2x8x96xf32> to vector<2x8x8xf32>
    %29 = arith.truncf %28 : vector<2x8x8xf32> to vector<2x8x8xbf16>
    "tpu.trace_start"() <{level = 10 : i32, message = "btd,bsd->bts"}> : () -> ()
    %cst_19 = arith.constant dense<0.000000e+00> : vector<2x8x8xf32>
    %30 = tpu.matmul %25, %27, %cst_19 {dimension_numbers = #tpu.dot_dimension_numbers<[2], [2], [1], [1], [0, 0, 0, 1, 1, 1], [0], [0]>} : vector<2x8x8xbf16>, vector<2x8x8xbf16>, vector<2x8x8xf32> -> vector<2x8x8xf32>
    "tpu.trace_stop"() : () -> ()
    %cst_20 = arith.constant 0.353553385 : f32
    %31 = vector.broadcast %cst_20 : f32 to vector<2x8x8xf32>
    %32 = arith.mulf %30, %31 : vector<2x8x8xf32>
    %33 = vector.broadcast %23 : vector<2x1x8xf32> to vector<2x8x8xf32>
    %34 = arith.addf %32, %33 : vector<2x8x8xf32>
    %cst_21 = arith.constant dense<0xFF800000> : vector<2x8xf32>
    %35 = vector.multi_reduction <maximumf>, %34, %cst_21 [2] : vector<2x8x8xf32> to vector<2x8xf32>
    %36 = vector.shape_cast %35 : vector<2x8xf32> to vector<2x8x1xf32>
    %37 = vector.broadcast %36 : vector<2x8x1xf32> to vector<2x8x8xf32>
    %38 = arith.subf %34, %37 : vector<2x8x8xf32>
    %39 = math.exp %38 : vector<2x8x8xf32>
    %cst_22 = arith.constant dense<0.000000e+00> : vector<2x8xf32>
    %40 = vector.multi_reduction <add>, %39, %cst_22 [2] : vector<2x8x8xf32> to vector<2x8xf32>
    %41 = vector.shape_cast %40 : vector<2x8xf32> to vector<2x8x1xf32>
    %42 = tpu.reciprocal %41 {approx = true} : vector<2x8x1xf32> -> vector<2x8x1xf32>
    %43 = vector.broadcast %42 : vector<2x8x1xf32> to vector<2x8x8xf32>
    %44 = arith.mulf %39, %43 : vector<2x8x8xf32>
    %45 = arith.truncf %44 : vector<2x8x8xf32> to vector<2x8x8xbf16>
    "tpu.trace_start"() <{level = 10 : i32, message = "bts,bsd->btd"}> : () -> ()
    %cst_23 = arith.constant dense<0.000000e+00> : vector<2x8x8xf32>
    %46 = tpu.matmul %45, %29, %cst_23 {dimension_numbers = #tpu.dot_dimension_numbers<[2], [1], [1], [2], [0, 0, 0, 1, 1, 2], [0], [0]>} : vector<2x8x8xbf16>, vector<2x8x8xbf16>, vector<2x8x8xf32> -> vector<2x8x8xf32>
    "tpu.trace_stop"() : () -> ()
    %47 = vector.shape_cast %46 : vector<2x8x8xf32> to vector<16x8xf32>
    %48 = arith.truncf %47 : vector<16x8xf32> to vector<16x8xbf16>
    %c0_24 = arith.constant 0 : index
    %c0_25 = arith.constant 0 : index
    %c0_26 = arith.constant 0 : index
    %c0_27 = arith.constant 0 : index
    %49 = vector.load %arg10[%c0_24, %c0_25, %c0_26, %c0_27] : memref<1x4x8x32xbf16, #tpu.memory_space<vmem>>, vector<1x1x8x32xbf16>
    %50 = vector.shape_cast %49 : vector<1x1x8x32xbf16> to vector<8x32xbf16>
    %cst_28 = arith.constant dense<0.000000e+00> : vector<16x32xf32>
    %51 = tpu.matmul %48, %50, %cst_28 {dimension_numbers = #tpu.dot_dimension_numbers<[1], [0], [0], [1], [0, 0, 1, 1], [], []>} : vector<16x8xbf16>, vector<8x32xbf16>, vector<16x32xf32> -> vector<16x32xf32>
    %52 = vector.extract_strided_slice %19 {offsets = [0, 0, 8], sizes = [2, 8, 8], strides = [1, 1, 1]} : vector<2x8x96xf32> to vector<2x8x8xf32>
    %53 = arith.truncf %52 : vector<2x8x8xf32> to vector<2x8x8xbf16>
    %54 = vector.extract_strided_slice %19 {offsets = [0, 0, 40], sizes = [2, 8, 8], strides = [1, 1, 1]} : vector<2x8x96xf32> to vector<2x8x8xf32>
    %55 = arith.truncf %54 : vector<2x8x8xf32> to vector<2x8x8xbf16>
    %56 = vector.extract_strided_slice %19 {offsets = [0, 0, 72], sizes = [2, 8, 8], strides = [1, 1, 1]} : vector<2x8x96xf32> to vector<2x8x8xf32>
    %57 = arith.truncf %56 : vector<2x8x8xf32> to vector<2x8x8xbf16>
    "tpu.trace_start"() <{level = 10 : i32, message = "btd,bsd->bts"}> : () -> ()
    %cst_29 = arith.constant dense<0.000000e+00> : vector<2x8x8xf32>
    %58 = tpu.matmul %53, %55, %cst_29 {dimension_numbers = #tpu.dot_dimension_numbers<[2], [2], [1], [1], [0, 0, 0, 1, 1, 1], [0], [0]>} : vector<2x8x8xbf16>, vector<2x8x8xbf16>, vector<2x8x8xf32> -> vector<2x8x8xf32>
    "tpu.trace_stop"() : () -> ()
    %cst_30 = arith.constant 0.353553385 : f32
    %59 = vector.broadcast %cst_30 : f32 to vector<2x8x8xf32>
    %60 = arith.mulf %58, %59 : vector<2x8x8xf32>
    %61 = vector.broadcast %23 : vector<2x1x8xf32> to vector<2x8x8xf32>
    %62 = arith.addf %60, %61 : vector<2x8x8xf32>
    %cst_31 = arith.constant dense<0xFF800000> : vector<2x8xf32>
    %63 = vector.multi_reduction <maximumf>, %62, %cst_31 [2] : vector<2x8x8xf32> to vector<2x8xf32>
    %64 = vector.shape_cast %63 : vector<2x8xf32> to vector<2x8x1xf32>
    %65 = vector.broadcast %64 : vector<2x8x1xf32> to vector<2x8x8xf32>
    %66 = arith.subf %62, %65 : vector<2x8x8xf32>
    %67 = math.exp %66 : vector<2x8x8xf32>
    %cst_32 = arith.constant dense<0.000000e+00> : vector<2x8xf32>
    %68 = vector.multi_reduction <add>, %67, %cst_32 [2] : vector<2x8x8xf32> to vector<2x8xf32>
    %69 = vector.shape_cast %68 : vector<2x8xf32> to vector<2x8x1xf32>
    %70 = tpu.reciprocal %69 {approx = true} : vector<2x8x1xf32> -> vector<2x8x1xf32>
    %71 = vector.broadcast %70 : vector<2x8x1xf32> to vector<2x8x8xf32>
    %72 = arith.mulf %67, %71 : vector<2x8x8xf32>
    %73 = arith.truncf %72 : vector<2x8x8xf32> to vector<2x8x8xbf16>
    "tpu.trace_start"() <{level = 10 : i32, message = "bts,bsd->btd"}> : () -> ()
    %cst_33 = arith.constant dense<0.000000e+00> : vector<2x8x8xf32>
    %74 = tpu.matmul %73, %57, %cst_33 {dimension_numbers = #tpu.dot_dimension_numbers<[2], [1], [1], [2], [0, 0, 0, 1, 1, 2], [0], [0]>} : vector<2x8x8xbf16>, vector<2x8x8xbf16>, vector<2x8x8xf32> -> vector<2x8x8xf32>
    "tpu.trace_stop"() : () -> ()
    %75 = vector.shape_cast %74 : vector<2x8x8xf32> to vector<16x8xf32>
    %76 = arith.truncf %75 : vector<16x8xf32> to vector<16x8xbf16>
    %c0_34 = arith.constant 0 : index
    %c1 = arith.constant 1 : index
    %c0_35 = arith.constant 0 : index
    %c0_36 = arith.constant 0 : index
    %77 = vector.load %arg10[%c0_34, %c1, %c0_35, %c0_36] : memref<1x4x8x32xbf16, #tpu.memory_space<vmem>>, vector<1x1x8x32xbf16>
    %78 = vector.shape_cast %77 : vector<1x1x8x32xbf16> to vector<8x32xbf16>
    %cst_37 = arith.constant dense<0.000000e+00> : vector<16x32xf32>
    %79 = tpu.matmul %76, %78, %cst_37 {dimension_numbers = #tpu.dot_dimension_numbers<[1], [0], [0], [1], [0, 0, 1, 1], [], []>} : vector<16x8xbf16>, vector<8x32xbf16>, vector<16x32xf32> -> vector<16x32xf32>
    %80 = arith.addf %51, %79 : vector<16x32xf32>
    %81 = vector.extract_strided_slice %19 {offsets = [0, 0, 16], sizes = [2, 8, 8], strides = [1, 1, 1]} : vector<2x8x96xf32> to vector<2x8x8xf32>
    %82 = arith.truncf %81 : vector<2x8x8xf32> to vector<2x8x8xbf16>
    %83 = vector.extract_strided_slice %19 {offsets = [0, 0, 48], sizes = [2, 8, 8], strides = [1, 1, 1]} : vector<2x8x96xf32> to vector<2x8x8xf32>
    %84 = arith.truncf %83 : vector<2x8x8xf32> to vector<2x8x8xbf16>
    %85 = vector.extract_strided_slice %19 {offsets = [0, 0, 80], sizes = [2, 8, 8], strides = [1, 1, 1]} : vector<2x8x96xf32> to vector<2x8x8xf32>
    %86 = arith.truncf %85 : vector<2x8x8xf32> to vector<2x8x8xbf16>
    "tpu.trace_start"() <{level = 10 : i32, message = "btd,bsd->bts"}> : () -> ()
    %cst_38 = arith.constant dense<0.000000e+00> : vector<2x8x8xf32>
    %87 = tpu.matmul %82, %84, %cst_38 {dimension_numbers = #tpu.dot_dimension_numbers<[2], [2], [1], [1], [0, 0, 0, 1, 1, 1], [0], [0]>} : vector<2x8x8xbf16>, vector<2x8x8xbf16>, vector<2x8x8xf32> -> vector<2x8x8xf32>
    "tpu.trace_stop"() : () -> ()
    %cst_39 = arith.constant 0.353553385 : f32
    %88 = vector.broadcast %cst_39 : f32 to vector<2x8x8xf32>
    %89 = arith.mulf %87, %88 : vector<2x8x8xf32>
    %90 = vector.broadcast %23 : vector<2x1x8xf32> to vector<2x8x8xf32>
    %91 = arith.addf %89, %90 : vector<2x8x8xf32>
    %cst_40 = arith.constant dense<0xFF800000> : vector<2x8xf32>
    %92 = vector.multi_reduction <maximumf>, %91, %cst_40 [2] : vector<2x8x8xf32> to vector<2x8xf32>
    %93 = vector.shape_cast %92 : vector<2x8xf32> to vector<2x8x1xf32>
    %94 = vector.broadcast %93 : vector<2x8x1xf32> to vector<2x8x8xf32>
    %95 = arith.subf %91, %94 : vector<2x8x8xf32>
    %96 = math.exp %95 : vector<2x8x8xf32>
    %cst_41 = arith.constant dense<0.000000e+00> : vector<2x8xf32>
    %97 = vector.multi_reduction <add>, %96, %cst_41 [2] : vector<2x8x8xf32> to vector<2x8xf32>
    %98 = vector.shape_cast %97 : vector<2x8xf32> to vector<2x8x1xf32>
    %99 = tpu.reciprocal %98 {approx = true} : vector<2x8x1xf32> -> vector<2x8x1xf32>
    %100 = vector.broadcast %99 : vector<2x8x1xf32> to vector<2x8x8xf32>
    %101 = arith.mulf %96, %100 : vector<2x8x8xf32>
    %102 = arith.truncf %101 : vector<2x8x8xf32> to vector<2x8x8xbf16>
    "tpu.trace_start"() <{level = 10 : i32, message = "bts,bsd->btd"}> : () -> ()
    %cst_42 = arith.constant dense<0.000000e+00> : vector<2x8x8xf32>
    %103 = tpu.matmul %102, %86, %cst_42 {dimension_numbers = #tpu.dot_dimension_numbers<[2], [1], [1], [2], [0, 0, 0, 1, 1, 2], [0], [0]>} : vector<2x8x8xbf16>, vector<2x8x8xbf16>, vector<2x8x8xf32> -> vector<2x8x8xf32>
    "tpu.trace_stop"() : () -> ()
    %104 = vector.shape_cast %103 : vector<2x8x8xf32> to vector<16x8xf32>
    %105 = arith.truncf %104 : vector<16x8xf32> to vector<16x8xbf16>
    %c0_43 = arith.constant 0 : index
    %c2 = arith.constant 2 : index
    %c0_44 = arith.constant 0 : index
    %c0_45 = arith.constant 0 : index
    %106 = vector.load %arg10[%c0_43, %c2, %c0_44, %c0_45] : memref<1x4x8x32xbf16, #tpu.memory_space<vmem>>, vector<1x1x8x32xbf16>
    %107 = vector.shape_cast %106 : vector<1x1x8x32xbf16> to vector<8x32xbf16>
    %cst_46 = arith.constant dense<0.000000e+00> : vector<16x32xf32>
    %108 = tpu.matmul %105, %107, %cst_46 {dimension_numbers = #tpu.dot_dimension_numbers<[1], [0], [0], [1], [0, 0, 1, 1], [], []>} : vector<16x8xbf16>, vector<8x32xbf16>, vector<16x32xf32> -> vector<16x32xf32>
    %109 = arith.addf %80, %108 : vector<16x32xf32>
    %110 = vector.extract_strided_slice %19 {offsets = [0, 0, 24], sizes = [2, 8, 8], strides = [1, 1, 1]} : vector<2x8x96xf32> to vector<2x8x8xf32>
    %111 = arith.truncf %110 : vector<2x8x8xf32> to vector<2x8x8xbf16>
    %112 = vector.extract_strided_slice %19 {offsets = [0, 0, 56], sizes = [2, 8, 8], strides = [1, 1, 1]} : vector<2x8x96xf32> to vector<2x8x8xf32>
    %113 = arith.truncf %112 : vector<2x8x8xf32> to vector<2x8x8xbf16>
    %114 = vector.extract_strided_slice %19 {offsets = [0, 0, 88], sizes = [2, 8, 8], strides = [1, 1, 1]} : vector<2x8x96xf32> to vector<2x8x8xf32>
    %115 = arith.truncf %114 : vector<2x8x8xf32> to vector<2x8x8xbf16>
    "tpu.trace_start"() <{level = 10 : i32, message = "btd,bsd->bts"}> : () -> ()
    %cst_47 = arith.constant dense<0.000000e+00> : vector<2x8x8xf32>
    %116 = tpu.matmul %111, %113, %cst_47 {dimension_numbers = #tpu.dot_dimension_numbers<[2], [2], [1], [1], [0, 0, 0, 1, 1, 1], [0], [0]>} : vector<2x8x8xbf16>, vector<2x8x8xbf16>, vector<2x8x8xf32> -> vector<2x8x8xf32>
    "tpu.trace_stop"() : () -> ()
    %cst_48 = arith.constant 0.353553385 : f32
    %117 = vector.broadcast %cst_48 : f32 to vector<2x8x8xf32>
    %118 = arith.mulf %116, %117 : vector<2x8x8xf32>
    %119 = vector.broadcast %23 : vector<2x1x8xf32> to vector<2x8x8xf32>
    %120 = arith.addf %118, %119 : vector<2x8x8xf32>
    %cst_49 = arith.constant dense<0xFF800000> : vector<2x8xf32>
    %121 = vector.multi_reduction <maximumf>, %120, %cst_49 [2] : vector<2x8x8xf32> to vector<2x8xf32>
    %122 = vector.shape_cast %121 : vector<2x8xf32> to vector<2x8x1xf32>
    %123 = vector.broadcast %122 : vector<2x8x1xf32> to vector<2x8x8xf32>
    %124 = arith.subf %120, %123 : vector<2x8x8xf32>
    %125 = math.exp %124 : vector<2x8x8xf32>
    %cst_50 = arith.constant dense<0.000000e+00> : vector<2x8xf32>
    %126 = vector.multi_reduction <add>, %125, %cst_50 [2] : vector<2x8x8xf32> to vector<2x8xf32>
    %127 = vector.shape_cast %126 : vector<2x8xf32> to vector<2x8x1xf32>
    %128 = tpu.reciprocal %127 {approx = true} : vector<2x8x1xf32> -> vector<2x8x1xf32>
    %129 = vector.broadcast %128 : vector<2x8x1xf32> to vector<2x8x8xf32>
    %130 = arith.mulf %125, %129 : vector<2x8x8xf32>
    %131 = arith.truncf %130 : vector<2x8x8xf32> to vector<2x8x8xbf16>
    "tpu.trace_start"() <{level = 10 : i32, message = "bts,bsd->btd"}> : () -> ()
    %cst_51 = arith.constant dense<0.000000e+00> : vector<2x8x8xf32>
    %132 = tpu.matmul %131, %115, %cst_51 {dimension_numbers = #tpu.dot_dimension_numbers<[2], [1], [1], [2], [0, 0, 0, 1, 1, 2], [0], [0]>} : vector<2x8x8xbf16>, vector<2x8x8xbf16>, vector<2x8x8xf32> -> vector<2x8x8xf32>
    "tpu.trace_stop"() : () -> ()
    %133 = vector.shape_cast %132 : vector<2x8x8xf32> to vector<16x8xf32>
    %134 = arith.truncf %133 : vector<16x8xf32> to vector<16x8xbf16>
    %c0_52 = arith.constant 0 : index
    %c3 = arith.constant 3 : index
    %c0_53 = arith.constant 0 : index
    %c0_54 = arith.constant 0 : index
    %135 = vector.load %arg10[%c0_52, %c3, %c0_53, %c0_54] : memref<1x4x8x32xbf16, #tpu.memory_space<vmem>>, vector<1x1x8x32xbf16>
    %136 = vector.shape_cast %135 : vector<1x1x8x32xbf16> to vector<8x32xbf16>
    %cst_55 = arith.constant dense<0.000000e+00> : vector<16x32xf32>
    %137 = tpu.matmul %134, %136, %cst_55 {dimension_numbers = #tpu.dot_dimension_numbers<[1], [0], [0], [1], [0, 0, 1, 1], [], []>} : vector<16x8xbf16>, vector<8x32xbf16>, vector<16x32xf32> -> vector<16x32xf32>
    %138 = arith.addf %109, %137 : vector<16x32xf32>
    %139 = vector.shape_cast %138 : vector<16x32xf32> to vector<2x8x32xf32>
    %c0_56 = arith.constant 0 : index
    %c0_57 = arith.constant 0 : index
    %c0_58 = arith.constant 0 : index
    %140 = vector.load %arg11[%c0_56, %c0_57, %c0_58] : memref<1x1x32xf32, #tpu.memory_space<vmem>>, vector<1x1x32xf32>
    %141 = vector.shape_cast %140 : vector<1x1x32xf32> to vector<1x32xf32>
    %142 = vector.shape_cast %141 : vector<1x32xf32> to vector<1x1x32xf32>
    %143 = vector.broadcast %142 : vector<1x1x32xf32> to vector<2x8x32xf32>
    %144 = arith.addf %139, %143 : vector<2x8x32xf32>
    %145 = arith.addf %144, %8 : vector<2x8x32xf32>
    %146 = vector.shape_cast %145 : vector<2x8x32xf32> to vector<16x32xf32>
    %147 = arith.truncf %146 : vector<16x32xf32> to vector<16x32xbf16>
    %c0_59 = arith.constant 0 : index
    %c0_60 = arith.constant 0 : index
    %c0_61 = arith.constant 0 : index
    %148 = vector.load %arg12[%c0_59, %c0_60, %c0_61] : memref<1x32x64xbf16, #tpu.memory_space<vmem>>, vector<1x32x64xbf16>
    %149 = vector.shape_cast %148 : vector<1x32x64xbf16> to vector<32x64xbf16>
    %cst_62 = arith.constant dense<0.000000e+00> : vector<16x64xf32>
    %150 = tpu.matmul %147, %149, %cst_62 {dimension_numbers = #tpu.dot_dimension_numbers<[1], [0], [0], [1], [0, 0, 1, 1], [], []>} : vector<16x32xbf16>, vector<32x64xbf16>, vector<16x64xf32> -> vector<16x64xf32>
    %c0_63 = arith.constant 0 : index
    %c0_64 = arith.constant 0 : index
    %c0_65 = arith.constant 0 : index
    %151 = vector.load %arg13[%c0_63, %c0_64, %c0_65] : memref<1x1x64xf32, #tpu.memory_space<vmem>>, vector<1x1x64xf32>
    %152 = vector.shape_cast %151 : vector<1x1x64xf32> to vector<1x64xf32>
    %153 = vector.broadcast %152 : vector<1x64xf32> to vector<16x64xf32>
    %154 = arith.addf %150, %153 : vector<16x64xf32>
    %cst_66 = arith.constant 0.000000e+00 : f32
    %155 = vector.broadcast %cst_66 : f32 to vector<16x64xf32>
    %156 = arith.maximumf %154, %155 : vector<16x64xf32>
    %157 = arith.truncf %156 : vector<16x64xf32> to vector<16x64xbf16>
    %c0_67 = arith.constant 0 : index
    %c0_68 = arith.constant 0 : index
    %c0_69 = arith.constant 0 : index
    %158 = vector.load %arg14[%c0_67, %c0_68, %c0_69] : memref<1x64x32xbf16, #tpu.memory_space<vmem>>, vector<1x64x32xbf16>
    %159 = vector.shape_cast %158 : vector<1x64x32xbf16> to vector<64x32xbf16>
    %cst_70 = arith.constant dense<0.000000e+00> : vector<16x32xf32>
    %160 = tpu.matmul %157, %159, %cst_70 {dimension_numbers = #tpu.dot_dimension_numbers<[1], [0], [0], [1], [0, 0, 1, 1], [], []>} : vector<16x64xbf16>, vector<64x32xbf16>, vector<16x32xf32> -> vector<16x32xf32>
    %c0_71 = arith.constant 0 : index
    %c0_72 = arith.constant 0 : index
    %c0_73 = arith.constant 0 : index
    %161 = vector.load %arg15[%c0_71, %c0_72, %c0_73] : memref<1x1x32xf32, #tpu.memory_space<vmem>>, vector<1x1x32xf32>
    %162 = vector.shape_cast %161 : vector<1x1x32xf32> to vector<1x32xf32>
    %163 = vector.broadcast %162 : vector<1x32xf32> to vector<16x32xf32>
    %164 = arith.addf %160, %163 : vector<16x32xf32>
    %165 = vector.shape_cast %164 : vector<16x32xf32> to vector<2x8x32xf32>
    %166 = arith.addf %165, %145 : vector<2x8x32xf32>
    %cst_74 = arith.constant dense<0.000000e+00> : vector<2x8xf32>
    %167 = vector.multi_reduction <add>, %166, %cst_74 [2] : vector<2x8x32xf32> to vector<2x8xf32>
    %168 = vector.shape_cast %167 : vector<2x8xf32> to vector<2x8x1xf32>
    %cst_75 = arith.constant 3.200000e+01 : f32
    %169 = vector.broadcast %cst_75 : f32 to vector<2x8x1xf32>
    %170 = arith.divf %168, %169 : vector<2x8x1xf32>
    %171 = vector.broadcast %170 : vector<2x8x1xf32> to vector<2x8x32xf32>
    %172 = arith.subf %166, %171 : vector<2x8x32xf32>
    %173 = arith.mulf %172, %172 : vector<2x8x32xf32>
    %cst_76 = arith.constant dense<0.000000e+00> : vector<2x8xf32>
    %174 = vector.multi_reduction <add>, %173, %cst_76 [2] : vector<2x8x32xf32> to vector<2x8xf32>
    %175 = vector.shape_cast %174 : vector<2x8xf32> to vector<2x8x1xf32>
    %cst_77 = arith.constant 3.200000e+01 : f32
    %176 = vector.broadcast %cst_77 : f32 to vector<2x8x1xf32>
    %177 = arith.divf %175, %176 : vector<2x8x1xf32>
    %178 = vector.broadcast %170 : vector<2x8x1xf32> to vector<2x8x32xf32>
    %179 = arith.subf %166, %178 : vector<2x8x32xf32>
    %cst_78 = arith.constant 9.99999974E-6 : f32
    %180 = vector.broadcast %cst_78 : f32 to vector<2x8x1xf32>
    %181 = arith.addf %177, %180 : vector<2x8x1xf32>
    %182 = math.rsqrt %181 : vector<2x8x1xf32>
    %183 = vector.broadcast %182 : vector<2x8x1xf32> to vector<2x8x32xf32>
    %184 = arith.mulf %179, %183 : vector<2x8x32xf32>
    %c0_79 = arith.constant 0 : index
    %c0_80 = arith.constant 0 : index
    %c0_81 = arith.constant 0 : index
    %185 = vector.load %arg16[%c0_79, %c0_80, %c0_81] : memref<1x1x32xf32, #tpu.memory_space<vmem>>, vector<1x1x32xf32>
    %186 = vector.shape_cast %185 : vector<1x1x32xf32> to vector<1x32xf32>
    %187 = vector.shape_cast %186 : vector<1x32xf32> to vector<1x1x32xf32>
    %188 = vector.broadcast %187 : vector<1x1x32xf32> to vector<2x8x32xf32>
    %189 = arith.mulf %184, %188 : vector<2x8x32xf32>
    %c0_82 = arith.constant 0 : index
    %c0_83 = arith.constant 0 : index
    %c0_84 = arith.constant 0 : index
    %190 = vector.load %arg17[%c0_82, %c0_83, %c0_84] : memref<1x1x32xf32, #tpu.memory_space<vmem>>, vector<1x1x32xf32>
    %191 = vector.shape_cast %190 : vector<1x1x32xf32> to vector<1x32xf32>
    %192 = vector.shape_cast %191 : vector<1x32xf32> to vector<1x1x32xf32>
    %193 = vector.broadcast %192 : vector<1x1x32xf32> to vector<2x8x32xf32>
    %194 = arith.addf %189, %193 : vector<2x8x32xf32>
    %c0_85 = arith.constant 0 : index
    %c0_86 = arith.constant 0 : index
    %c0_87 = arith.constant 0 : index
    %195 = vector.load %arg18[%c0_85, %c0_86, %c0_87] : memref<2x8x32xf32, #tpu.memory_space<vmem>>, vector<2x8x32xf32>
    tpu.vector_store %arg18[%c0_85, %c0_86, %c0_87], %194 {strides = array<i32>} : memref<2x8x32xf32, #tpu.memory_space<vmem>>, vector<2x8x32xf32>,
    return
  }
  func.func @transform_0(%arg0: i32, %arg1: i32) -> (i32, i32, i32) {
    %c0_i32 = arith.constant 0 : i32
    %c0_i32_0 = arith.constant 0 : i32
    %c0_i32_1 = arith.constant 0 : i32
    return %arg0, %c0_i32, %c0_i32_0 : i32, i32, i32
  }
  func.func @transform_1(%arg0: i32, %arg1: i32) -> (i32, i32) {
    %c0_i32 = arith.constant 0 : i32
    %c0_i32_0 = arith.constant 0 : i32
    %c0_i32_1 = arith.constant 0 : i32
    return %c0_i32, %c0_i32_0 : i32, i32
  }
  func.func @transform_2(%arg0: i32, %arg1: i32) -> (i32, i32, i32) {
    %c0_i32 = arith.constant 0 : i32
    %c0_i32_0 = arith.constant 0 : i32
    %c0_i32_1 = arith.constant 0 : i32
    return %arg0, %c0_i32, %c0_i32_0 : i32, i32, i32
  }
  func.func @transform_3(%arg0: i32, %arg1: i32) -> (i32, i32, i32) {
    %c0_i32 = arith.constant 0 : i32
    %c0_i32_0 = arith.constant 0 : i32
    %c0_i32_1 = arith.constant 0 : i32
    return %arg0, %c0_i32, %c0_i32_0 : i32, i32, i32
  }
  func.func @transform_4(%arg0: i32, %arg1: i32) -> (i32, i32, i32) {
    %c0_i32 = arith.constant 0 : i32
    %c0_i32_0 = arith.constant 0 : i32
    %c0_i32_1 = arith.constant 0 : i32
    return %arg1, %c0_i32, %c0_i32_0 : i32, i32, i32
  }
  func.func @transform_5(%arg0: i32, %arg1: i32) -> (i32, i32, i32) {
    %c0_i32 = arith.constant 0 : i32
    %c0_i32_0 = arith.constant 0 : i32
    %c0_i32_1 = arith.constant 0 : i32
    return %arg1, %c0_i32, %c0_i32_0 : i32, i32, i32
  }
  func.func @transform_6(%arg0: i32, %arg1: i32) -> (i32, i32, i32) {
    %c0_i32 = arith.constant 0 : i32
    %c0_i32_0 = arith.constant 0 : i32
    %c0_i32_1 = arith.constant 0 : i32
    return %arg1, %c0_i32, %c0_i32_0 : i32, i32, i32
  }
  func.func @transform_7(%arg0: i32, %arg1: i32) -> (i32, i32, i32) {
    %c0_i32 = arith.constant 0 : i32
    %c0_i32_0 = arith.constant 0 : i32
    %c0_i32_1 = arith.constant 0 : i32
    return %arg1, %c0_i32, %c0_i32_0 : i32, i32, i32
  }
  func.func @transform_8(%arg0: i32, %arg1: i32) -> (i32, i32, i32, i32) {
    %c0_i32 = arith.constant 0 : i32
    %c0_i32_0 = arith.constant 0 : i32
    %c0_i32_1 = arith.constant 0 : i32
    %c0_i32_2 = arith.constant 0 : i32
    return %arg1, %c0_i32, %c0_i32_0, %c0_i32_1 : i32, i32, i32, i32
  }
  func.func @transform_9(%arg0: i32, %arg1: i32) -> (i32, i32, i32) {
    %c0_i32 = arith.constant 0 : i32
    %c0_i32_0 = arith.constant 0 : i32
    %c0_i32_1 = arith.constant 0 : i32
    return %arg1, %c0_i32, %c0_i32_0 : i32, i32, i32
  }
  func.func @transform_10(%arg0: i32, %arg1: i32) -> (i32, i32, i32) {
    %c0_i32 = arith.constant 0 : i32
    %c0_i32_0 = arith.constant 0 : i32
    %c0_i32_1 = arith.constant 0 : i32
    return %arg1, %c0_i32, %c0_i32_0 : i32, i32, i32
  }
  func.func @transform_11(%arg0: i32, %arg1: i32) -> (i32, i32, i32) {
    %c0_i32 = arith.constant 0 : i32
    %c0_i32_0 = arith.constant 0 : i32
    %c0_i32_1 = arith.constant 0 : i32
    return %arg1, %c0_i32, %c0_i32_0 : i32, i32, i32
  }
  func.func @transform_12(%arg0: i32, %arg1: i32) -> (i32, i32, i32) {
    %c0_i32 = arith.constant 0 : i32
    %c0_i32_0 = arith.constant 0 : i32
    %c0_i32_1 = arith.constant 0 : i32
    return %arg1, %c0_i32, %c0_i32_0 : i32, i32, i32
  }
  func.func @transform_13(%arg0: i32, %arg1: i32) -> (i32, i32, i32) {
    %c0_i32 = arith.constant 0 : i32
    %c0_i32_0 = arith.constant 0 : i32
    %c0_i32_1 = arith.constant 0 : i32
    return %arg1, %c0_i32, %c0_i32_0 : i32, i32, i32
  }
  func.func @transform_14(%arg0: i32, %arg1: i32) -> (i32, i32, i32) {
    %c0_i32 = arith.constant 0 : i32
    %c0_i32_0 = arith.constant 0 : i32
    %c0_i32_1 = arith.constant 0 : i32
    return %arg1, %c0_i32, %c0_i32_0 : i32, i32, i32
  }
  func.func @transform_15(%arg0: i32, %arg1: i32) -> (i32, i32, i32) {
    %c0_i32 = arith.constant 0 : i32
    %c0_i32_0 = arith.constant 0 : i32
    %c0_i32_1 = arith.constant 0 : i32
    return %arg1, %c0_i32, %c0_i32_0 : i32, i32, i32
  }
  func.func @transform_16(%arg0: i32, %arg1: i32) -> (i32, i32, i32) {
    %c0_i32 = arith.constant 0 : i32
    %c0_i32_0 = arith.constant 0 : i32
    %c0_i32_1 = arith.constant 0 : i32
    return %arg0, %c0_i32, %c0_i32_0 : i32, i32, i32
  }
}

</mosaic_0001>

<llo_original>
// kernel: tpu_custom_call.1
$region0: #{tpu_custom_call.1}
  #allocation0 [shape = 'u32[]', space=smem, size = 0x4, offset = 0x4, fixed_abs, tag = 'smem constant byte address 0x4 - core index']
  #allocation1 [shape = 'u32[144,128]{1,0:T(1,128)}', space=vmem, size = 0x12000, scoped, tag = 'internal scratch']
  %s0 = inlined_call_operand.vmem [shape: f32[2,8,32], index: 0, kind: input, shape index: {}]
  %s1 = inlined_call_operand.hbm [shape: f32[8,32], index: 1, kind: input, shape index: {}]
  %s2 = inlined_call_operand.vmem [shape: f32[2,1,8], index: 2, kind: input, shape index: {}]
  %s3 = inlined_call_operand.vmem [shape: f32[2,8,1], index: 3, kind: input, shape index: {}]
  %s4 = inlined_call_operand.vmem [shape: bf16[2,32,32], index: 4, kind: input, shape index: {}]
  %s5 = inlined_call_operand.vmem [shape: f32[2,1,32], index: 5, kind: input, shape index: {}]
  %s6 = inlined_call_operand.vmem [shape: bf16[2,32,96], index: 6, kind: input, shape index: {}]
  %s7 = inlined_call_operand.vmem [shape: f32[2,1,96], index: 7, kind: input, shape index: {}]
  %s8 = inlined_call_operand.vmem [shape: bf16[2,4,8,32], index: 8, kind: input, shape index: {}]
  %s9 = inlined_call_operand.vmem [shape: f32[2,1,32], index: 9, kind: input, shape index: {}]
  %s10 = inlined_call_operand.hbm [shape: bf16[2,32,64], index: 10, kind: input, shape index: {}]
  %s11 = inlined_call_operand.vmem [shape: f32[2,1,64], index: 11, kind: input, shape index: {}]
  %s12 = inlined_call_operand.vmem [shape: bf16[2,64,32], index: 12, kind: input, shape index: {}]
  %s13 = inlined_call_operand.vmem [shape: f32[2,1,32], index: 13, kind: input, shape index: {}]
  %s14 = inlined_call_operand.vmem [shape: f32[2,1,32], index: 14, kind: input, shape index: {}]
  %s15 = inlined_call_operand.vmem [shape: f32[2,1,32], index: 15, kind: input, shape index: {}]
  %s16 = inlined_call_operand.hbm [shape: f32[2,8,32], index: 16, kind: output, shape index: {}]
  %s17 = sld [smem:[#allocation0]]
  $region113: #{tpu_custom_call.1} parent=0
    _
  %s19 = ssub.s32 1, %s17
  %s20 = scalar_select 0, %s19, %s17
  $region1: #{tpu_custom_call.1} parent=0
    #allocation2 [shape = 'u8[4096]{0}', space=vmem, size = 0x1000, scoped, tag = 'input window, operand 1, single buffered']
    #allocation3 [shape = 's32[2]{0}', space=sflag, size = 0x8, scoped, tag = 'scoped memory for tpu_custom_call.1']
    #allocation4 [shape = 's32[2]{0}', space=sflag, size = 0x8, scoped, tag = 'scoped memory for tpu_custom_call.1']
    #allocation5 [shape = 'u8[16384]{0}', space=vmem, size = 0x4000, scoped, tag = 'input window, operand 10']
    #allocation6 [shape = 's32[2]{0}', space=sflag, size = 0x8, scoped, tag = 'scoped memory for tpu_custom_call.1']
    #allocation7 [shape = 'u8[8192]{0}', space=vmem, size = 0x2000, scoped, tag = 'output window, operand 0, single buffered']
    %21 = vsyncpa [#allocation3], 0
    %22 = vsyncpa [#allocation6], 0
    %s23 = scalar_lea.sflag [#allocation6], 1
    %24 = vsyncpa %s23, 0
    %25 = vsyncpa [#allocation4], 0
    loop: start=0, step=1, limit=4
    $region2: #{tpu_custom_call.1} parent=1 // loop_pre_header
      _
    $region3: #{tpu_custom_call.1} parent=1 // loop_header
      %s27 = sphi 0, %s31
      %p28 = scmp.ge.s32.totalorder %s27, 4
      %s34 = sphi 0, %s46
      %s35 = sphi 0, %s42
      %s36 = sphi 0, %s34
      %s37 = sphi 0, %s35
      %s38 = sphi 0, %s36
      %s39 = sphi 0, %s37
      %s49 = sphi 0, %s51
      %s52 = sphi 0, %s49
      %s53 = sphi 0, %s52
      %s69 = sphi 0, %s53
      %s73 = sphi 0, %s73
      %s75 = sphi 0, %s73
      %s76 = sphi 0, %s75
      %s90 = sphi 0, %s76
      %s96 = sphi 0, %s98
      %s99 = sphi 0, %s96
      %s100 = sphi 0, %s99
      %s116 = sphi 0, %s100
      %s122 = sphi 0, %s124
      %s125 = sphi 0, %s122
      %s126 = sphi 0, %s125
      %s142 = sphi 0, %s126
      %s148 = sphi 0, %s150
      %s151 = sphi 0, %s148
      %s152 = sphi 0, %s151
      %s168 = sphi 0, %s152
      %s174 = sphi 0, %s176
      %s177 = sphi 0, %s174
      %s178 = sphi 0, %s177
      %s194 = sphi 0, %s178
      %s200 = sphi 0, %s202
      %s203 = sphi 0, %s200
      %s204 = sphi 0, %s203
      %s220 = sphi 0, %s204
      %s226 = sphi 0, %s228
      %s229 = sphi 0, %s226
      %s230 = sphi 0, %s229
      %s246 = sphi 0, %s230
      %s252 = sphi 0, %s254
      %s255 = sphi 0, %s252
      %s256 = sphi 0, %s255
      %s272 = sphi 0, %s256
      %s278 = sphi 0, %s280
      %s281 = sphi 0, %s278
      %s282 = sphi 0, %s281
      %s298 = sphi 0, %s282
      %s304 = sphi 0, %s306
      %s307 = sphi 0, %s304
      %s308 = sphi 0, %s307
      %s324 = sphi 0, %s308
      %s330 = sphi 0, %s332
      %s333 = sphi 0, %s330
      %s334 = sphi 0, %s333
      %s350 = sphi 0, %s334
      %s356 = sphi 0, %s358
      %s359 = sphi 0, %s356
      %s360 = sphi 0, %s359
      %s376 = sphi 0, %s360
      %s382 = sphi 0, %s384
      %s385 = sphi 0, %s382
      %s386 = sphi 0, %s385
      %s402 = sphi 0, %s386
      %s408 = sphi 0, %s410
      %s411 = sphi 0, %s408
      %s412 = sphi 0, %s411
      %s428 = sphi 0, %s412
      %s434 = sphi 0, %s436
      %s437 = sphi 0, %s434
      %s438 = sphi 0, %s437
      %s454 = sphi 0, %s438
      %s460 = sphi 0, %s462
      %s463 = sphi 0, %s460
      %s464 = sphi 0, %s463
      %s480 = sphi 0, %s464
    $region4: #{tpu_custom_call.1} parent=1 // loop_header_branch
      %30 = sbr.rel (%p28) target = $region8
    $region5: #{tpu_custom_call.1} parent=1 // loop_body
      %s32 = ssub.s32 %s27, 1
      %s33 = ssub.s32 %s27, 2
      %s40 = sadd.s32 1, %s35
      %p41 = scmp.ge.s32.totalorder %s40, 2
      %s42 = scalar_select %p41, 0, %s40
      %s43 = sadd.s32 1, %s34
      %s44 = scalar_select %p41, %s43, %s34
      %p45 = scmp.ge.s32.totalorder %s44, 1
      %s46 = scalar_select %p45, 0, %s44
      %s47 = ssub.s32 %s34, %s46
      %p48 = scmp.eq.s32.totalorder %s47, 0
      %s50 = sadd.s32 %s49, 1
      %s51 = scalar_select %p48, %s49, %s50
      %p54 = pneg %p48
      %p55 = scmp.eq.s32.totalorder %s27, 1
      %p56 = por %p54, %p55
      %p57 = scmp.ne.s32.totalorder %s49, %s52
      %p58 = scmp.eq.s32.totalorder %s27, 0
      %p59 = por %p57, %p58
      %p60 = scmp.ne.s32.totalorder %s49, %s52
      %p61 = scmp.eq.s32.totalorder %s32, 1
      %p62 = por %p60, %p61
      %p63 = scmp.ne.s32.totalorder %s52, %s53
      %p64 = scmp.eq.s32.totalorder %s32, 0
      %p65 = por %p63, %p64
      %p66 = scmp.ne.s32.totalorder %s52, %s53
      %p67 = scmp.eq.s32.totalorder %s33, 1
      %p68 = por %p66, %p67
      %p70 = scmp.ne.s32.totalorder %s53, %s69
      %p71 = scmp.eq.s32.totalorder %s33, 0
      %p72 = por %p70, %p71
      %s74 = sadd.s32 %s73, 1
      %p77 = scmp.eq.s32.totalorder %s27, 1
      %p78 = scmp.ne.s32.totalorder %s73, %s75
      %p79 = scmp.eq.s32.totalorder %s27, 0
      %p80 = por %p78, %p79
      %p81 = scmp.ne.s32.totalorder %s73, %s75
      %p82 = scmp.eq.s32.totalorder %s32, 1
      %p83 = por %p81, %p82
      %p84 = scmp.ne.s32.totalorder %s75, %s76
      %p85 = scmp.eq.s32.totalorder %s32, 0
      %p86 = por %p84, %p85
      %p87 = scmp.ne.s32.totalorder %s75, %s76
      %p88 = scmp.eq.s32.totalorder %s33, 1
      %p89 = por %p87, %p88
      %p91 = scmp.ne.s32.totalorder %s76, %s90
      %p92 = scmp.eq.s32.totalorder %s33, 0
      %p93 = por %p91, %p92
      %s94 = ssub.s32 %s34, %s46
      %p95 = scmp.eq.s32.totalorder %s94, 0
      %s97 = sadd.s32 %s96, 1
      %s98 = scalar_select %p95, %s96, %s97
      %p101 = pneg %p95
      %p102 = scmp.eq.s32.totalorder %s27, 1
      %p103 = por %p101, %p102
      %p104 = scmp.ne.s32.totalorder %s96, %s99
      %p105 = scmp.eq.s32.totalorder %s27, 0
      %p106 = por %p104, %p105
      %p107 = scmp.ne.s32.totalorder %s96, %s99
      %p108 = scmp.eq.s32.totalorder %s32, 1
      %p109 = por %p107, %p108
      %p110 = scmp.ne.s32.totalorder %s99, %s100
      %p111 = scmp.eq.s32.totalorder %s32, 0
      %p112 = por %p110, %p111
      %p113 = scmp.ne.s32.totalorder %s99, %s100
      %p114 = scmp.eq.s32.totalorder %s33, 1
      %p115 = por %p113, %p114
      %p117 = scmp.ne.s32.totalorder %s100, %s116
      %p118 = scmp.eq.s32.totalorder %s33, 0
      %p119 = por %p117, %p118
      %s120 = ssub.s32 %s34, %s46
      %p121 = scmp.eq.s32.totalorder %s120, 0
      %s123 = sadd.s32 %s122, 1
      %s124 = scalar_select %p121, %s122, %s123
      %p127 = pneg %p121
      %p128 = scmp.eq.s32.totalorder %s27, 1
      %p129 = por %p127, %p128
      %p130 = scmp.ne.s32.totalorder %s122, %s125
      %p131 = scmp.eq.s32.totalorder %s27, 0
      %p132 = por %p130, %p131
      %p133 = scmp.ne.s32.totalorder %s122, %s125
      %p134 = scmp.eq.s32.totalorder %s32, 1
      %p135 = por %p133, %p134
      %p136 = scmp.ne.s32.totalorder %s125, %s126
      %p137 = scmp.eq.s32.totalorder %s32, 0
      %p138 = por %p136, %p137
      %p139 = scmp.ne.s32.totalorder %s125, %s126
      %p140 = scmp.eq.s32.totalorder %s33, 1
      %p141 = por %p139, %p140
      %p143 = scmp.ne.s32.totalorder %s126, %s142
      %p144 = scmp.eq.s32.totalorder %s33, 0
      %p145 = por %p143, %p144
      %s146 = ssub.s32 %s35, %s42
      %p147 = scmp.eq.s32.totalorder %s146, 0
      %s149 = sadd.s32 %s148, 1
      %s150 = scalar_select %p147, %s148, %s149
      %p153 = pneg %p147
      %p154 = scmp.eq.s32.totalorder %s27, 1
      %p155 = por %p153, %p154
      %p156 = scmp.ne.s32.totalorder %s148, %s151
      %p157 = scmp.eq.s32.totalorder %s27, 0
      %p158 = por %p156, %p157
      %p159 = scmp.ne.s32.totalorder %s148, %s151
      %p160 = scmp.eq.s32.totalorder %s32, 1
      %p161 = por %p159, %p160
      %p162 = scmp.ne.s32.totalorder %s151, %s152
      %p163 = scmp.eq.s32.totalorder %s32, 0
      %p164 = por %p162, %p163
      %p165 = scmp.ne.s32.totalorder %s151, %s152
      %p166 = scmp.eq.s32.totalorder %s33, 1
      %p167 = por %p165, %p166
      %p169 = scmp.ne.s32.totalorder %s152, %s168
      %p170 = scmp.eq.s32.totalorder %s33, 0
      %p171 = por %p169, %p170
      %s172 = ssub.s32 %s35, %s42
      %p173 = scmp.eq.s32.totalorder %s172, 0
      %s175 = sadd.s32 %s174, 1
      %s176 = scalar_select %p173, %s174, %s175
      %p179 = pneg %p173
      %p180 = scmp.eq.s32.totalorder %s27, 1
      %p181 = por %p179, %p180
      %p182 = scmp.ne.s32.totalorder %s174, %s177
      %p183 = scmp.eq.s32.totalorder %s27, 0
      %p184 = por %p182, %p183
      %p185 = scmp.ne.s32.totalorder %s174, %s177
      %p186 = scmp.eq.s32.totalorder %s32, 1
      %p187 = por %p185, %p186
      %p188 = scmp.ne.s32.totalorder %s177, %s178
      %p189 = scmp.eq.s32.totalorder %s32, 0
      %p190 = por %p188, %p189
      %p191 = scmp.ne.s32.totalorder %s177, %s178
      %p192 = scmp.eq.s32.totalorder %s33, 1
      %p193 = por %p191, %p192
      %p195 = scmp.ne.s32.totalorder %s178, %s194
      %p196 = scmp.eq.s32.totalorder %s33, 0
      %p197 = por %p195, %p196
      %s198 = ssub.s32 %s35, %s42
      %p199 = scmp.eq.s32.totalorder %s198, 0
      %s201 = sadd.s32 %s200, 1
      %s202 = scalar_select %p199, %s200, %s201
      %p205 = pneg %p199
      %p206 = scmp.eq.s32.totalorder %s27, 1
      %p207 = por %p205, %p206
      %p208 = scmp.ne.s32.totalorder %s200, %s203
      %p209 = scmp.eq.s32.totalorder %s27, 0
      %p210 = por %p208, %p209
      %p211 = scmp.ne.s32.totalorder %s200, %s203
      %p212 = scmp.eq.s32.totalorder %s32, 1
      %p213 = por %p211, %p212
      %p214 = scmp.ne.s32.totalorder %s203, %s204
      %p215 = scmp.eq.s32.totalorder %s32, 0
      %p216 = por %p214, %p215
      %p217 = scmp.ne.s32.totalorder %s203, %s204
      %p218 = scmp.eq.s32.totalorder %s33, 1
      %p219 = por %p217, %p218
      %p221 = scmp.ne.s32.totalorder %s204, %s220
      %p222 = scmp.eq.s32.totalorder %s33, 0
      %p223 = por %p221, %p222
      %s224 = ssub.s32 %s35, %s42
      %p225 = scmp.eq.s32.totalorder %s224, 0
      %s227 = sadd.s32 %s226, 1
      %s228 = scalar_select %p225, %s226, %s227
      %p231 = pneg %p225
      %p232 = scmp.eq.s32.totalorder %s27, 1
      %p233 = por %p231, %p232
      %p234 = scmp.ne.s32.totalorder %s226, %s229
      %p235 = scmp.eq.s32.totalorder %s27, 0
      %p236 = por %p234, %p235
      %p237 = scmp.ne.s32.totalorder %s226, %s229
      %p238 = scmp.eq.s32.totalorder %s32, 1
      %p239 = por %p237, %p238
      %p240 = scmp.ne.s32.totalorder %s229, %s230
      %p241 = scmp.eq.s32.totalorder %s32, 0
      %p242 = por %p240, %p241
      %p243 = scmp.ne.s32.totalorder %s229, %s230
      %p244 = scmp.eq.s32.totalorder %s33, 1
      %p245 = por %p243, %p244
      %p247 = scmp.ne.s32.totalorder %s230, %s246
      %p248 = scmp.eq.s32.totalorder %s33, 0
      %p249 = por %p247, %p248
      %s250 = ssub.s32 %s35, %s42
      %p251 = scmp.eq.s32.totalorder %s250, 0
      %s253 = sadd.s32 %s252, 1
      %s254 = scalar_select %p251, %s252, %s253
      %p257 = pneg %p251
      %p258 = scmp.eq.s32.totalorder %s27, 1
      %p259 = por %p257, %p258
      %p260 = scmp.ne.s32.totalorder %s252, %s255
      %p261 = scmp.eq.s32.totalorder %s27, 0
      %p262 = por %p260, %p261
      %p263 = scmp.ne.s32.totalorder %s252, %s255
      %p264 = scmp.eq.s32.totalorder %s32, 1
      %p265 = por %p263, %p264
      %p266 = scmp.ne.s32.totalorder %s255, %s256
      %p267 = scmp.eq.s32.totalorder %s32, 0
      %p268 = por %p266, %p267
      %p269 = scmp.ne.s32.totalorder %s255, %s256
      %p270 = scmp.eq.s32.totalorder %s33, 1
      %p271 = por %p269, %p270
      %p273 = scmp.ne.s32.totalorder %s256, %s272
      %p274 = scmp.eq.s32.totalorder %s33, 0
      %p275 = por %p273, %p274
      %s276 = ssub.s32 %s35, %s42
      %p277 = scmp.eq.s32.totalorder %s276, 0
      %s279 = sadd.s32 %s278, 1
      %s280 = scalar_select %p277, %s278, %s279
      %p283 = pneg %p277
      %p284 = scmp.eq.s32.totalorder %s27, 1
      %p285 = por %p283, %p284
      %p286 = scmp.ne.s32.totalorder %s278, %s281
      %p287 = scmp.eq.s32.totalorder %s27, 0
      %p288 = por %p286, %p287
      %p289 = scmp.ne.s32.totalorder %s278, %s281
      %p290 = scmp.eq.s32.totalorder %s32, 1
      %p291 = por %p289, %p290
      %p292 = scmp.ne.s32.totalorder %s281, %s282
      %p293 = scmp.eq.s32.totalorder %s32, 0
      %p294 = por %p292, %p293
      %p295 = scmp.ne.s32.totalorder %s281, %s282
      %p296 = scmp.eq.s32.totalorder %s33, 1
      %p297 = por %p295, %p296
      %p299 = scmp.ne.s32.totalorder %s282, %s298
      %p300 = scmp.eq.s32.totalorder %s33, 0
      %p301 = por %p299, %p300
      %s302 = ssub.s32 %s35, %s42
      %p303 = scmp.eq.s32.totalorder %s302, 0
      %s305 = sadd.s32 %s304, 1
      %s306 = scalar_select %p303, %s304, %s305
      %p309 = pneg %p303
      %p310 = scmp.eq.s32.totalorder %s27, 1
      %p311 = por %p309, %p310
      %p312 = scmp.ne.s32.totalorder %s304, %s307
      %p313 = scmp.eq.s32.totalorder %s27, 0
      %p314 = por %p312, %p313
      %p315 = scmp.ne.s32.totalorder %s304, %s307
      %p316 = scmp.eq.s32.totalorder %s32, 1
      %p317 = por %p315, %p316
      %p318 = scmp.ne.s32.totalorder %s307, %s308
      %p319 = scmp.eq.s32.totalorder %s32, 0
      %p320 = por %p318, %p319
      %p321 = scmp.ne.s32.totalorder %s307, %s308
      %p322 = scmp.eq.s32.totalorder %s33, 1
      %p323 = por %p321, %p322
      %p325 = scmp.ne.s32.totalorder %s308, %s324
      %p326 = scmp.eq.s32.totalorder %s33, 0
      %p327 = por %p325, %p326
      %s328 = ssub.s32 %s35, %s42
      %p329 = scmp.eq.s32.totalorder %s328, 0
      %s331 = sadd.s32 %s330, 1
      %s332 = scalar_select %p329, %s330, %s331
      %p335 = pneg %p329
      %p336 = scmp.eq.s32.totalorder %s27, 1
      %p337 = por %p335, %p336
      %p338 = scmp.ne.s32.totalorder %s330, %s333
      %p339 = scmp.eq.s32.totalorder %s27, 0
      %p340 = por %p338, %p339
      %p341 = scmp.ne.s32.totalorder %s330, %s333
      %p342 = scmp.eq.s32.totalorder %s32, 1
      %p343 = por %p341, %p342
      %p344 = scmp.ne.s32.totalorder %s333, %s334
      %p345 = scmp.eq.s32.totalorder %s32, 0
      %p346 = por %p344, %p345
      %p347 = scmp.ne.s32.totalorder %s333, %s334
      %p348 = scmp.eq.s32.totalorder %s33, 1
      %p349 = por %p347, %p348
      %p351 = scmp.ne.s32.totalorder %s334, %s350
      %p352 = scmp.eq.s32.totalorder %s33, 0
      %p353 = por %p351, %p352
      %s354 = ssub.s32 %s35, %s42
      %p355 = scmp.eq.s32.totalorder %s354, 0
      %s357 = sadd.s32 %s356, 1
      %s358 = scalar_select %p355, %s356, %s357
      %p361 = pneg %p355
      %p362 = scmp.eq.s32.totalorder %s27, 1
      %p363 = por %p361, %p362
      %p364 = scmp.ne.s32.totalorder %s356, %s359
      %p365 = scmp.eq.s32.totalorder %s27, 0
      %p366 = por %p364, %p365
      %p367 = scmp.ne.s32.totalorder %s356, %s359
      %p368 = scmp.eq.s32.totalorder %s32, 1
      %p369 = por %p367, %p368
      %p370 = scmp.ne.s32.totalorder %s359, %s360
      %p371 = scmp.eq.s32.totalorder %s32, 0
      %p372 = por %p370, %p371
      %p373 = scmp.ne.s32.totalorder %s359, %s360
      %p374 = scmp.eq.s32.totalorder %s33, 1
      %p375 = por %p373, %p374
      %p377 = scmp.ne.s32.totalorder %s360, %s376
      %p378 = scmp.eq.s32.totalorder %s33, 0
      %p379 = por %p377, %p378
      %s380 = ssub.s32 %s35, %s42
      %p381 = scmp.eq.s32.totalorder %s380, 0
      %s383 = sadd.s32 %s382, 1
      %s384 = scalar_select %p381, %s382, %s383
      %p387 = pneg %p381
      %p388 = scmp.eq.s32.totalorder %s27, 1
      %p389 = por %p387, %p388
      %p390 = scmp.ne.s32.totalorder %s382, %s385
      %p391 = scmp.eq.s32.totalorder %s27, 0
      %p392 = por %p390, %p391
      %p393 = scmp.ne.s32.totalorder %s382, %s385
      %p394 = scmp.eq.s32.totalorder %s32, 1
      %p395 = por %p393, %p394
      %p396 = scmp.ne.s32.totalorder %s385, %s386
      %p397 = scmp.eq.s32.totalorder %s32, 0
      %p398 = por %p396, %p397
      %p399 = scmp.ne.s32.totalorder %s385, %s386
      %p400 = scmp.eq.s32.totalorder %s33, 1
      %p401 = por %p399, %p400
      %p403 = scmp.ne.s32.totalorder %s386, %s402
      %p404 = scmp.eq.s32.totalorder %s33, 0
      %p405 = por %p403, %p404
      %s406 = ssub.s32 %s35, %s42
      %p407 = scmp.eq.s32.totalorder %s406, 0
      %s409 = sadd.s32 %s408, 1
      %s410 = scalar_select %p407, %s408, %s409
      %p413 = pneg %p407
      %p414 = scmp.eq.s32.totalorder %s27, 1
      %p415 = por %p413, %p414
      %p416 = scmp.ne.s32.totalorder %s408, %s411
      %p417 = scmp.eq.s32.totalorder %s27, 0
      %p418 = por %p416, %p417
      %p419 = scmp.ne.s32.totalorder %s408, %s411
      %p420 = scmp.eq.s32.totalorder %s32, 1
      %p421 = por %p419, %p420
      %p422 = scmp.ne.s32.totalorder %s411, %s412
      %p423 = scmp.eq.s32.totalorder %s32, 0
      %p424 = por %p422, %p423
      %p425 = scmp.ne.s32.totalorder %s411, %s412
      %p426 = scmp.eq.s32.totalorder %s33, 1
      %p427 = por %p425, %p426
      %p429 = scmp.ne.s32.totalorder %s412, %s428
      %p430 = scmp.eq.s32.totalorder %s33, 0
      %p431 = por %p429, %p430
      %s432 = ssub.s32 %s35, %s42
      %p433 = scmp.eq.s32.totalorder %s432, 0
      %s435 = sadd.s32 %s434, 1
      %s436 = scalar_select %p433, %s434, %s435
      %p439 = pneg %p433
      %p440 = scmp.eq.s32.totalorder %s27, 1
      %p441 = por %p439, %p440
      %p442 = scmp.ne.s32.totalorder %s434, %s437
      %p443 = scmp.eq.s32.totalorder %s27, 0
      %p444 = por %p442, %p443
      %p445 = scmp.ne.s32.totalorder %s434, %s437
      %p446 = scmp.eq.s32.totalorder %s32, 1
      %p447 = por %p445, %p446
      %p448 = scmp.ne.s32.totalorder %s437, %s438
      %p449 = scmp.eq.s32.totalorder %s32, 0
      %p450 = por %p448, %p449
      %p451 = scmp.ne.s32.totalorder %s437, %s438
      %p452 = scmp.eq.s32.totalorder %s33, 1
      %p453 = por %p451, %p452
      %p455 = scmp.ne.s32.totalorder %s438, %s454
      %p456 = scmp.eq.s32.totalorder %s33, 0
      %p457 = por %p455, %p456
      %s458 = ssub.s32 %s34, %s46
      %p459 = scmp.eq.s32.totalorder %s458, 0
      %s461 = sadd.s32 %s460, 1
      %s462 = scalar_select %p459, %s460, %s461
      %p465 = pneg %p459
      %p466 = scmp.eq.s32.totalorder %s27, 1
      %p467 = por %p465, %p466
      %p468 = scmp.ne.s32.totalorder %s460, %s463
      %p469 = scmp.eq.s32.totalorder %s27, 0
      %p470 = por %p468, %p469
      %p471 = scmp.ne.s32.totalorder %s460, %s463
      %p472 = scmp.eq.s32.totalorder %s32, 1
      %p473 = por %p471, %p472
      %p474 = scmp.ne.s32.totalorder %s463, %s464
      %p475 = scmp.eq.s32.totalorder %s32, 0
      %p476 = por %p474, %p475
      %p477 = scmp.ne.s32.totalorder %s463, %s464
      %p478 = scmp.eq.s32.totalorder %s33, 1
      %p479 = por %p477, %p478
      %p481 = scmp.ne.s32.totalorder %s464, %s480
      %p482 = scmp.eq.s32.totalorder %s33, 0
      %p483 = por %p481, %p482
      %p484 = scmp.le.s32.totalorder 1, %s27
      %p485 = scmp.lt.s32.totalorder %s27, 3
      %p486 = pnand %p484, %p485
      %p487 = pneg %p486
      // Predicated region
      $region9: #{tpu_custom_call.1} parent=5 // pred_check
        _
      $region10: #{tpu_custom_call.1} parent=5 // pred_check_branch
        %489 = sbr.rel (%p486) target = $region12
      $region11: #{tpu_custom_call.1} parent=5 // pred_region
        %s490 = ssub.s32 %s27, 1
        // Predicated region
        $region13: #{tpu_custom_call.1} parent=11 // pred_check
          %p491 = pneg %p65
        $region14: #{tpu_custom_call.1} parent=11 // pred_check_branch
          %493 = sbr.rel (%p491) target = $region16
        $region15: #{tpu_custom_call.1} parent=11 // pred_region
          %s494 = smul.u32 2, %s36
          %p495 = scmp.lt.s32.totalorder %s494, 1
          %s496 = scalar_select %p495, %s494, 1
          %s497 = smul.addr %s496, 8
          %s498 = scalar_lea.vmem %s0, %s497
          %s499 = smul.u32 2, %s36
        $region16: #{tpu_custom_call.1} parent=11 // pred_fallthru
          _
        // Predicated region
        $region17: #{tpu_custom_call.1} parent=11 // pred_check
          %p500 = pneg %p86
        $region18: #{tpu_custom_call.1} parent=11 // pred_check_branch
          %502 = sbr.rel (%p500) target = $region20
        $region19: #{tpu_custom_call.1} parent=11 // pred_region
          %s504 = ssub.s32 128, 128
          %505 = vsyncadd [#allocation3], %s504
          %s507 = sshll.u32 [#allocation2], 4
          %s508 = int_to_ptr.vmem [resolvable:$true] %s507
          %510 = dma.hbm_to_vmem [thread:$0]  %s1, 128, %s508, [#allocation3]
        $region20: #{tpu_custom_call.1} parent=11 // pred_fallthru
          _
        // Predicated region
        $region21: #{tpu_custom_call.1} parent=11 // pred_check
          %p511 = pneg %p112
        $region22: #{tpu_custom_call.1} parent=11 // pred_check_branch
          %513 = sbr.rel (%p511) target = $region24
        $region23: #{tpu_custom_call.1} parent=11 // pred_region
          %s514 = smul.u32 2, %s36
          %p515 = scmp.lt.s32.totalorder %s514, 1
          %s516 = scalar_select %p515, %s514, 1
          %s517 = scalar_lea.vmem %s2, %s516
          %s518 = smul.u32 2, %s36
        $region24: #{tpu_custom_call.1} parent=11 // pred_fallthru
          _
        // Predicated region
        $region25: #{tpu_custom_call.1} parent=11 // pred_check
          %p519 = pneg %p138
        $region26: #{tpu_custom_call.1} parent=11 // pred_check_branch
          %521 = sbr.rel (%p519) target = $region28
        $region27: #{tpu_custom_call.1} parent=11 // pred_region
          %s522 = smul.u32 2, %s36
          %p523 = scmp.lt.s32.totalorder %s522, 1
          %s524 = scalar_select %p523, %s522, 1
          %s525 = smul.addr %s524, 8
          %s526 = scalar_lea.vmem %s3, %s525
          %s527 = smul.u32 2, %s36
        $region28: #{tpu_custom_call.1} parent=11 // pred_fallthru
          _
      $region12: #{tpu_custom_call.1} parent=5 // pred_fallthru
        _
      %p528 = scmp.lt.s32.totalorder %s27, 2
      // Predicated region
      $region29: #{tpu_custom_call.1} parent=5 // pred_check
        %p529 = pneg %p528
      $region30: #{tpu_custom_call.1} parent=5 // pred_check_branch
        %531 = sbr.rel (%p529) target = $region32
      $region31: #{tpu_custom_call.1} parent=5 // pred_region
        // Predicated region
        $region33: #{tpu_custom_call.1} parent=31 // pred_check
          %p532 = pneg %p158
        $region34: #{tpu_custom_call.1} parent=31 // pred_check_branch
          %534 = sbr.rel (%p532) target = $region36
        $region35: #{tpu_custom_call.1} parent=31 // pred_region
          %p535 = scmp.lt.s32.totalorder %s35, 1
          %s536 = scalar_select %p535, %s35, 1
          %s537 = smul.addr %s536, 4
          %s538 = smul.addr %s537, 4
          %s539 = scalar_lea.vmem %s4, %s538
        $region36: #{tpu_custom_call.1} parent=31 // pred_fallthru
          _
        // Predicated region
        $region37: #{tpu_custom_call.1} parent=31 // pred_check
          %p540 = pneg %p184
        $region38: #{tpu_custom_call.1} parent=31 // pred_check_branch
          %542 = sbr.rel (%p540) target = $region40
        $region39: #{tpu_custom_call.1} parent=31 // pred_region
          %p543 = scmp.lt.s32.totalorder %s35, 1
          %s544 = scalar_select %p543, %s35, 1
          %s545 = scalar_lea.vmem %s5, %s544
        $region40: #{tpu_custom_call.1} parent=31 // pred_fallthru
          _
        // Predicated region
        $region41: #{tpu_custom_call.1} parent=31 // pred_check
          %p546 = pneg %p210
        $region42: #{tpu_custom_call.1} parent=31 // pred_check_branch
          %548 = sbr.rel (%p546) target = $region44
        $region43: #{tpu_custom_call.1} parent=31 // pred_region
          %p549 = scmp.lt.s32.totalorder %s35, 1
          %s550 = scalar_select %p549, %s35, 1
          %s551 = smul.addr %s550, 4
          %s552 = smul.addr %s551, 4
          %s553 = scalar_lea.vmem %s6, %s552
        $region44: #{tpu_custom_call.1} parent=31 // pred_fallthru
          _
        // Predicated region
        $region45: #{tpu_custom_call.1} parent=31 // pred_check
          %p554 = pneg %p236
        $region46: #{tpu_custom_call.1} parent=31 // pred_check_branch
          %556 = sbr.rel (%p554) target = $region48
        $region47: #{tpu_custom_call.1} parent=31 // pred_region
          %p557 = scmp.lt.s32.totalorder %s35, 1
          %s558 = scalar_select %p557, %s35, 1
          %s559 = scalar_lea.vmem %s7, %s558
        $region48: #{tpu_custom_call.1} parent=31 // pred_fallthru
          _
        // Predicated region
        $region49: #{tpu_custom_call.1} parent=31 // pred_check
          %p560 = pneg %p262
        $region50: #{tpu_custom_call.1} parent=31 // pred_check_branch
          %562 = sbr.rel (%p560) target = $region52
        $region51: #{tpu_custom_call.1} parent=31 // pred_region
          %p563 = scmp.lt.s32.totalorder %s35, 1
          %s564 = scalar_select %p563, %s35, 1
          %s565 = smul.addr %s564, 4
          %s566 = smul.addr %s565, 4
          %s567 = scalar_lea.vmem %s8, %s566
        $region52: #{tpu_custom_call.1} parent=31 // pred_fallthru
          _
        // Predicated region
        $region53: #{tpu_custom_call.1} parent=31 // pred_check
          %p568 = pneg %p288
        $region54: #{tpu_custom_call.1} parent=31 // pred_check_branch
          %570 = sbr.rel (%p568) target = $region56
        $region55: #{tpu_custom_call.1} parent=31 // pred_region
          %p571 = scmp.lt.s32.totalorder %s35, 1
          %s572 = scalar_select %p571, %s35, 1
          %s573 = scalar_lea.vmem %s9, %s572
        $region56: #{tpu_custom_call.1} parent=31 // pred_fallthru
          _
        // Predicated region
        $region57: #{tpu_custom_call.1} parent=31 // pred_check
          %p574 = pneg %p314
        $region58: #{tpu_custom_call.1} parent=31 // pred_check_branch
          %576 = sbr.rel (%p574) target = $region60
        $region59: #{tpu_custom_call.1} parent=31 // pred_region
          %s577 = sand.u32 %s304, 1
          %s578 = scalar_lea.sflag [#allocation6], %s577
          %s579 = sand.u32 %s304, 1
          %s580 = smul.addr %s579, 16
          %s581 = scalar_lea.vmem [#allocation5], %s580
          %s583 = ssub.s32 256, 256
          %584 = vsyncadd %s578, %s583
          %s585 = smul.addr %s35, 4
          %s586 = smul.addr %s585, 64
          %s587 = scalar_lea.hbm %s10, %s586
          %s588 = sshll.u32 %s581, 4
          %s589 = int_to_ptr.vmem [resolvable:$true] %s588
          %594 = dma.hbm_to_vmem [thread:$0]  %s587, 256, %s589, %s578, 64, 64, 4
        $region60: #{tpu_custom_call.1} parent=31 // pred_fallthru
          _
        // Predicated region
        $region61: #{tpu_custom_call.1} parent=31 // pred_check
          %p595 = pneg %p340
        $region62: #{tpu_custom_call.1} parent=31 // pred_check_branch
          %597 = sbr.rel (%p595) target = $region64
        $region63: #{tpu_custom_call.1} parent=31 // pred_region
          %p598 = scmp.lt.s32.totalorder %s35, 1
          %s599 = scalar_select %p598, %s35, 1
          %s600 = scalar_lea.vmem %s11, %s599
        $region64: #{tpu_custom_call.1} parent=31 // pred_fallthru
          _
        // Predicated region
        $region65: #{tpu_custom_call.1} parent=31 // pred_check
          %p601 = pneg %p366
        $region66: #{tpu_custom_call.1} parent=31 // pred_check_branch
          %603 = sbr.rel (%p601) target = $region68
        $region67: #{tpu_custom_call.1} parent=31 // pred_region
          %p604 = scmp.lt.s32.totalorder %s35, 1
          %s605 = scalar_select %p604, %s35, 1
          %s606 = smul.addr %s605, 8
          %s607 = smul.addr %s606, 4
          %s608 = scalar_lea.vmem %s12, %s607
        $region68: #{tpu_custom_call.1} parent=31 // pred_fallthru
          _
        // Predicated region
        $region69: #{tpu_custom_call.1} parent=31 // pred_check
          %p609 = pneg %p392
        $region70: #{tpu_custom_call.1} parent=31 // pred_check_branch
          %611 = sbr.rel (%p609) target = $region72
        $region71: #{tpu_custom_call.1} parent=31 // pred_region
          %p612 = scmp.lt.s32.totalorder %s35, 1
          %s613 = scalar_select %p612, %s35, 1
          %s614 = scalar_lea.vmem %s13, %s613
        $region72: #{tpu_custom_call.1} parent=31 // pred_fallthru
          _
        // Predicated region
        $region73: #{tpu_custom_call.1} parent=31 // pred_check
          %p615 = pneg %p418
        $region74: #{tpu_custom_call.1} parent=31 // pred_check_branch
          %617 = sbr.rel (%p615) target = $region76
        $region75: #{tpu_custom_call.1} parent=31 // pred_region
          %p618 = scmp.lt.s32.totalorder %s35, 1
          %s619 = scalar_select %p618, %s35, 1
          %s620 = scalar_lea.vmem %s14, %s619
        $region76: #{tpu_custom_call.1} parent=31 // pred_fallthru
          _
        // Predicated region
        $region77: #{tpu_custom_call.1} parent=31 // pred_check
          %p621 = pneg %p444
        $region78: #{tpu_custom_call.1} parent=31 // pred_check_branch
          %623 = sbr.rel (%p621) target = $region80
        $region79: #{tpu_custom_call.1} parent=31 // pred_region
          %p624 = scmp.lt.s32.totalorder %s35, 1
          %s625 = scalar_select %p624, %s35, 1
          %s626 = scalar_lea.vmem %s15, %s625
        $region80: #{tpu_custom_call.1} parent=31 // pred_fallthru
          _
      $region32: #{tpu_custom_call.1} parent=5 // pred_fallthru
        _
      %p627 = scmp.le.s32.totalorder 1, %s27
      %p628 = scmp.lt.s32.totalorder %s27, 3
      %p629 = pnand %p627, %p628
      %p630 = pneg %p629
      // Predicated region
      $region81: #{tpu_custom_call.1} parent=5 // pred_check
        _
      $region82: #{tpu_custom_call.1} parent=5 // pred_check_branch
        %632 = sbr.rel (%p629) target = $region84
      $region83: #{tpu_custom_call.1} parent=5 // pred_region
        %s633 = ssub.s32 %s27, 1
        // Predicated region
        $region85: #{tpu_custom_call.1} parent=83 // pred_check
          %p634 = pneg %p86
        $region86: #{tpu_custom_call.1} parent=83 // pred_check_branch
          %636 = sbr.rel (%p634) target = $region88
        $region87: #{tpu_custom_call.1} parent=83 // pred_region
          %637 = dma.done [#allocation3], 128
        $region88: #{tpu_custom_call.1} parent=83 // pred_fallthru
          _
        %s638 = sand.u32 %s307, 1
        %s639 = scalar_lea.sflag [#allocation6], %s638
        %s640 = sand.u32 %s307, 1
        %s641 = smul.addr %s640, 16
        %s642 = scalar_lea.vmem [#allocation5], %s641
        // Predicated region
        $region89: #{tpu_custom_call.1} parent=83 // pred_check
          %p643 = pneg %p320
        $region90: #{tpu_custom_call.1} parent=83 // pred_check_branch
          %645 = sbr.rel (%p643) target = $region92
        $region91: #{tpu_custom_call.1} parent=83 // pred_region
          %646 = dma.done %s639, 256
        $region92: #{tpu_custom_call.1} parent=83 // pred_fallthru
          _
        %s647 = smul.u32 2, %s36
        %p648 = scmp.lt.s32.totalorder %s647, 1
        %s649 = scalar_select %p648, %s647, 1
        %s650 = smul.addr %s649, 8
        %s651 = scalar_lea.vmem %s0, %s650
        %p652 = pneg %p65
        %p653 = pneg %p62
        %p654 = pneg %p86
        %p655 = pneg %p83
        %s656 = smul.u32 2, %s36
        %p657 = scmp.lt.s32.totalorder %s656, 1
        %s658 = scalar_select %p657, %s656, 1
        %s659 = scalar_lea.vmem %s2, %s658
        %p660 = pneg %p112
        %p661 = pneg %p109
        %s662 = smul.u32 2, %s36
        %p663 = scmp.lt.s32.totalorder %s662, 1
        %s664 = scalar_select %p663, %s662, 1
        %s665 = smul.addr %s664, 8
        %s666 = scalar_lea.vmem %s3, %s665
        %p667 = pneg %p138
        %p668 = pneg %p135
        %p669 = scmp.lt.s32.totalorder %s37, 1
        %s670 = scalar_select %p669, %s37, 1
        %s671 = smul.addr %s670, 4
        %s672 = smul.addr %s671, 4
        %s673 = scalar_lea.vmem %s4, %s672
        %p674 = pneg %p164
        %p675 = pneg %p161
        %p676 = scmp.lt.s32.totalorder %s37, 1
        %s677 = scalar_select %p676, %s37, 1
        %s678 = scalar_lea.vmem %s5, %s677
        %p679 = pneg %p190
        %p680 = pneg %p187
        %p681 = scmp.lt.s32.totalorder %s37, 1
        %s682 = scalar_select %p681, %s37, 1
        %s683 = smul.addr %s682, 4
        %s684 = smul.addr %s683, 4
        %s685 = scalar_lea.vmem %s6, %s684
        %p686 = pneg %p216
        %p687 = pneg %p213
        %p688 = scmp.lt.s32.totalorder %s37, 1
        %s689 = scalar_select %p688, %s37, 1
        %s690 = scalar_lea.vmem %s7, %s689
        %p691 = pneg %p242
        %p692 = pneg %p239
        %p693 = scmp.lt.s32.totalorder %s37, 1
        %s694 = scalar_select %p693, %s37, 1
        %s695 = smul.addr %s694, 4
        %s696 = smul.addr %s695, 4
        %s697 = scalar_lea.vmem %s8, %s696
        %p698 = pneg %p268
        %p699 = pneg %p265
        %p700 = scmp.lt.s32.totalorder %s37, 1
        %s701 = scalar_select %p700, %s37, 1
        %s702 = scalar_lea.vmem %s9, %s701
        %p703 = pneg %p294
        %p704 = pneg %p291
        %s705 = sand.u32 %s307, 1
        %s706 = scalar_lea.sflag [#allocation6], %s705
        %s707 = sand.u32 %s307, 1
        %s708 = smul.addr %s707, 16
        %s709 = scalar_lea.vmem [#allocation5], %s708
        %p710 = pneg %p320
        %p711 = pneg %p317
        %p712 = scmp.lt.s32.totalorder %s37, 1
        %s713 = scalar_select %p712, %s37, 1
        %s714 = scalar_lea.vmem %s11, %s713
        %p715 = pneg %p346
        %p716 = pneg %p343
        %p717 = scmp.lt.s32.totalorder %s37, 1
        %s718 = scalar_select %p717, %s37, 1
        %s719 = smul.addr %s718, 8
        %s720 = smul.addr %s719, 4
        %s721 = scalar_lea.vmem %s12, %s720
        %p722 = pneg %p372
        %p723 = pneg %p369
        %p724 = scmp.lt.s32.totalorder %s37, 1
        %s725 = scalar_select %p724, %s37, 1
        %s726 = scalar_lea.vmem %s13, %s725
        %p727 = pneg %p398
        %p728 = pneg %p395
        %p729 = scmp.lt.s32.totalorder %s37, 1
        %s730 = scalar_select %p729, %s37, 1
        %s731 = scalar_lea.vmem %s14, %s730
        %p732 = pneg %p424
        %p733 = pneg %p421
        %p734 = scmp.lt.s32.totalorder %s37, 1
        %s735 = scalar_select %p734, %s37, 1
        %s736 = scalar_lea.vmem %s15, %s735
        %p737 = pneg %p450
        %p738 = pneg %p447
        %p739 = pneg %p476
        %p740 = pneg %p473
        %s741 = smul.u32 2, %s36
        %p742 = scmp.lt.s32.totalorder %s741, 1
        %s743 = scalar_select %p742, %s741, 1
        %s744 = smul.addr %s743, 8
        %s745 = scalar_lea.vmem %s0, %s744
        %s746 = smul.u32 2, %s36
        %s747 = smul.u32 2, %s36
        %p748 = scmp.lt.s32.totalorder %s747, 1
        %s749 = scalar_select %p748, %s747, 1
        %s750 = scalar_lea.vmem %s2, %s749
        %s751 = smul.u32 2, %s36
        %s752 = smul.u32 2, %s36
        %p753 = scmp.lt.s32.totalorder %s752, 1
        %s754 = scalar_select %p753, %s752, 1
        %s755 = smul.addr %s754, 8
        %s756 = scalar_lea.vmem %s3, %s755
        %s757 = smul.u32 2, %s36
        %p758 = scmp.lt.s32.totalorder %s37, 1
        %s759 = scalar_select %p758, %s37, 1
        %s760 = smul.addr %s759, 4
        %s761 = smul.addr %s760, 4
        %s762 = scalar_lea.vmem %s4, %s761
        %p763 = scmp.lt.s32.totalorder %s37, 1
        %s764 = scalar_select %p763, %s37, 1
        %s765 = scalar_lea.vmem %s5, %s764
        %p766 = scmp.lt.s32.totalorder %s37, 1
        %s767 = scalar_select %p766, %s37, 1
        %s768 = smul.addr %s767, 4
        %s769 = smul.addr %s768, 4
        %s770 = scalar_lea.vmem %s6, %s769
        %p771 = scmp.lt.s32.totalorder %s37, 1
        %s772 = scalar_select %p771, %s37, 1
        %s773 = scalar_lea.vmem %s7, %s772
        %p774 = scmp.lt.s32.totalorder %s37, 1
        %s775 = scalar_select %p774, %s37, 1
        %s776 = smul.addr %s775, 4
        %s777 = smul.addr %s776, 4
        %s778 = scalar_lea.vmem %s8, %s777
        %p779 = scmp.lt.s32.totalorder %s37, 1
        %s780 = scalar_select %p779, %s37, 1
        %s781 = scalar_lea.vmem %s9, %s780
        %p782 = scmp.lt.s32.totalorder %s37, 1
        %s783 = scalar_select %p782, %s37, 1
        %s784 = scalar_lea.vmem %s11, %s783
        %p785 = scmp.lt.s32.totalorder %s37, 1
        %s786 = scalar_select %p785, %s37, 1
        %s787 = smul.addr %s786, 8
        %s788 = smul.addr %s787, 4
        %s789 = scalar_lea.vmem %s12, %s788
        %p790 = scmp.lt.s32.totalorder %s37, 1
        %s791 = scalar_select %p790, %s37, 1
        %s792 = scalar_lea.vmem %s13, %s791
        %p793 = scmp.lt.s32.totalorder %s37, 1
        %s794 = scalar_select %p793, %s37, 1
        %s795 = scalar_lea.vmem %s14, %s794
        %p796 = scmp.lt.s32.totalorder %s37, 1
        %s797 = scalar_select %p796, %s37, 1
        %s798 = scalar_lea.vmem %s15, %s797
        %s799 = smul.u32 2, %s36
        %p801 = scmp.eq.s32.totalorder %s37, 0
        // Predicated region
        $region93: #{tpu_custom_call.1} parent=83 // pred_check
          %p802 = pneg %p801
        $region94: #{tpu_custom_call.1} parent=83 // pred_check_branch
          %804 = sbr.rel (%p802) target = $region96
        $region95: #{tpu_custom_call.1} parent=83 // pred_region
          %v805 = vld [vmem:[%s745] sm:$0xff]
          %v806 = vld [vmem:[%s745 + $0x8] sm:$0xff]
          %v807 = vmul.f32 %v805, 5.656854
          %v808 = vmul.f32 %v806, 5.656854
          %vm809 = vcmp.eq.f32.partialorder %v807, 0.0
          %vm810 = vcmp.eq.f32.partialorder %v808, 0.0
          %v811 = vld [vmem:[#allocation2] sm:$0xff]
          %v812 = vsel %vm809, 0.0, %v811
          %v813 = vsel %vm810, 0.0, %v811
          %v814 = vadd.f32 %v807, %v812
          %v815 = vadd.f32 %v808, %v813
          %vm816 = vcmask 261120
          %817 = vst.msk [vmem:[#allocation7] sm:$0xff] %vm816, %v814
          %818 = vst.msk [vmem:[#allocation7 + $0x8] sm:$0xff] %vm816, %v815
        $region96: #{tpu_custom_call.1} parent=83 // pred_fallthru
          _
        %v819 = vld [vmem:[%s750] sm:$0x1]
        %v820 = vld [vmem:[%s750 + $0x1] sm:$0x1]
        %v821 = vld [vmem:[#allocation7] sm:$0xff]
        %v822 = vld [vmem:[#allocation7 + $0x8] sm:$0xff]
        %p823 = scmp.gt.s32.totalorder %s37, 0
        // Predicated region
        $region97: #{tpu_custom_call.1} parent=83 // pred_check
          %p824 = pneg %p823
        $region98: #{tpu_custom_call.1} parent=83 // pred_check_branch
          %826 = sbr.rel (%p824) target = $region100
        $region99: #{tpu_custom_call.1} parent=83 // pred_region
          %v827 = vld [vmem:[%s756] sm:$0xff]
          %v828 = vld [vmem:[%s756 + $0x8] sm:$0xff]
          %830 = vset.pattern.permute.xlu0 0
          %831 = vperm.xlu0 %830, %v827
          %v832 = vpop.permute.xlu0 %831
          %835 = vset.pattern.permute.xlu0 0
          %836 = vperm.xlu0 %835, %v828
          %v837 = vpop.permute.xlu0 %836
          %v841 = vlaneseq
          %v842 = vshrl.u32 %v841, 7
          %v843 = vsub.s32 0, %v842
          %v844 = vrot.slane %v819, %v843
          %v845 = vlaneseq
          %v846 = vshrl.u32 %v845, 7
          %v847 = vsub.s32 0, %v846
          %v848 = vrot.slane %v820, %v847
          %v851 = vmul.f32 %v832, %v844
          %v852 = vmul.f32 %v837, %v848
          %vm853 = vcmask 64512
          %v854 = vsel %vm853, %v851, 0.0
          %855 = vadd.xlane.f32.xlu0 %v854
          %v856 = vpop.xlane.xlu0 %855
          %v857 = vsel %vm853, %v852, 0.0
          %858 = vadd.xlane.f32.xlu0 %v857
          %v859 = vpop.xlane.xlu0 %858
          %v860 = vmax.f32 %v856, 1.0
          %v861 = vmax.f32 %v859, 1.0
          %v862 = vrcp.pop %v860
          %v863 = vmul.f32 %v851, %v862
          %v864 = vrcp.pop %v861
          %v865 = vmul.f32 %v852, %v864
          %v866 = vpack.c.bf16 %v863, %v863
          %v867 = vpack.c.bf16 %v865, %v865
          %v868 = vpack.c.bf16 %v821, %v821
          %v869 = vpack.c.bf16 %v822, %v822
          %v871 = vsel %vm853, %v866, 0
          %vm873 = vcmask 1043456
          %v875 = vsel %vm873, %v868, 0
          %877 = vmatprep.subr.bf16.mxu0 0
          %878 = vmatpush1.bf16.msra.mxu0 %v875
          %879 = vmatprep.subr.bf16.mxu0 0
          %880 = vmatpush1.bf16.msra.mxu0 0
          %881 = vmatprep.subr.bf16.mxu0 0
          %882 = vmatpush1.bf16.msra.mxu0 0
          %883 = vmatprep.subr.bf16.mxu0 0
          %884 = vmatpush1.bf16.msra.mxu0 0
          %885 = vmatprep.subr.bf16.mxu0 0
          %886 = vmatpush1.bf16.msra.mxu0 0
          %887 = vmatprep.subr.bf16.mxu0 0
          %888 = vmatpush1.bf16.msra.mxu0 0
          %889 = vmatprep.subr.bf16.mxu0 0
          %890 = vmatpush1.bf16.msra.mxu0 0
          %891 = vmatprep.subr.bf16.mxu0 0
          %892 = vmatpush1.bf16.msra.mxu0 0
          %893 = vmatprep.subr.bf16.mxu0 0
          %894 = vmatpush1.bf16.msra.mxu0 0
          %895 = vmatprep.subr.bf16.mxu0 0
          %896 = vmatpush1.bf16.msra.mxu0 0
          %897 = vmatprep.subr.bf16.mxu0 0
          %898 = vmatpush1.bf16.msra.mxu0 0
          %899 = vmatprep.subr.bf16.mxu0 0
          %900 = vmatpush1.bf16.msra.mxu0 0
          %901 = vmatprep.subr.bf16.mxu0 0
          %902 = vmatpush1.bf16.msra.mxu0 0
          %903 = vmatprep.subr.bf16.mxu0 0
          %904 = vmatpush1.bf16.msra.mxu0 0
          %905 = vmatprep.subr.bf16.mxu0 0
          %906 = vmatpush1.bf16.msra.mxu0 0
          %907 = vmatprep.subr.bf16.mxu0 0
          %908 = vmatpush1.bf16.msra.mxu0 0
          %909 = vmatprep.mubr.bf16.mxu0 0
          %910 = vmatmul.mubr.bf16.gmra.mrb[0].mxu0 %v871
          %v911 = vpop.f32.mrb[0].mxu0
          %v912 = vadd.f32 0.0, %v911
          %v913 = vpop.f32.mrb[0].mxu0
          %v914 = vpop.f32.mrb[0].mxu0
          %v915 = vpop.f32.mrb[0].mxu0
          %916 = vdwg.mxu0
          %v918 = vsel %vm853, %v867, 0
          %v921 = vsel %vm873, %v869, 0
          %923 = vmatprep.subr.bf16.mxu0 0
          %924 = vmatpush1.bf16.msra.mxu0 %v921
          %925 = vmatprep.subr.bf16.mxu0 0
          %926 = vmatpush1.bf16.msra.mxu0 0
          %927 = vmatprep.subr.bf16.mxu0 0
          %928 = vmatpush1.bf16.msra.mxu0 0
          %929 = vmatprep.subr.bf16.mxu0 0
          %930 = vmatpush1.bf16.msra.mxu0 0
          %931 = vmatprep.subr.bf16.mxu0 0
          %932 = vmatpush1.bf16.msra.mxu0 0
          %933 = vmatprep.subr.bf16.mxu0 0
          %934 = vmatpush1.bf16.msra.mxu0 0
          %935 = vmatprep.subr.bf16.mxu0 0
          %936 = vmatpush1.bf16.msra.mxu0 0
          %937 = vmatprep.subr.bf16.mxu0 0
          %938 = vmatpush1.bf16.msra.mxu0 0
          %939 = vmatprep.subr.bf16.mxu0 0
          %940 = vmatpush1.bf16.msra.mxu0 0
          %941 = vmatprep.subr.bf16.mxu0 0
          %942 = vmatpush1.bf16.msra.mxu0 0
          %943 = vmatprep.subr.bf16.mxu0 0
          %944 = vmatpush1.bf16.msra.mxu0 0
          %945 = vmatprep.subr.bf16.mxu0 0
          %946 = vmatpush1.bf16.msra.mxu0 0
          %947 = vmatprep.subr.bf16.mxu0 0
          %948 = vmatpush1.bf16.msra.mxu0 0
          %949 = vmatprep.subr.bf16.mxu0 0
          %950 = vmatpush1.bf16.msra.mxu0 0
          %951 = vmatprep.subr.bf16.mxu0 0
          %952 = vmatpush1.bf16.msra.mxu0 0
          %953 = vmatprep.subr.bf16.mxu0 0
          %954 = vmatpush1.bf16.msra.mxu0 0
          %955 = vmatprep.mubr.bf16.mxu0 0
          %956 = vmatmul.mubr.bf16.gmra.mrb[0].mxu0 %v918
          %v957 = vpop.f32.mrb[0].mxu0
          %v958 = vadd.f32 0.0, %v957
          %v959 = vpop.f32.mrb[0].mxu0
          %v960 = vpop.f32.mrb[0].mxu0
          %v961 = vpop.f32.mrb[0].mxu0
          %962 = vdwg.mxu0
          %v963 = vpack.c.bf16 %v958, %v912
          %v964 = vld [vmem:[%s762] sm:$0xf]
          %v965 = vld [vmem:[%s762 + $0x4] sm:$0xf]
          %v966 = vld [vmem:[%s762 + $0x8] sm:$0xf]
          %v967 = vld [vmem:[%s762 + $0xc] sm:$0xf]
          %v972 = vunpack.c.l.b16 %v964
          %v973 = vunpack.c.l.b16 %v965
          %v974 = vunpack.c.l.b16 %v966
          %v975 = vunpack.c.l.b16 %v967
          %v976 = vpack.c.b16 %v973, %v972
          %v977 = vpack.c.b16 %v975, %v974
          %vm980 = vcmask 261120
          %v982 = vsel %vm980, %v963, 0
          %984 = vmatprep.subr.bf16.mxu0 0
          %985 = vmatpush1.bf16.msra.mxu0 %v976
          %986 = vmatprep.subr.bf16.mxu0 0
          %987 = vmatpush1.bf16.msra.mxu0 %v977
          %988 = vmatprep.subr.bf16.mxu0 0
          %989 = vmatpush1.bf16.msra.mxu0 0
          %990 = vmatprep.subr.bf16.mxu0 0
          %991 = vmatpush1.bf16.msra.mxu0 0
          %992 = vmatprep.subr.bf16.mxu0 0
          %993 = vmatpush1.bf16.msra.mxu0 0
          %994 = vmatprep.subr.bf16.mxu0 0
          %995 = vmatpush1.bf16.msra.mxu0 0
          %996 = vmatprep.subr.bf16.mxu0 0
          %997 = vmatpush1.bf16.msra.mxu0 0
          %998 = vmatprep.subr.bf16.mxu0 0
          %999 = vmatpush1.bf16.msra.mxu0 0
          %1000 = vmatprep.subr.bf16.mxu0 0
          %1001 = vmatpush1.bf16.msra.mxu0 0
          %1002 = vmatprep.subr.bf16.mxu0 0
          %1003 = vmatpush1.bf16.msra.mxu0 0
          %1004 = vmatprep.subr.bf16.mxu0 0
          %1005 = vmatpush1.bf16.msra.mxu0 0
          %1006 = vmatprep.subr.bf16.mxu0 0
          %1007 = vmatpush1.bf16.msra.mxu0 0
          %1008 = vmatprep.subr.bf16.mxu0 0
          %1009 = vmatpush1.bf16.msra.mxu0 0
          %1010 = vmatprep.subr.bf16.mxu0 0
          %1011 = vmatpush1.bf16.msra.mxu0 0
          %1012 = vmatprep.subr.bf16.mxu0 0
          %1013 = vmatpush1.bf16.msra.mxu0 0
          %1014 = vmatprep.subr.bf16.mxu0 0
          %1015 = vmatpush1.bf16.msra.mxu0 0
          %1016 = vmatprep.mubr.bf16.mxu0 0
          %1017 = vmatmul.mubr.bf16.gmra.mrb[0].mxu0 %v982
          %v1018 = vpop.f32.mrb[0].mxu0
          %v1019 = vadd.f32 0.0, %v1018
          %v1020 = vpop.f32.mrb[0].mxu0
          %v1021 = vpop.f32.mrb[0].mxu0
          %v1022 = vadd.f32 0.0, %v1021
          %v1023 = vpop.f32.mrb[0].mxu0
          %1024 = vdwg.mxu0
          %v1025 = vld [vmem:[%s765] sm:$0x1]
          %v1027 = vlaneseq
          %v1028 = vshrl.u32 %v1027, 7
          %v1029 = vsub.s32 0, %v1028
          %v1030 = vrot.slane %v1025, %v1029
          %v1032 = vadd.f32 %v1019, %v1030
          %v1033 = vadd.f32 %v1022, %v1030
          %v1034 = vmax.f32 %v1032, 0.0
          %v1035 = vmax.f32 %v1033, 0.0
          %v1036 = vadd.f32 %v1034, %v821
          %v1037 = vadd.f32 %v1035, %v822
          %1038 = vst.msk [vmem:[#allocation7] sm:$0xff] %vm980, %v1036
          %1039 = vst.msk [vmem:[#allocation7 + $0x8] sm:$0xff] %vm980, %v1037
        $region100: #{tpu_custom_call.1} parent=83 // pred_fallthru
          _
        %v1040 = vld [vmem:[#allocation7] sm:$0xff]
        %v1041 = vld [vmem:[#allocation7 + $0x8] sm:$0xff]
        %v1042 = vpack.c.bf16 %v1041, %v1040
        %v1043 = vld [vmem:[%s770] sm:$0xf]
        %v1044 = vld [vmem:[%s770 + $0x4] sm:$0xf]
        %v1045 = vld [vmem:[%s770 + $0x8] sm:$0xf]
        %v1046 = vld [vmem:[%s770 + $0xc] sm:$0xf]
        %v1051 = vunpack.c.l.b16 %v1043
        %v1052 = vunpack.c.l.b16 %v1044
        %v1053 = vunpack.c.l.b16 %v1045
        %v1054 = vunpack.c.l.b16 %v1046
        %v1055 = vpack.c.b16 %v1052, %v1051
        %v1056 = vpack.c.b16 %v1054, %v1053
        %vm1059 = vcmask 261120
        %v1061 = vsel %vm1059, %v1042, 0
        %1063 = vmatprep.subr.bf16.mxu0 0
        %1064 = vmatpush1.bf16.msra.mxu0 %v1055
        %1065 = vmatprep.subr.bf16.mxu0 0
        %1066 = vmatpush1.bf16.msra.mxu0 %v1056
        %1067 = vmatprep.subr.bf16.mxu0 0
        %1068 = vmatpush1.bf16.msra.mxu0 0
        %1069 = vmatprep.subr.bf16.mxu0 0
        %1070 = vmatpush1.bf16.msra.mxu0 0
        %1071 = vmatprep.subr.bf16.mxu0 0
        %1072 = vmatpush1.bf16.msra.mxu0 0
        %1073 = vmatprep.subr.bf16.mxu0 0
        %1074 = vmatpush1.bf16.msra.mxu0 0
        %1075 = vmatprep.subr.bf16.mxu0 0
        %1076 = vmatpush1.bf16.msra.mxu0 0
        %1077 = vmatprep.subr.bf16.mxu0 0
        %1078 = vmatpush1.bf16.msra.mxu0 0
        %1079 = vmatprep.subr.bf16.mxu0 0
        %1080 = vmatpush1.bf16.msra.mxu0 0
        %1081 = vmatprep.subr.bf16.mxu0 0
        %1082 = vmatpush1.bf16.msra.mxu0 0
        %1083 = vmatprep.subr.bf16.mxu0 0
        %1084 = vmatpush1.bf16.msra.mxu0 0
        %1085 = vmatprep.subr.bf16.mxu0 0
        %1086 = vmatpush1.bf16.msra.mxu0 0
        %1087 = vmatprep.subr.bf16.mxu0 0
        %1088 = vmatpush1.bf16.msra.mxu0 0
        %1089 = vmatprep.subr.bf16.mxu0 0
        %1090 = vmatpush1.bf16.msra.mxu0 0
        %1091 = vmatprep.subr.bf16.mxu0 0
        %1092 = vmatpush1.bf16.msra.mxu0 0
        %1093 = vmatprep.subr.bf16.mxu0 0
        %1094 = vmatpush1.bf16.msra.mxu0 0
        %1095 = vmatprep.mubr.bf16.mxu0 0
        %1096 = vmatmul.mubr.bf16.gmra.mrb[0].mxu0 %v1061
        %v1097 = vpop.f32.mrb[0].mxu0
        %v1098 = vadd.f32 0.0, %v1097
        %v1099 = vpop.f32.mrb[0].mxu0
        %v1100 = vpop.f32.mrb[0].mxu0
        %v1101 = vadd.f32 0.0, %v1100
        %v1102 = vpop.f32.mrb[0].mxu0
        %1103 = vdwg.mxu0
        %v1104 = vld [vmem:[%s773] sm:$0x1]
        %v1106 = vlaneseq
        %v1107 = vshrl.u32 %v1106, 7
        %v1108 = vsub.s32 0, %v1107
        %v1109 = vrot.slane %v1104, %v1108
        %v1111 = vadd.f32 %v1098, %v1109
        %v1112 = vadd.f32 %v1101, %v1109
        %v1113 = vsub.f32 %v819, 1.0
        %v1114 = vsub.f32 %v820, 1.0
        %v1115 = vmul.f32 %v1113, 1e+09
        %v1116 = vmul.f32 %v1114, 1e+09
        %v1117 = vpack.c.bf16 %v1111, %v1111
        %v1118 = vpack.c.bf16 %v1112, %v1112
        %1120 = vrot.lane.b32.xlu0 %v1117, 96
        %v1121 = vpop.permute.xlu0 %1120
        %vm1122 = vcmask 64512
        %v1124 = vsel %vm1122, %v1117, 0
        %v1127 = vsel %vm1122, %v1121, 0
        %1129 = vmatprep.subr.bf16.mxu0 0
        %1130 = vmatpush1.bf16.xpose.msra.mxu0 %v1127
        %1131 = vmatprep.subr.bf16.mxu0 0
        %1132 = vmatpush1.bf16.xpose.msra.mxu0 0
        %1133 = vmatprep.subr.bf16.mxu0 0
        %1134 = vmatpush1.bf16.xpose.msra.mxu0 0
        %1135 = vmatprep.subr.bf16.mxu0 0
        %1136 = vmatpush1.bf16.xpose.msra.mxu0 0
        %1137 = vmatprep.subr.bf16.mxu0 0
        %1138 = vmatpush1.bf16.xpose.msra.mxu0 0
        %1139 = vmatprep.subr.bf16.mxu0 0
        %1140 = vmatpush1.bf16.xpose.msra.mxu0 0
        %1141 = vmatprep.subr.bf16.mxu0 0
        %1142 = vmatpush1.bf16.xpose.msra.mxu0 0
        %1143 = vmatprep.subr.bf16.mxu0 0
        %1144 = vmatpush1.bf16.xpose.msra.mxu0 0
        %1145 = vmatprep.subr.bf16.mxu0 0
        %1146 = vmatpush1.bf16.xpose.msra.mxu0 0
        %1147 = vmatprep.subr.bf16.mxu0 0
        %1148 = vmatpush1.bf16.xpose.msra.mxu0 0
        %1149 = vmatprep.subr.bf16.mxu0 0
        %1150 = vmatpush1.bf16.xpose.msra.mxu0 0
        %1151 = vmatprep.subr.bf16.mxu0 0
        %1152 = vmatpush1.bf16.xpose.msra.mxu0 0
        %1153 = vmatprep.subr.bf16.mxu0 0
        %1154 = vmatpush1.bf16.xpose.msra.mxu0 0
        %1155 = vmatprep.subr.bf16.mxu0 0
        %1156 = vmatpush1.bf16.xpose.msra.mxu0 0
        %1157 = vmatprep.subr.bf16.mxu0 0
        %1158 = vmatpush1.bf16.xpose.msra.mxu0 0
        %1159 = vmatprep.subr.bf16.mxu0 0
        %1160 = vmatpush1.bf16.xpose.msra.mxu0 0
        %1161 = vmatprep.mubr.bf16.mxu0 0
        %1162 = vmatmul.mubr.bf16.gmra.mrb[0].mxu0 %v1124
        %v1163 = vpop.f32.mrb[0].mxu0
        %v1164 = vadd.f32 0.0, %v1163
        %v1165 = vpop.f32.mrb[0].mxu0
        %v1166 = vpop.f32.mrb[0].mxu0
        %v1167 = vpop.f32.mrb[0].mxu0
        %1168 = vdwg.mxu0
        %1170 = vrot.lane.b32.xlu0 %v1118, 96
        %v1171 = vpop.permute.xlu0 %1170
        %v1173 = vsel %vm1122, %v1118, 0
        %v1176 = vsel %vm1122, %v1171, 0
        %1178 = vmatprep.subr.bf16.mxu0 0
        %1179 = vmatpush1.bf16.xpose.msra.mxu0 %v1176
        %1180 = vmatprep.subr.bf16.mxu0 0
        %1181 = vmatpush1.bf16.xpose.msra.mxu0 0
        %1182 = vmatprep.subr.bf16.mxu0 0
        %1183 = vmatpush1.bf16.xpose.msra.mxu0 0
        %1184 = vmatprep.subr.bf16.mxu0 0
        %1185 = vmatpush1.bf16.xpose.msra.mxu0 0
        %1186 = vmatprep.subr.bf16.mxu0 0
        %1187 = vmatpush1.bf16.xpose.msra.mxu0 0
        %1188 = vmatprep.subr.bf16.mxu0 0
        %1189 = vmatpush1.bf16.xpose.msra.mxu0 0
        %1190 = vmatprep.subr.bf16.mxu0 0
        %1191 = vmatpush1.bf16.xpose.msra.mxu0 0
        %1192 = vmatprep.subr.bf16.mxu0 0
        %1193 = vmatpush1.bf16.xpose.msra.mxu0 0
        %1194 = vmatprep.subr.bf16.mxu0 0
        %1195 = vmatpush1.bf16.xpose.msra.mxu0 0
        %1196 = vmatprep.subr.bf16.mxu0 0
        %1197 = vmatpush1.bf16.xpose.msra.mxu0 0
        %1198 = vmatprep.subr.bf16.mxu0 0
        %1199 = vmatpush1.bf16.xpose.msra.mxu0 0
        %1200 = vmatprep.subr.bf16.mxu0 0
        %1201 = vmatpush1.bf16.xpose.msra.mxu0 0
        %1202 = vmatprep.subr.bf16.mxu0 0
        %1203 = vmatpush1.bf16.xpose.msra.mxu0 0
        %1204 = vmatprep.subr.bf16.mxu0 0
        %1205 = vmatpush1.bf16.xpose.msra.mxu0 0
        %1206 = vmatprep.subr.bf16.mxu0 0
        %1207 = vmatpush1.bf16.xpose.msra.mxu0 0
        %1208 = vmatprep.subr.bf16.mxu0 0
        %1209 = vmatpush1.bf16.xpose.msra.mxu0 0
        %1210 = vmatprep.mubr.bf16.mxu0 0
        %1211 = vmatmul.mubr.bf16.gmra.mrb[0].mxu0 %v1173
        %v1212 = vpop.f32.mrb[0].mxu0
        %v1213 = vadd.f32 0.0, %v1212
        %v1214 = vpop.f32.mrb[0].mxu0
        %v1215 = vpop.f32.mrb[0].mxu0
        %v1216 = vpop.f32.mrb[0].mxu0
        %1217 = vdwg.mxu0
        %v1218 = vmul.f32 %v1164, 0.35355338
        %v1219 = vmul.f32 %v1213, 0.35355338
        %v1222 = vlaneseq
        %v1223 = vshrl.u32 %v1222, 7
        %v1224 = vsub.s32 0, %v1223
        %v1225 = vrot.slane %v1115, %v1224
        %v1226 = vlaneseq
        %v1227 = vshrl.u32 %v1226, 7
        %v1228 = vsub.s32 0, %v1227
        %v1229 = vrot.slane %v1116, %v1228
        %v1232 = vadd.f32 %v1218, %v1225
        %v1233 = vadd.f32 %v1219, %v1229
        %v1234 = vsel %vm1122, %v1232, -inf
        %1235 = vmax.xlane.f32.xlu0 %v1234
        %v1236 = vpop.xlane.xlu0 %1235
        %v1237 = vsel %vm1122, %v1233, -inf
        %1238 = vmax.xlane.f32.xlu0 %v1237
        %v1239 = vpop.xlane.xlu0 %1238
        %v1240 = vsub.f32 %v1232, %v1236
        %v1241 = vsub.f32 %v1233, %v1239
        %v1242 = vmul.f32 %v1240, 1.442695
        %v1243 = vpow.pop %v1242
        %v1244 = vmul.f32 %v1241, 1.442695
        %v1245 = vpow.pop %v1244
        %v1246 = vsel %vm1122, %v1243, 0.0
        %1247 = vadd.xlane.f32.xlu0 %v1246
        %v1248 = vpop.xlane.xlu0 %1247
        %v1249 = vsel %vm1122, %v1245, 0.0
        %1250 = vadd.xlane.f32.xlu0 %v1249
        %v1251 = vpop.xlane.xlu0 %1250
        %v1252 = vrcp.pop %v1248
        %v1253 = vrcp.pop %v1251
        %v1254 = vmul.f32 %v1243, %v1252
        %v1255 = vmul.f32 %v1245, %v1253
        %v1256 = vpack.c.bf16 %v1254, %v1254
        %v1257 = vpack.c.bf16 %v1255, %v1255
        %1258 = vrot.lane.b32.xlu0 %v1117, 64
        %v1259 = vpop.permute.xlu0 %1258
        %v1261 = vsel %vm1122, %v1256, 0
        %vm1263 = vcmask 1043456
        %v1265 = vsel %vm1263, %v1259, 0
        %1267 = vmatprep.subr.bf16.mxu0 0
        %1268 = vmatpush1.bf16.msra.mxu0 %v1265
        %1269 = vmatprep.subr.bf16.mxu0 0
        %1270 = vmatpush1.bf16.msra.mxu0 0
        %1271 = vmatprep.subr.bf16.mxu0 0
        %1272 = vmatpush1.bf16.msra.mxu0 0
        %1273 = vmatprep.subr.bf16.mxu0 0
        %1274 = vmatpush1.bf16.msra.mxu0 0
        %1275 = vmatprep.subr.bf16.mxu0 0
        %1276 = vmatpush1.bf16.msra.mxu0 0
        %1277 = vmatprep.subr.bf16.mxu0 0
        %1278 = vmatpush1.bf16.msra.mxu0 0
        %1279 = vmatprep.subr.bf16.mxu0 0
        %1280 = vmatpush1.bf16.msra.mxu0 0
        %1281 = vmatprep.subr.bf16.mxu0 0
        %1282 = vmatpush1.bf16.msra.mxu0 0
        %1283 = vmatprep.subr.bf16.mxu0 0
        %1284 = vmatpush1.bf16.msra.mxu0 0
        %1285 = vmatprep.subr.bf16.mxu0 0
        %1286 = vmatpush1.bf16.msra.mxu0 0
        %1287 = vmatprep.subr.bf16.mxu0 0
        %1288 = vmatpush1.bf16.msra.mxu0 0
        %1289 = vmatprep.subr.bf16.mxu0 0
        %1290 = vmatpush1.bf16.msra.mxu0 0
        %1291 = vmatprep.subr.bf16.mxu0 0
        %1292 = vmatpush1.bf16.msra.mxu0 0
        %1293 = vmatprep.subr.bf16.mxu0 0
        %1294 = vmatpush1.bf16.msra.mxu0 0
        %1295 = vmatprep.subr.bf16.mxu0 0
        %1296 = vmatpush1.bf16.msra.mxu0 0
        %1297 = vmatprep.subr.bf16.mxu0 0
        %1298 = vmatpush1.bf16.msra.mxu0 0
        %1299 = vmatprep.mubr.bf16.mxu0 0
        %1300 = vmatmul.mubr.bf16.gmra.mrb[0].mxu0 %v1261
        %v1301 = vpop.f32.mrb[0].mxu0
        %v1302 = vadd.f32 0.0, %v1301
        %v1303 = vpop.f32.mrb[0].mxu0
        %v1304 = vpop.f32.mrb[0].mxu0
        %v1305 = vpop.f32.mrb[0].mxu0
        %1306 = vdwg.mxu0
        %1307 = vrot.lane.b32.xlu0 %v1118, 64
        %v1308 = vpop.permute.xlu0 %1307
        %v1310 = vsel %vm1122, %v1257, 0
        %v1313 = vsel %vm1263, %v1308, 0
        %1315 = vmatprep.subr.bf16.mxu0 0
        %1316 = vmatpush1.bf16.msra.mxu0 %v1313
        %1317 = vmatprep.subr.bf16.mxu0 0
        %1318 = vmatpush1.bf16.msra.mxu0 0
        %1319 = vmatprep.subr.bf16.mxu0 0
        %1320 = vmatpush1.bf16.msra.mxu0 0
        %1321 = vmatprep.subr.bf16.mxu0 0
        %1322 = vmatpush1.bf16.msra.mxu0 0
        %1323 = vmatprep.subr.bf16.mxu0 0
        %1324 = vmatpush1.bf16.msra.mxu0 0
        %1325 = vmatprep.subr.bf16.mxu0 0
        %1326 = vmatpush1.bf16.msra.mxu0 0
        %1327 = vmatprep.subr.bf16.mxu0 0
        %1328 = vmatpush1.bf16.msra.mxu0 0
        %1329 = vmatprep.subr.bf16.mxu0 0
        %1330 = vmatpush1.bf16.msra.mxu0 0
        %1331 = vmatprep.subr.bf16.mxu0 0
        %1332 = vmatpush1.bf16.msra.mxu0 0
        %1333 = vmatprep.subr.bf16.mxu0 0
        %1334 = vmatpush1.bf16.msra.mxu0 0
        %1335 = vmatprep.subr.bf16.mxu0 0
        %1336 = vmatpush1.bf16.msra.mxu0 0
        %1337 = vmatprep.subr.bf16.mxu0 0
        %1338 = vmatpush1.bf16.msra.mxu0 0
        %1339 = vmatprep.subr.bf16.mxu0 0
        %1340 = vmatpush1.bf16.msra.mxu0 0
        %1341 = vmatprep.subr.bf16.mxu0 0
        %1342 = vmatpush1.bf16.msra.mxu0 0
        %1343 = vmatprep.subr.bf16.mxu0 0
        %1344 = vmatpush1.bf16.msra.mxu0 0
        %1345 = vmatprep.subr.bf16.mxu0 0
        %1346 = vmatpush1.bf16.msra.mxu0 0
        %1347 = vmatprep.mubr.bf16.mxu0 0
        %1348 = vmatmul.mubr.bf16.gmra.mrb[0].mxu0 %v1310
        %v1349 = vpop.f32.mrb[0].mxu0
        %v1350 = vadd.f32 0.0, %v1349
        %v1351 = vpop.f32.mrb[0].mxu0
        %v1352 = vpop.f32.mrb[0].mxu0
        %v1353 = vpop.f32.mrb[0].mxu0
        %1354 = vdwg.mxu0
        %v1355 = vpack.c.bf16 %v1350, %v1302
        %v1356 = vld [vmem:[%s778] sm:$0xf]
        %1357 = vrot.lane.b32.xlu0 %v1117, 120
        %v1358 = vpop.permute.xlu0 %1357
        %1359 = vrot.lane.b32.xlu0 %v1117, 88
        %v1360 = vpop.permute.xlu0 %1359
        %v1362 = vsel %vm1122, %v1358, 0
        %v1365 = vsel %vm1122, %v1360, 0
        %1367 = vmatprep.subr.bf16.mxu0 0
        %1368 = vmatpush1.bf16.xpose.msra.mxu0 %v1365
        %1369 = vmatprep.subr.bf16.mxu0 0
        %1370 = vmatpush1.bf16.xpose.msra.mxu0 0
        %1371 = vmatprep.subr.bf16.mxu0 0
        %1372 = vmatpush1.bf16.xpose.msra.mxu0 0
        %1373 = vmatprep.subr.bf16.mxu0 0
        %1374 = vmatpush1.bf16.xpose.msra.mxu0 0
        %1375 = vmatprep.subr.bf16.mxu0 0
        %1376 = vmatpush1.bf16.xpose.msra.mxu0 0
        %1377 = vmatprep.subr.bf16.mxu0 0
        %1378 = vmatpush1.bf16.xpose.msra.mxu0 0
        %1379 = vmatprep.subr.bf16.mxu0 0
        %1380 = vmatpush1.bf16.xpose.msra.mxu0 0
        %1381 = vmatprep.subr.bf16.mxu0 0
        %1382 = vmatpush1.bf16.xpose.msra.mxu0 0
        %1383 = vmatprep.subr.bf16.mxu0 0
        %1384 = vmatpush1.bf16.xpose.msra.mxu0 0
        %1385 = vmatprep.subr.bf16.mxu0 0
        %1386 = vmatpush1.bf16.xpose.msra.mxu0 0
        %1387 = vmatprep.subr.bf16.mxu0 0
        %1388 = vmatpush1.bf16.xpose.msra.mxu0 0
        %1389 = vmatprep.subr.bf16.mxu0 0
        %1390 = vmatpush1.bf16.xpose.msra.mxu0 0
        %1391 = vmatprep.subr.bf16.mxu0 0
        %1392 = vmatpush1.bf16.xpose.msra.mxu0 0
        %1393 = vmatprep.subr.bf16.mxu0 0
        %1394 = vmatpush1.bf16.xpose.msra.mxu0 0
        %1395 = vmatprep.subr.bf16.mxu0 0
        %1396 = vmatpush1.bf16.xpose.msra.mxu0 0
        %1397 = vmatprep.subr.bf16.mxu0 0
        %1398 = vmatpush1.bf16.xpose.msra.mxu0 0
        %1399 = vmatprep.mubr.bf16.mxu0 0
        %1400 = vmatmul.mubr.bf16.gmra.mrb[0].mxu0 %v1362
        %v1401 = vpop.f32.mrb[0].mxu0
        %v1402 = vadd.f32 0.0, %v1401
        %v1403 = vpop.f32.mrb[0].mxu0
        %v1404 = vpop.f32.mrb[0].mxu0
        %v1405 = vpop.f32.mrb[0].mxu0
        %1406 = vdwg.mxu0
        %1407 = vrot.lane.b32.xlu0 %v1118, 120
        %v1408 = vpop.permute.xlu0 %1407
        %1409 = vrot.lane.b32.xlu0 %v1118, 88
        %v1410 = vpop.permute.xlu0 %1409
        %v1412 = vsel %vm1122, %v1408, 0
        %v1415 = vsel %vm1122, %v1410, 0
        %1417 = vmatprep.subr.bf16.mxu0 0
        %1418 = vmatpush1.bf16.xpose.msra.mxu0 %v1415
        %1419 = vmatprep.subr.bf16.mxu0 0
        %1420 = vmatpush1.bf16.xpose.msra.mxu0 0
        %1421 = vmatprep.subr.bf16.mxu0 0
        %1422 = vmatpush1.bf16.xpose.msra.mxu0 0
        %1423 = vmatprep.subr.bf16.mxu0 0
        %1424 = vmatpush1.bf16.xpose.msra.mxu0 0
        %1425 = vmatprep.subr.bf16.mxu0 0
        %1426 = vmatpush1.bf16.xpose.msra.mxu0 0
        %1427 = vmatprep.subr.bf16.mxu0 0
        %1428 = vmatpush1.bf16.xpose.msra.mxu0 0
        %1429 = vmatprep.subr.bf16.mxu0 0
        %1430 = vmatpush1.bf16.xpose.msra.mxu0 0
        %1431 = vmatprep.subr.bf16.mxu0 0
        %1432 = vmatpush1.bf16.xpose.msra.mxu0 0
        %1433 = vmatprep.subr.bf16.mxu0 0
        %1434 = vmatpush1.bf16.xpose.msra.mxu0 0
        %1435 = vmatprep.subr.bf16.mxu0 0
        %1436 = vmatpush1.bf16.xpose.msra.mxu0 0
        %1437 = vmatprep.subr.bf16.mxu0 0
        %1438 = vmatpush1.bf16.xpose.msra.mxu0 0
        %1439 = vmatprep.subr.bf16.mxu0 0
        %1440 = vmatpush1.bf16.xpose.msra.mxu0 0
        %1441 = vmatprep.subr.bf16.mxu0 0
        %1442 = vmatpush1.bf16.xpose.msra.mxu0 0
        %1443 = vmatprep.subr.bf16.mxu0 0
        %1444 = vmatpush1.bf16.xpose.msra.mxu0 0
        %1445 = vmatprep.subr.bf16.mxu0 0
        %1446 = vmatpush1.bf16.xpose.msra.mxu0 0
        %1447 = vmatprep.subr.bf16.mxu0 0
        %1448 = vmatpush1.bf16.xpose.msra.mxu0 0
        %1449 = vmatprep.mubr.bf16.mxu0 0
        %1450 = vmatmul.mubr.bf16.gmra.mrb[0].mxu0 %v1412
        %v1451 = vpop.f32.mrb[0].mxu0
        %v1452 = vadd.f32 0.0, %v1451
        %v1453 = vpop.f32.mrb[0].mxu0
        %v1454 = vpop.f32.mrb[0].mxu0
        %v1455 = vpop.f32.mrb[0].mxu0
        %1456 = vdwg.mxu0
        %v1457 = vmul.f32 %v1402, 0.35355338
        %v1458 = vmul.f32 %v1452, 0.35355338
        %v1459 = vadd.f32 %v1457, %v1225
        %v1460 = vadd.f32 %v1458, %v1229
        %v1461 = vsel %vm1122, %v1459, -inf
        %1462 = vmax.xlane.f32.xlu0 %v1461
        %v1463 = vpop.xlane.xlu0 %1462
        %v1464 = vsel %vm1122, %v1460, -inf
        %1465 = vmax.xlane.f32.xlu0 %v1464
        %v1466 = vpop.xlane.xlu0 %1465
        %v1467 = vsub.f32 %v1459, %v1463
        %v1468 = vsub.f32 %v1460, %v1466
        %v1469 = vmul.f32 %v1467, 1.442695
        %v1470 = vpow.pop %v1469
        %v1471 = vmul.f32 %v1468, 1.442695
        %v1472 = vpow.pop %v1471
        %v1473 = vsel %vm1122, %v1470, 0.0
        %1474 = vadd.xlane.f32.xlu0 %v1473
        %v1475 = vpop.xlane.xlu0 %1474
        %v1476 = vsel %vm1122, %v1472, 0.0
        %1477 = vadd.xlane.f32.xlu0 %v1476
        %v1478 = vpop.xlane.xlu0 %1477
        %v1479 = vrcp.pop %v1475
        %v1480 = vrcp.pop %v1478
        %v1481 = vmul.f32 %v1470, %v1479
        %v1482 = vmul.f32 %v1472, %v1480
        %v1483 = vpack.c.bf16 %v1481, %v1481
        %v1484 = vpack.c.bf16 %v1482, %v1482
        %1485 = vrot.lane.b32.xlu0 %v1117, 56
        %v1486 = vpop.permute.xlu0 %1485
        %v1488 = vsel %vm1122, %v1483, 0
        %v1491 = vsel %vm1263, %v1486, 0
        %1493 = vmatprep.subr.bf16.mxu0 0
        %1494 = vmatpush1.bf16.msra.mxu0 %v1491
        %1495 = vmatprep.subr.bf16.mxu0 0
        %1496 = vmatpush1.bf16.msra.mxu0 0
        %1497 = vmatprep.subr.bf16.mxu0 0
        %1498 = vmatpush1.bf16.msra.mxu0 0
        %1499 = vmatprep.subr.bf16.mxu0 0
        %1500 = vmatpush1.bf16.msra.mxu0 0
        %1501 = vmatprep.subr.bf16.mxu0 0
        %1502 = vmatpush1.bf16.msra.mxu0 0
        %1503 = vmatprep.subr.bf16.mxu0 0
        %1504 = vmatpush1.bf16.msra.mxu0 0
        %1505 = vmatprep.subr.bf16.mxu0 0
        %1506 = vmatpush1.bf16.msra.mxu0 0
        %1507 = vmatprep.subr.bf16.mxu0 0
        %1508 = vmatpush1.bf16.msra.mxu0 0
        %1509 = vmatprep.subr.bf16.mxu0 0
        %1510 = vmatpush1.bf16.msra.mxu0 0
        %1511 = vmatprep.subr.bf16.mxu0 0
        %1512 = vmatpush1.bf16.msra.mxu0 0
        %1513 = vmatprep.subr.bf16.mxu0 0
        %1514 = vmatpush1.bf16.msra.mxu0 0
        %1515 = vmatprep.subr.bf16.mxu0 0
        %1516 = vmatpush1.bf16.msra.mxu0 0
        %1517 = vmatprep.subr.bf16.mxu0 0
        %1518 = vmatpush1.bf16.msra.mxu0 0
        %1519 = vmatprep.subr.bf16.mxu0 0
        %1520 = vmatpush1.bf16.msra.mxu0 0
        %1521 = vmatprep.subr.bf16.mxu0 0
        %1522 = vmatpush1.bf16.msra.mxu0 0
        %1523 = vmatprep.subr.bf16.mxu0 0
        %1524 = vmatpush1.bf16.msra.mxu0 0
        %1525 = vmatprep.mubr.bf16.mxu0 0
        %1526 = vmatmul.mubr.bf16.gmra.mrb[0].mxu0 %v1488
        %v1527 = vpop.f32.mrb[0].mxu0
        %v1528 = vadd.f32 0.0, %v1527
        %v1529 = vpop.f32.mrb[0].mxu0
        %v1530 = vpop.f32.mrb[0].mxu0
        %v1531 = vpop.f32.mrb[0].mxu0
        %1532 = vdwg.mxu0
        %1533 = vrot.lane.b32.xlu0 %v1118, 56
        %v1534 = vpop.permute.xlu0 %1533
        %v1536 = vsel %vm1122, %v1484, 0
        %v1539 = vsel %vm1263, %v1534, 0
        %1541 = vmatprep.subr.bf16.mxu0 0
        %1542 = vmatpush1.bf16.msra.mxu0 %v1539
        %1543 = vmatprep.subr.bf16.mxu0 0
        %1544 = vmatpush1.bf16.msra.mxu0 0
        %1545 = vmatprep.subr.bf16.mxu0 0
        %1546 = vmatpush1.bf16.msra.mxu0 0
        %1547 = vmatprep.subr.bf16.mxu0 0
        %1548 = vmatpush1.bf16.msra.mxu0 0
        %1549 = vmatprep.subr.bf16.mxu0 0
        %1550 = vmatpush1.bf16.msra.mxu0 0
        %1551 = vmatprep.subr.bf16.mxu0 0
        %1552 = vmatpush1.bf16.msra.mxu0 0
        %1553 = vmatprep.subr.bf16.mxu0 0
        %1554 = vmatpush1.bf16.msra.mxu0 0
        %1555 = vmatprep.subr.bf16.mxu0 0
        %1556 = vmatpush1.bf16.msra.mxu0 0
        %1557 = vmatprep.subr.bf16.mxu0 0
        %1558 = vmatpush1.bf16.msra.mxu0 0
        %1559 = vmatprep.subr.bf16.mxu0 0
        %1560 = vmatpush1.bf16.msra.mxu0 0
        %1561 = vmatprep.subr.bf16.mxu0 0
        %1562 = vmatpush1.bf16.msra.mxu0 0
        %1563 = vmatprep.subr.bf16.mxu0 0
        %1564 = vmatpush1.bf16.msra.mxu0 0
        %1565 = vmatprep.subr.bf16.mxu0 0
        %1566 = vmatpush1.bf16.msra.mxu0 0
        %1567 = vmatprep.subr.bf16.mxu0 0
        %1568 = vmatpush1.bf16.msra.mxu0 0
        %1569 = vmatprep.subr.bf16.mxu0 0
        %1570 = vmatpush1.bf16.msra.mxu0 0
        %1571 = vmatprep.subr.bf16.mxu0 0
        %1572 = vmatpush1.bf16.msra.mxu0 0
        %1573 = vmatprep.mubr.bf16.mxu0 0
        %1574 = vmatmul.mubr.bf16.gmra.mrb[0].mxu0 %v1536
        %v1575 = vpop.f32.mrb[0].mxu0
        %v1576 = vadd.f32 0.0, %v1575
        %v1577 = vpop.f32.mrb[0].mxu0
        %v1578 = vpop.f32.mrb[0].mxu0
        %v1579 = vpop.f32.mrb[0].mxu0
        %1580 = vdwg.mxu0
        %v1581 = vpack.c.bf16 %v1576, %v1528
        %s1582 = scalar_lea.vmem %s778, 4
        %v1583 = vld [vmem:[%s1582] sm:$0xf]
        %v1585 = vsel %vm1122, %v1581, 0
        %v1588 = vsel %vm1263, %v1583, 0
        %1590 = vmatprep.subr.bf16.mxu0 0
        %1591 = vmatpush1.bf16.msra.mxu0 %v1588
        %1592 = vmatprep.subr.bf16.mxu0 0
        %1593 = vmatpush1.bf16.msra.mxu0 0
        %1594 = vmatprep.subr.bf16.mxu0 0
        %1595 = vmatpush1.bf16.msra.mxu0 0
        %1596 = vmatprep.subr.bf16.mxu0 0
        %1597 = vmatpush1.bf16.msra.mxu0 0
        %1598 = vmatprep.subr.bf16.mxu0 0
        %1599 = vmatpush1.bf16.msra.mxu0 0
        %1600 = vmatprep.subr.bf16.mxu0 0
        %1601 = vmatpush1.bf16.msra.mxu0 0
        %1602 = vmatprep.subr.bf16.mxu0 0
        %1603 = vmatpush1.bf16.msra.mxu0 0
        %1604 = vmatprep.subr.bf16.mxu0 0
        %1605 = vmatpush1.bf16.msra.mxu0 0
        %1606 = vmatprep.subr.bf16.mxu0 0
        %1607 = vmatpush1.bf16.msra.mxu0 0
        %1608 = vmatprep.subr.bf16.mxu0 0
        %1609 = vmatpush1.bf16.msra.mxu0 0
        %1610 = vmatprep.subr.bf16.mxu0 0
        %1611 = vmatpush1.bf16.msra.mxu0 0
        %1612 = vmatprep.subr.bf16.mxu0 0
        %1613 = vmatpush1.bf16.msra.mxu0 0
        %1614 = vmatprep.subr.bf16.mxu0 0
        %1615 = vmatpush1.bf16.msra.mxu0 0
        %1616 = vmatprep.subr.bf16.mxu0 0
        %1617 = vmatpush1.bf16.msra.mxu0 0
        %1618 = vmatprep.subr.bf16.mxu0 0
        %1619 = vmatpush1.bf16.msra.mxu0 0
        %1620 = vmatprep.subr.bf16.mxu0 0
        %1621 = vmatpush1.bf16.msra.mxu0 0
        %1622 = vmatprep.mubr.bf16.mxu0 0
        %1623 = vmatmul.mubr.bf16.gmra.mrb[0].mxu0 %v1585
        %v1624 = vpop.f32.mrb[0].mxu0
        %v1625 = vadd.f32 0.0, %v1624
        %v1626 = vpop.f32.mrb[0].mxu0
        %v1627 = vpop.f32.mrb[0].mxu0
        %v1628 = vadd.f32 0.0, %v1627
        %v1629 = vpop.f32.mrb[0].mxu0
        %1630 = vdwg.mxu0
        %v1632 = vsel %vm1122, %v1355, 0
        %v1635 = vsel %vm1263, %v1356, 0
        %1637 = vmatprep.subr.bf16.mxu0 0
        %1638 = vmatpush1.bf16.msra.mxu0 %v1635
        %1639 = vmatprep.subr.bf16.mxu0 0
        %1640 = vmatpush1.bf16.msra.mxu0 0
        %1641 = vmatprep.subr.bf16.mxu0 0
        %1642 = vmatpush1.bf16.msra.mxu0 0
        %1643 = vmatprep.subr.bf16.mxu0 0
        %1644 = vmatpush1.bf16.msra.mxu0 0
        %1645 = vmatprep.subr.bf16.mxu0 0
        %1646 = vmatpush1.bf16.msra.mxu0 0
        %1647 = vmatprep.subr.bf16.mxu0 0
        %1648 = vmatpush1.bf16.msra.mxu0 0
        %1649 = vmatprep.subr.bf16.mxu0 0
        %1650 = vmatpush1.bf16.msra.mxu0 0
        %1651 = vmatprep.subr.bf16.mxu0 0
        %1652 = vmatpush1.bf16.msra.mxu0 0
        %1653 = vmatprep.subr.bf16.mxu0 0
        %1654 = vmatpush1.bf16.msra.mxu0 0
        %1655 = vmatprep.subr.bf16.mxu0 0
        %1656 = vmatpush1.bf16.msra.mxu0 0
        %1657 = vmatprep.subr.bf16.mxu0 0
        %1658 = vmatpush1.bf16.msra.mxu0 0
        %1659 = vmatprep.subr.bf16.mxu0 0
        %1660 = vmatpush1.bf16.msra.mxu0 0
        %1661 = vmatprep.subr.bf16.mxu0 0
        %1662 = vmatpush1.bf16.msra.mxu0 0
        %1663 = vmatprep.subr.bf16.mxu0 0
        %1664 = vmatpush1.bf16.msra.mxu0 0
        %1665 = vmatprep.subr.bf16.mxu0 0
        %1666 = vmatpush1.bf16.msra.mxu0 0
        %1667 = vmatprep.subr.bf16.mxu0 0
        %1668 = vmatpush1.bf16.msra.mxu0 0
        %1669 = vmatprep.mubr.bf16.mxu0 0
        %1670 = vmatmul.mubr.bf16.gmra.mrb[0].mxu0 %v1632
        %v1671 = vpop.f32.mrb[0].mxu0
        %v1672 = vadd.f32 %v1625, %v1671
        %v1673 = vpop.f32.mrb[0].mxu0
        %v1674 = vpop.f32.mrb[0].mxu0
        %v1675 = vadd.f32 %v1628, %v1674
        %v1676 = vpop.f32.mrb[0].mxu0
        %1677 = vdwg.mxu0
        %1678 = vrot.lane.b32.xlu0 %v1117, 112
        %v1679 = vpop.permute.xlu0 %1678
        %1680 = vrot.lane.b32.xlu0 %v1117, 80
        %v1681 = vpop.permute.xlu0 %1680
        %v1683 = vsel %vm1122, %v1679, 0
        %v1686 = vsel %vm1122, %v1681, 0
        %1688 = vmatprep.subr.bf16.mxu0 0
        %1689 = vmatpush1.bf16.xpose.msra.mxu0 %v1686
        %1690 = vmatprep.subr.bf16.mxu0 0
        %1691 = vmatpush1.bf16.xpose.msra.mxu0 0
        %1692 = vmatprep.subr.bf16.mxu0 0
        %1693 = vmatpush1.bf16.xpose.msra.mxu0 0
        %1694 = vmatprep.subr.bf16.mxu0 0
        %1695 = vmatpush1.bf16.xpose.msra.mxu0 0
        %1696 = vmatprep.subr.bf16.mxu0 0
        %1697 = vmatpush1.bf16.xpose.msra.mxu0 0
        %1698 = vmatprep.subr.bf16.mxu0 0
        %1699 = vmatpush1.bf16.xpose.msra.mxu0 0
        %1700 = vmatprep.subr.bf16.mxu0 0
        %1701 = vmatpush1.bf16.xpose.msra.mxu0 0
        %1702 = vmatprep.subr.bf16.mxu0 0
        %1703 = vmatpush1.bf16.xpose.msra.mxu0 0
        %1704 = vmatprep.subr.bf16.mxu0 0
        %1705 = vmatpush1.bf16.xpose.msra.mxu0 0
        %1706 = vmatprep.subr.bf16.mxu0 0
        %1707 = vmatpush1.bf16.xpose.msra.mxu0 0
        %1708 = vmatprep.subr.bf16.mxu0 0
        %1709 = vmatpush1.bf16.xpose.msra.mxu0 0
        %1710 = vmatprep.subr.bf16.mxu0 0
        %1711 = vmatpush1.bf16.xpose.msra.mxu0 0
        %1712 = vmatprep.subr.bf16.mxu0 0
        %1713 = vmatpush1.bf16.xpose.msra.mxu0 0
        %1714 = vmatprep.subr.bf16.mxu0 0
        %1715 = vmatpush1.bf16.xpose.msra.mxu0 0
        %1716 = vmatprep.subr.bf16.mxu0 0
        %1717 = vmatpush1.bf16.xpose.msra.mxu0 0
        %1718 = vmatprep.subr.bf16.mxu0 0
        %1719 = vmatpush1.bf16.xpose.msra.mxu0 0
        %1720 = vmatprep.mubr.bf16.mxu0 0
        %1721 = vmatmul.mubr.bf16.gmra.mrb[0].mxu0 %v1683
        %v1722 = vpop.f32.mrb[0].mxu0
        %v1723 = vadd.f32 0.0, %v1722
        %v1724 = vpop.f32.mrb[0].mxu0
        %v1725 = vpop.f32.mrb[0].mxu0
        %v1726 = vpop.f32.mrb[0].mxu0
        %1727 = vdwg.mxu0
        %1728 = vrot.lane.b32.xlu0 %v1118, 112
        %v1729 = vpop.permute.xlu0 %1728
        %1730 = vrot.lane.b32.xlu0 %v1118, 80
        %v1731 = vpop.permute.xlu0 %1730
        %v1733 = vsel %vm1122, %v1729, 0
        %v1736 = vsel %vm1122, %v1731, 0
        %1738 = vmatprep.subr.bf16.mxu0 0
        %1739 = vmatpush1.bf16.xpose.msra.mxu0 %v1736
        %1740 = vmatprep.subr.bf16.mxu0 0
        %1741 = vmatpush1.bf16.xpose.msra.mxu0 0
        %1742 = vmatprep.subr.bf16.mxu0 0
        %1743 = vmatpush1.bf16.xpose.msra.mxu0 0
        %1744 = vmatprep.subr.bf16.mxu0 0
        %1745 = vmatpush1.bf16.xpose.msra.mxu0 0
        %1746 = vmatprep.subr.bf16.mxu0 0
        %1747 = vmatpush1.bf16.xpose.msra.mxu0 0
        %1748 = vmatprep.subr.bf16.mxu0 0
        %1749 = vmatpush1.bf16.xpose.msra.mxu0 0
        %1750 = vmatprep.subr.bf16.mxu0 0
        %1751 = vmatpush1.bf16.xpose.msra.mxu0 0
        %1752 = vmatprep.subr.bf16.mxu0 0
        %1753 = vmatpush1.bf16.xpose.msra.mxu0 0
        %1754 = vmatprep.subr.bf16.mxu0 0
        %1755 = vmatpush1.bf16.xpose.msra.mxu0 0
        %1756 = vmatprep.subr.bf16.mxu0 0
        %1757 = vmatpush1.bf16.xpose.msra.mxu0 0
        %1758 = vmatprep.subr.bf16.mxu0 0
        %1759 = vmatpush1.bf16.xpose.msra.mxu0 0
        %1760 = vmatprep.subr.bf16.mxu0 0
        %1761 = vmatpush1.bf16.xpose.msra.mxu0 0
        %1762 = vmatprep.subr.bf16.mxu0 0
        %1763 = vmatpush1.bf16.xpose.msra.mxu0 0
        %1764 = vmatprep.subr.bf16.mxu0 0
        %1765 = vmatpush1.bf16.xpose.msra.mxu0 0
        %1766 = vmatprep.subr.bf16.mxu0 0
        %1767 = vmatpush1.bf16.xpose.msra.mxu0 0
        %1768 = vmatprep.subr.bf16.mxu0 0
        %1769 = vmatpush1.bf16.xpose.msra.mxu0 0
        %1770 = vmatprep.mubr.bf16.mxu0 0
        %1771 = vmatmul.mubr.bf16.gmra.mrb[0].mxu0 %v1733
        %v1772 = vpop.f32.mrb[0].mxu0
        %v1773 = vadd.f32 0.0, %v1772
        %v1774 = vpop.f32.mrb[0].mxu0
        %v1775 = vpop.f32.mrb[0].mxu0
        %v1776 = vpop.f32.mrb[0].mxu0
        %1777 = vdwg.mxu0
        %v1778 = vmul.f32 %v1723, 0.35355338
        %v1779 = vmul.f32 %v1773, 0.35355338
        %v1780 = vadd.f32 %v1778, %v1225
        %v1781 = vadd.f32 %v1779, %v1229
        %v1782 = vsel %vm1122, %v1780, -inf
        %1783 = vmax.xlane.f32.xlu0 %v1782
        %v1784 = vpop.xlane.xlu0 %1783
        %v1785 = vsel %vm1122, %v1781, -inf
        %1786 = vmax.xlane.f32.xlu0 %v1785
        %v1787 = vpop.xlane.xlu0 %1786
        %v1788 = vsub.f32 %v1780, %v1784
        %v1789 = vsub.f32 %v1781, %v1787
        %v1790 = vmul.f32 %v1788, 1.442695
        %v1791 = vpow.pop %v1790
        %v1792 = vmul.f32 %v1789, 1.442695
        %v1793 = vpow.pop %v1792
        %v1794 = vsel %vm1122, %v1791, 0.0
        %1795 = vadd.xlane.f32.xlu0 %v1794
        %v1796 = vpop.xlane.xlu0 %1795
        %v1797 = vsel %vm1122, %v1793, 0.0
        %1798 = vadd.xlane.f32.xlu0 %v1797
        %v1799 = vpop.xlane.xlu0 %1798
        %v1800 = vrcp.pop %v1796
        %v1801 = vrcp.pop %v1799
        %v1802 = vmul.f32 %v1791, %v1800
        %v1803 = vmul.f32 %v1793, %v1801
        %v1804 = vpack.c.bf16 %v1802, %v1802
        %v1805 = vpack.c.bf16 %v1803, %v1803
        %1806 = vrot.lane.b32.xlu0 %v1117, 48
        %v1807 = vpop.permute.xlu0 %1806
        %v1809 = vsel %vm1122, %v1804, 0
        %v1812 = vsel %vm1263, %v1807, 0
        %1814 = vmatprep.subr.bf16.mxu0 0
        %1815 = vmatpush1.bf16.msra.mxu0 %v1812
        %1816 = vmatprep.subr.bf16.mxu0 0
        %1817 = vmatpush1.bf16.msra.mxu0 0
        %1818 = vmatprep.subr.bf16.mxu0 0
        %1819 = vmatpush1.bf16.msra.mxu0 0
        %1820 = vmatprep.subr.bf16.mxu0 0
        %1821 = vmatpush1.bf16.msra.mxu0 0
        %1822 = vmatprep.subr.bf16.mxu0 0
        %1823 = vmatpush1.bf16.msra.mxu0 0
        %1824 = vmatprep.subr.bf16.mxu0 0
        %1825 = vmatpush1.bf16.msra.mxu0 0
        %1826 = vmatprep.subr.bf16.mxu0 0
        %1827 = vmatpush1.bf16.msra.mxu0 0
        %1828 = vmatprep.subr.bf16.mxu0 0
        %1829 = vmatpush1.bf16.msra.mxu0 0
        %1830 = vmatprep.subr.bf16.mxu0 0
        %1831 = vmatpush1.bf16.msra.mxu0 0
        %1832 = vmatprep.subr.bf16.mxu0 0
        %1833 = vmatpush1.bf16.msra.mxu0 0
        %1834 = vmatprep.subr.bf16.mxu0 0
        %1835 = vmatpush1.bf16.msra.mxu0 0
        %1836 = vmatprep.subr.bf16.mxu0 0
        %1837 = vmatpush1.bf16.msra.mxu0 0
        %1838 = vmatprep.subr.bf16.mxu0 0
        %1839 = vmatpush1.bf16.msra.mxu0 0
        %1840 = vmatprep.subr.bf16.mxu0 0
        %1841 = vmatpush1.bf16.msra.mxu0 0
        %1842 = vmatprep.subr.bf16.mxu0 0
        %1843 = vmatpush1.bf16.msra.mxu0 0
        %1844 = vmatprep.subr.bf16.mxu0 0
        %1845 = vmatpush1.bf16.msra.mxu0 0
        %1846 = vmatprep.mubr.bf16.mxu0 0
        %1847 = vmatmul.mubr.bf16.gmra.mrb[0].mxu0 %v1809
        %v1848 = vpop.f32.mrb[0].mxu0
        %v1849 = vadd.f32 0.0, %v1848
        %v1850 = vpop.f32.mrb[0].mxu0
        %v1851 = vpop.f32.mrb[0].mxu0
        %v1852 = vpop.f32.mrb[0].mxu0
        %1853 = vdwg.mxu0
        %1854 = vrot.lane.b32.xlu0 %v1118, 48
        %v1855 = vpop.permute.xlu0 %1854
        %v1857 = vsel %vm1122, %v1805, 0
        %v1860 = vsel %vm1263, %v1855, 0
        %1862 = vmatprep.subr.bf16.mxu0 0
        %1863 = vmatpush1.bf16.msra.mxu0 %v1860
        %1864 = vmatprep.subr.bf16.mxu0 0
        %1865 = vmatpush1.bf16.msra.mxu0 0
        %1866 = vmatprep.subr.bf16.mxu0 0
        %1867 = vmatpush1.bf16.msra.mxu0 0
        %1868 = vmatprep.subr.bf16.mxu0 0
        %1869 = vmatpush1.bf16.msra.mxu0 0
        %1870 = vmatprep.subr.bf16.mxu0 0
        %1871 = vmatpush1.bf16.msra.mxu0 0
        %1872 = vmatprep.subr.bf16.mxu0 0
        %1873 = vmatpush1.bf16.msra.mxu0 0
        %1874 = vmatprep.subr.bf16.mxu0 0
        %1875 = vmatpush1.bf16.msra.mxu0 0
        %1876 = vmatprep.subr.bf16.mxu0 0
        %1877 = vmatpush1.bf16.msra.mxu0 0
        %1878 = vmatprep.subr.bf16.mxu0 0
        %1879 = vmatpush1.bf16.msra.mxu0 0
        %1880 = vmatprep.subr.bf16.mxu0 0
        %1881 = vmatpush1.bf16.msra.mxu0 0
        %1882 = vmatprep.subr.bf16.mxu0 0
        %1883 = vmatpush1.bf16.msra.mxu0 0
        %1884 = vmatprep.subr.bf16.mxu0 0
        %1885 = vmatpush1.bf16.msra.mxu0 0
        %1886 = vmatprep.subr.bf16.mxu0 0
        %1887 = vmatpush1.bf16.msra.mxu0 0
        %1888 = vmatprep.subr.bf16.mxu0 0
        %1889 = vmatpush1.bf16.msra.mxu0 0
        %1890 = vmatprep.subr.bf16.mxu0 0
        %1891 = vmatpush1.bf16.msra.mxu0 0
        %1892 = vmatprep.subr.bf16.mxu0 0
        %1893 = vmatpush1.bf16.msra.mxu0 0
        %1894 = vmatprep.mubr.bf16.mxu0 0
        %1895 = vmatmul.mubr.bf16.gmra.mrb[0].mxu0 %v1857
        %v1896 = vpop.f32.mrb[0].mxu0
        %v1897 = vadd.f32 0.0, %v1896
        %v1898 = vpop.f32.mrb[0].mxu0
        %v1899 = vpop.f32.mrb[0].mxu0
        %v1900 = vpop.f32.mrb[0].mxu0
        %1901 = vdwg.mxu0
        %v1902 = vpack.c.bf16 %v1897, %v1849
        %s1903 = scalar_lea.vmem %s778, 8
        %v1904 = vld [vmem:[%s1903] sm:$0xf]
        %v1906 = vsel %vm1122, %v1902, 0
        %v1909 = vsel %vm1263, %v1904, 0
        %1911 = vmatprep.subr.bf16.mxu0 0
        %1912 = vmatpush1.bf16.msra.mxu0 %v1909
        %1913 = vmatprep.subr.bf16.mxu0 0
        %1914 = vmatpush1.bf16.msra.mxu0 0
        %1915 = vmatprep.subr.bf16.mxu0 0
        %1916 = vmatpush1.bf16.msra.mxu0 0
        %1917 = vmatprep.subr.bf16.mxu0 0
        %1918 = vmatpush1.bf16.msra.mxu0 0
        %1919 = vmatprep.subr.bf16.mxu0 0
        %1920 = vmatpush1.bf16.msra.mxu0 0
        %1921 = vmatprep.subr.bf16.mxu0 0
        %1922 = vmatpush1.bf16.msra.mxu0 0
        %1923 = vmatprep.subr.bf16.mxu0 0
        %1924 = vmatpush1.bf16.msra.mxu0 0
        %1925 = vmatprep.subr.bf16.mxu0 0
        %1926 = vmatpush1.bf16.msra.mxu0 0
        %1927 = vmatprep.subr.bf16.mxu0 0
        %1928 = vmatpush1.bf16.msra.mxu0 0
        %1929 = vmatprep.subr.bf16.mxu0 0
        %1930 = vmatpush1.bf16.msra.mxu0 0
        %1931 = vmatprep.subr.bf16.mxu0 0
        %1932 = vmatpush1.bf16.msra.mxu0 0
        %1933 = vmatprep.subr.bf16.mxu0 0
        %1934 = vmatpush1.bf16.msra.mxu0 0
        %1935 = vmatprep.subr.bf16.mxu0 0
        %1936 = vmatpush1.bf16.msra.mxu0 0
        %1937 = vmatprep.subr.bf16.mxu0 0
        %1938 = vmatpush1.bf16.msra.mxu0 0
        %1939 = vmatprep.subr.bf16.mxu0 0
        %1940 = vmatpush1.bf16.msra.mxu0 0
        %1941 = vmatprep.subr.bf16.mxu0 0
        %1942 = vmatpush1.bf16.msra.mxu0 0
        %1943 = vmatprep.mubr.bf16.mxu0 0
        %1944 = vmatmul.mubr.bf16.gmra.mrb[0].mxu0 %v1906
        %v1945 = vpop.f32.mrb[0].mxu0
        %v1946 = vadd.f32 0.0, %v1945
        %v1947 = vpop.f32.mrb[0].mxu0
        %v1948 = vpop.f32.mrb[0].mxu0
        %v1949 = vadd.f32 0.0, %v1948
        %v1950 = vpop.f32.mrb[0].mxu0
        %1951 = vdwg.mxu0
        %v1952 = vadd.f32 %v1672, %v1946
        %v1953 = vadd.f32 %v1675, %v1949
        %1954 = vrot.lane.b32.xlu0 %v1117, 104
        %v1955 = vpop.permute.xlu0 %1954
        %1956 = vrot.lane.b32.xlu0 %v1117, 72
        %v1957 = vpop.permute.xlu0 %1956
        %v1959 = vsel %vm1122, %v1955, 0
        %v1962 = vsel %vm1122, %v1957, 0
        %1964 = vmatprep.subr.bf16.mxu0 0
        %1965 = vmatpush1.bf16.xpose.msra.mxu0 %v1962
        %1966 = vmatprep.subr.bf16.mxu0 0
        %1967 = vmatpush1.bf16.xpose.msra.mxu0 0
        %1968 = vmatprep.subr.bf16.mxu0 0
        %1969 = vmatpush1.bf16.xpose.msra.mxu0 0
        %1970 = vmatprep.subr.bf16.mxu0 0
        %1971 = vmatpush1.bf16.xpose.msra.mxu0 0
        %1972 = vmatprep.subr.bf16.mxu0 0
        %1973 = vmatpush1.bf16.xpose.msra.mxu0 0
        %1974 = vmatprep.subr.bf16.mxu0 0
        %1975 = vmatpush1.bf16.xpose.msra.mxu0 0
        %1976 = vmatprep.subr.bf16.mxu0 0
        %1977 = vmatpush1.bf16.xpose.msra.mxu0 0
        %1978 = vmatprep.subr.bf16.mxu0 0
        %1979 = vmatpush1.bf16.xpose.msra.mxu0 0
        %1980 = vmatprep.subr.bf16.mxu0 0
        %1981 = vmatpush1.bf16.xpose.msra.mxu0 0
        %1982 = vmatprep.subr.bf16.mxu0 0
        %1983 = vmatpush1.bf16.xpose.msra.mxu0 0
        %1984 = vmatprep.subr.bf16.mxu0 0
        %1985 = vmatpush1.bf16.xpose.msra.mxu0 0
        %1986 = vmatprep.subr.bf16.mxu0 0
        %1987 = vmatpush1.bf16.xpose.msra.mxu0 0
        %1988 = vmatprep.subr.bf16.mxu0 0
        %1989 = vmatpush1.bf16.xpose.msra.mxu0 0
        %1990 = vmatprep.subr.bf16.mxu0 0
        %1991 = vmatpush1.bf16.xpose.msra.mxu0 0
        %1992 = vmatprep.subr.bf16.mxu0 0
        %1993 = vmatpush1.bf16.xpose.msra.mxu0 0
        %1994 = vmatprep.subr.bf16.mxu0 0
        %1995 = vmatpush1.bf16.xpose.msra.mxu0 0
        %1996 = vmatprep.mubr.bf16.mxu0 0
        %1997 = vmatmul.mubr.bf16.gmra.mrb[0].mxu0 %v1959
        %v1998 = vpop.f32.mrb[0].mxu0
        %v1999 = vadd.f32 0.0, %v1998
        %v2000 = vpop.f32.mrb[0].mxu0
        %v2001 = vpop.f32.mrb[0].mxu0
        %v2002 = vpop.f32.mrb[0].mxu0
        %2003 = vdwg.mxu0
        %2004 = vrot.lane.b32.xlu0 %v1118, 104
        %v2005 = vpop.permute.xlu0 %2004
        %2006 = vrot.lane.b32.xlu0 %v1118, 72
        %v2007 = vpop.permute.xlu0 %2006
        %v2009 = vsel %vm1122, %v2005, 0
        %v2012 = vsel %vm1122, %v2007, 0
        %2014 = vmatprep.subr.bf16.mxu0 0
        %2015 = vmatpush1.bf16.xpose.msra.mxu0 %v2012
        %2016 = vmatprep.subr.bf16.mxu0 0
        %2017 = vmatpush1.bf16.xpose.msra.mxu0 0
        %2018 = vmatprep.subr.bf16.mxu0 0
        %2019 = vmatpush1.bf16.xpose.msra.mxu0 0
        %2020 = vmatprep.subr.bf16.mxu0 0
        %2021 = vmatpush1.bf16.xpose.msra.mxu0 0
        %2022 = vmatprep.subr.bf16.mxu0 0
        %2023 = vmatpush1.bf16.xpose.msra.mxu0 0
        %2024 = vmatprep.subr.bf16.mxu0 0
        %2025 = vmatpush1.bf16.xpose.msra.mxu0 0
        %2026 = vmatprep.subr.bf16.mxu0 0
        %2027 = vmatpush1.bf16.xpose.msra.mxu0 0
        %2028 = vmatprep.subr.bf16.mxu0 0
        %2029 = vmatpush1.bf16.xpose.msra.mxu0 0
        %2030 = vmatprep.subr.bf16.mxu0 0
        %2031 = vmatpush1.bf16.xpose.msra.mxu0 0
        %2032 = vmatprep.subr.bf16.mxu0 0
        %2033 = vmatpush1.bf16.xpose.msra.mxu0 0
        %2034 = vmatprep.subr.bf16.mxu0 0
        %2035 = vmatpush1.bf16.xpose.msra.mxu0 0
        %2036 = vmatprep.subr.bf16.mxu0 0
        %2037 = vmatpush1.bf16.xpose.msra.mxu0 0
        %2038 = vmatprep.subr.bf16.mxu0 0
        %2039 = vmatpush1.bf16.xpose.msra.mxu0 0
        %2040 = vmatprep.subr.bf16.mxu0 0
        %2041 = vmatpush1.bf16.xpose.msra.mxu0 0
        %2042 = vmatprep.subr.bf16.mxu0 0
        %2043 = vmatpush1.bf16.xpose.msra.mxu0 0
        %2044 = vmatprep.subr.bf16.mxu0 0
        %2045 = vmatpush1.bf16.xpose.msra.mxu0 0
        %2046 = vmatprep.mubr.bf16.mxu0 0
        %2047 = vmatmul.mubr.bf16.gmra.mrb[0].mxu0 %v2009
        %v2048 = vpop.f32.mrb[0].mxu0
        %v2049 = vadd.f32 0.0, %v2048
        %v2050 = vpop.f32.mrb[0].mxu0
        %v2051 = vpop.f32.mrb[0].mxu0
        %v2052 = vpop.f32.mrb[0].mxu0
        %2053 = vdwg.mxu0
        %v2054 = vmul.f32 %v1999, 0.35355338
        %v2055 = vmul.f32 %v2049, 0.35355338
        %v2056 = vadd.f32 %v2054, %v1225
        %v2057 = vadd.f32 %v2055, %v1229
        %v2058 = vsel %vm1122, %v2056, -inf
        %2059 = vmax.xlane.f32.xlu0 %v2058
        %v2060 = vpop.xlane.xlu0 %2059
        %v2061 = vsel %vm1122, %v2057, -inf
        %2062 = vmax.xlane.f32.xlu0 %v2061
        %v2063 = vpop.xlane.xlu0 %2062
        %v2064 = vsub.f32 %v2056, %v2060
        %v2065 = vsub.f32 %v2057, %v2063
        %v2066 = vmul.f32 %v2064, 1.442695
        %v2067 = vpow.pop %v2066
        %v2068 = vmul.f32 %v2065, 1.442695
        %v2069 = vpow.pop %v2068
        %v2070 = vsel %vm1122, %v2067, 0.0
        %2071 = vadd.xlane.f32.xlu0 %v2070
        %v2072 = vpop.xlane.xlu0 %2071
        %v2073 = vsel %vm1122, %v2069, 0.0
        %2074 = vadd.xlane.f32.xlu0 %v2073
        %v2075 = vpop.xlane.xlu0 %2074
        %v2076 = vrcp.pop %v2072
        %v2077 = vrcp.pop %v2075
        %v2078 = vmul.f32 %v2067, %v2076
        %v2079 = vmul.f32 %v2069, %v2077
        %v2080 = vpack.c.bf16 %v2078, %v2078
        %v2081 = vpack.c.bf16 %v2079, %v2079
        %2082 = vrot.lane.b32.xlu0 %v1117, 40
        %v2083 = vpop.permute.xlu0 %2082
        %v2085 = vsel %vm1122, %v2080, 0
        %v2088 = vsel %vm1263, %v2083, 0
        %2090 = vmatprep.subr.bf16.mxu0 0
        %2091 = vmatpush1.bf16.msra.mxu0 %v2088
        %2092 = vmatprep.subr.bf16.mxu0 0
        %2093 = vmatpush1.bf16.msra.mxu0 0
        %2094 = vmatprep.subr.bf16.mxu0 0
        %2095 = vmatpush1.bf16.msra.mxu0 0
        %2096 = vmatprep.subr.bf16.mxu0 0
        %2097 = vmatpush1.bf16.msra.mxu0 0
        %2098 = vmatprep.subr.bf16.mxu0 0
        %2099 = vmatpush1.bf16.msra.mxu0 0
        %2100 = vmatprep.subr.bf16.mxu0 0
        %2101 = vmatpush1.bf16.msra.mxu0 0
        %2102 = vmatprep.subr.bf16.mxu0 0
        %2103 = vmatpush1.bf16.msra.mxu0 0
        %2104 = vmatprep.subr.bf16.mxu0 0
        %2105 = vmatpush1.bf16.msra.mxu0 0
        %2106 = vmatprep.subr.bf16.mxu0 0
        %2107 = vmatpush1.bf16.msra.mxu0 0
        %2108 = vmatprep.subr.bf16.mxu0 0
        %2109 = vmatpush1.bf16.msra.mxu0 0
        %2110 = vmatprep.subr.bf16.mxu0 0
        %2111 = vmatpush1.bf16.msra.mxu0 0
        %2112 = vmatprep.subr.bf16.mxu0 0
        %2113 = vmatpush1.bf16.msra.mxu0 0
        %2114 = vmatprep.subr.bf16.mxu0 0
        %2115 = vmatpush1.bf16.msra.mxu0 0
        %2116 = vmatprep.subr.bf16.mxu0 0
        %2117 = vmatpush1.bf16.msra.mxu0 0
        %2118 = vmatprep.subr.bf16.mxu0 0
        %2119 = vmatpush1.bf16.msra.mxu0 0
        %2120 = vmatprep.subr.bf16.mxu0 0
        %2121 = vmatpush1.bf16.msra.mxu0 0
        %2122 = vmatprep.mubr.bf16.mxu0 0
        %2123 = vmatmul.mubr.bf16.gmra.mrb[0].mxu0 %v2085
        %v2124 = vpop.f32.mrb[0].mxu0
        %v2125 = vadd.f32 0.0, %v2124
        %v2126 = vpop.f32.mrb[0].mxu0
        %v2127 = vpop.f32.mrb[0].mxu0
        %v2128 = vpop.f32.mrb[0].mxu0
        %2129 = vdwg.mxu0
        %2130 = vrot.lane.b32.xlu0 %v1118, 40
        %v2131 = vpop.permute.xlu0 %2130
        %v2133 = vsel %vm1122, %v2081, 0
        %v2136 = vsel %vm1263, %v2131, 0
        %2138 = vmatprep.subr.bf16.mxu0 0
        %2139 = vmatpush1.bf16.msra.mxu0 %v2136
        %2140 = vmatprep.subr.bf16.mxu0 0
        %2141 = vmatpush1.bf16.msra.mxu0 0
        %2142 = vmatprep.subr.bf16.mxu0 0
        %2143 = vmatpush1.bf16.msra.mxu0 0
        %2144 = vmatprep.subr.bf16.mxu0 0
        %2145 = vmatpush1.bf16.msra.mxu0 0
        %2146 = vmatprep.subr.bf16.mxu0 0
        %2147 = vmatpush1.bf16.msra.mxu0 0
        %2148 = vmatprep.subr.bf16.mxu0 0
        %2149 = vmatpush1.bf16.msra.mxu0 0
        %2150 = vmatprep.subr.bf16.mxu0 0
        %2151 = vmatpush1.bf16.msra.mxu0 0
        %2152 = vmatprep.subr.bf16.mxu0 0
        %2153 = vmatpush1.bf16.msra.mxu0 0
        %2154 = vmatprep.subr.bf16.mxu0 0
        %2155 = vmatpush1.bf16.msra.mxu0 0
        %2156 = vmatprep.subr.bf16.mxu0 0
        %2157 = vmatpush1.bf16.msra.mxu0 0
        %2158 = vmatprep.subr.bf16.mxu0 0
        %2159 = vmatpush1.bf16.msra.mxu0 0
        %2160 = vmatprep.subr.bf16.mxu0 0
        %2161 = vmatpush1.bf16.msra.mxu0 0
        %2162 = vmatprep.subr.bf16.mxu0 0
        %2163 = vmatpush1.bf16.msra.mxu0 0
        %2164 = vmatprep.subr.bf16.mxu0 0
        %2165 = vmatpush1.bf16.msra.mxu0 0
        %2166 = vmatprep.subr.bf16.mxu0 0
        %2167 = vmatpush1.bf16.msra.mxu0 0
        %2168 = vmatprep.subr.bf16.mxu0 0
        %2169 = vmatpush1.bf16.msra.mxu0 0
        %2170 = vmatprep.mubr.bf16.mxu0 0
        %2171 = vmatmul.mubr.bf16.gmra.mrb[0].mxu0 %v2133
        %v2172 = vpop.f32.mrb[0].mxu0
        %v2173 = vadd.f32 0.0, %v2172
        %v2174 = vpop.f32.mrb[0].mxu0
        %v2175 = vpop.f32.mrb[0].mxu0
        %v2176 = vpop.f32.mrb[0].mxu0
        %2177 = vdwg.mxu0
        %v2178 = vpack.c.bf16 %v2173, %v2125
        %s2179 = scalar_lea.vmem %s778, 12
        %v2180 = vld [vmem:[%s2179] sm:$0xf]
        %v2182 = vsel %vm1122, %v2178, 0
        %v2185 = vsel %vm1263, %v2180, 0
        %2187 = vmatprep.subr.bf16.mxu0 0
        %2188 = vmatpush1.bf16.msra.mxu0 %v2185
        %2189 = vmatprep.subr.bf16.mxu0 0
        %2190 = vmatpush1.bf16.msra.mxu0 0
        %2191 = vmatprep.subr.bf16.mxu0 0
        %2192 = vmatpush1.bf16.msra.mxu0 0
        %2193 = vmatprep.subr.bf16.mxu0 0
        %2194 = vmatpush1.bf16.msra.mxu0 0
        %2195 = vmatprep.subr.bf16.mxu0 0
        %2196 = vmatpush1.bf16.msra.mxu0 0
        %2197 = vmatprep.subr.bf16.mxu0 0
        %2198 = vmatpush1.bf16.msra.mxu0 0
        %2199 = vmatprep.subr.bf16.mxu0 0
        %2200 = vmatpush1.bf16.msra.mxu0 0
        %2201 = vmatprep.subr.bf16.mxu0 0
        %2202 = vmatpush1.bf16.msra.mxu0 0
        %2203 = vmatprep.subr.bf16.mxu0 0
        %2204 = vmatpush1.bf16.msra.mxu0 0
        %2205 = vmatprep.subr.bf16.mxu0 0
        %2206 = vmatpush1.bf16.msra.mxu0 0
        %2207 = vmatprep.subr.bf16.mxu0 0
        %2208 = vmatpush1.bf16.msra.mxu0 0
        %2209 = vmatprep.subr.bf16.mxu0 0
        %2210 = vmatpush1.bf16.msra.mxu0 0
        %2211 = vmatprep.subr.bf16.mxu0 0
        %2212 = vmatpush1.bf16.msra.mxu0 0
        %2213 = vmatprep.subr.bf16.mxu0 0
        %2214 = vmatpush1.bf16.msra.mxu0 0
        %2215 = vmatprep.subr.bf16.mxu0 0
        %2216 = vmatpush1.bf16.msra.mxu0 0
        %2217 = vmatprep.subr.bf16.mxu0 0
        %2218 = vmatpush1.bf16.msra.mxu0 0
        %2219 = vmatprep.mubr.bf16.mxu0 0
        %2220 = vmatmul.mubr.bf16.gmra.mrb[0].mxu0 %v2182
        %v2221 = vpop.f32.mrb[0].mxu0
        %v2222 = vadd.f32 0.0, %v2221
        %v2223 = vpop.f32.mrb[0].mxu0
        %v2224 = vpop.f32.mrb[0].mxu0
        %v2225 = vadd.f32 0.0, %v2224
        %v2226 = vpop.f32.mrb[0].mxu0
        %2227 = vdwg.mxu0
        %v2228 = vadd.f32 %v1952, %v2222
        %v2229 = vadd.f32 %v1953, %v2225
        %v2230 = vld [vmem:[%s781] sm:$0x1]
        %v2232 = vlaneseq
        %v2233 = vshrl.u32 %v2232, 7
        %v2234 = vsub.s32 0, %v2233
        %v2235 = vrot.slane %v2230, %v2234
        %v2237 = vadd.f32 %v2228, %v2235
        %v2238 = vadd.f32 %v2229, %v2235
        %v2239 = vadd.f32 %v2237, %v1040
        %v2240 = vadd.f32 %v2238, %v1041
        %v2241 = vpack.c.bf16 %v2240, %v2239
        %v2242 = vld [vmem:[%s642] sm:$0xf]
        %v2243 = vld [vmem:[%s642 + $0x4] sm:$0xf]
        %v2244 = vld [vmem:[%s642 + $0x8] sm:$0xf]
        %v2245 = vld [vmem:[%s642 + $0xc] sm:$0xf]
        %v2246 = vld [vmem:[%s784] sm:$0x1]
        %v2248 = vlaneseq
        %v2249 = vshrl.u32 %v2248, 7
        %v2250 = vsub.s32 0, %v2249
        %v2251 = vrot.slane %v2246, %v2250
        %v2257 = vunpack.c.l.b16 %v2242
        %v2258 = vunpack.c.l.b16 %v2243
        %v2259 = vunpack.c.l.b16 %v2244
        %v2260 = vunpack.c.l.b16 %v2245
        %v2261 = vpack.c.b16 %v2258, %v2257
        %v2262 = vpack.c.b16 %v2260, %v2259
        %v2266 = vsel %vm1059, %v2241, 0
        %2268 = vmatprep.subr.bf16.mxu0 0
        %2269 = vmatpush1.bf16.msra.mxu0 %v2261
        %2270 = vmatprep.subr.bf16.mxu0 0
        %2271 = vmatpush1.bf16.msra.mxu0 %v2262
        %2272 = vmatprep.subr.bf16.mxu0 0
        %2273 = vmatpush1.bf16.msra.mxu0 0
        %2274 = vmatprep.subr.bf16.mxu0 0
        %2275 = vmatpush1.bf16.msra.mxu0 0
        %2276 = vmatprep.subr.bf16.mxu0 0
        %2277 = vmatpush1.bf16.msra.mxu0 0
        %2278 = vmatprep.subr.bf16.mxu0 0
        %2279 = vmatpush1.bf16.msra.mxu0 0
        %2280 = vmatprep.subr.bf16.mxu0 0
        %2281 = vmatpush1.bf16.msra.mxu0 0
        %2282 = vmatprep.subr.bf16.mxu0 0
        %2283 = vmatpush1.bf16.msra.mxu0 0
        %2284 = vmatprep.subr.bf16.mxu0 0
        %2285 = vmatpush1.bf16.msra.mxu0 0
        %2286 = vmatprep.subr.bf16.mxu0 0
        %2287 = vmatpush1.bf16.msra.mxu0 0
        %2288 = vmatprep.subr.bf16.mxu0 0
        %2289 = vmatpush1.bf16.msra.mxu0 0
        %2290 = vmatprep.subr.bf16.mxu0 0
        %2291 = vmatpush1.bf16.msra.mxu0 0
        %2292 = vmatprep.subr.bf16.mxu0 0
        %2293 = vmatpush1.bf16.msra.mxu0 0
        %2294 = vmatprep.subr.bf16.mxu0 0
        %2295 = vmatpush1.bf16.msra.mxu0 0
        %2296 = vmatprep.subr.bf16.mxu0 0
        %2297 = vmatpush1.bf16.msra.mxu0 0
        %2298 = vmatprep.subr.bf16.mxu0 0
        %2299 = vmatpush1.bf16.msra.mxu0 0
        %2300 = vmatprep.mubr.bf16.mxu0 0
        %2301 = vmatmul.mubr.bf16.gmra.mrb[0].mxu0 %v2266
        %v2302 = vpop.f32.mrb[0].mxu0
        %v2303 = vadd.f32 %v2251, %v2302
        %v2304 = vpop.f32.mrb[0].mxu0
        %v2305 = vpop.f32.mrb[0].mxu0
        %v2306 = vadd.f32 %v2251, %v2305
        %v2307 = vpop.f32.mrb[0].mxu0
        %2308 = vdwg.mxu0
        %v2309 = vmax.f32 %v2303, 0.0
        %v2310 = vmax.f32 %v2306, 0.0
        %v2311 = vpack.c.bf16 %v2310, %v2309
        %v2312 = vld [vmem:[%s789] sm:$0xf]
        %v2313 = vld [vmem:[%s789 + $0x4] sm:$0xf]
        %v2314 = vld [vmem:[%s789 + $0x8] sm:$0xf]
        %v2315 = vld [vmem:[%s789 + $0xc] sm:$0xf]
        %v2316 = vld [vmem:[%s789 + $0x10] sm:$0xf]
        %v2317 = vld [vmem:[%s789 + $0x14] sm:$0xf]
        %v2318 = vld [vmem:[%s789 + $0x18] sm:$0xf]
        %v2319 = vld [vmem:[%s789 + $0x1c] sm:$0xf]
        %v2320 = vld [vmem:[%s792] sm:$0x1]
        %v2322 = vlaneseq
        %v2323 = vshrl.u32 %v2322, 7
        %v2324 = vsub.s32 0, %v2323
        %v2325 = vrot.slane %v2320, %v2324
        %v2335 = vunpack.c.l.b16 %v2312
        %v2336 = vunpack.c.l.b16 %v2313
        %v2337 = vunpack.c.l.b16 %v2314
        %v2338 = vunpack.c.l.b16 %v2315
        %v2339 = vunpack.c.l.b16 %v2316
        %v2340 = vunpack.c.l.b16 %v2317
        %v2341 = vunpack.c.l.b16 %v2318
        %v2342 = vunpack.c.l.b16 %v2319
        %v2343 = vpack.c.b16 %v2336, %v2335
        %v2344 = vpack.c.b16 %v2338, %v2337
        %v2345 = vpack.c.b16 %v2340, %v2339
        %v2346 = vpack.c.b16 %v2342, %v2341
        %vm2351 = vcmask 523264
        %v2353 = vsel %vm2351, %v2311, 0
        %2355 = vmatprep.subr.bf16.mxu0 0
        %2356 = vmatpush1.bf16.msra.mxu0 %v2343
        %2357 = vmatprep.subr.bf16.mxu0 0
        %2358 = vmatpush1.bf16.msra.mxu0 %v2344
        %2359 = vmatprep.subr.bf16.mxu0 0
        %2360 = vmatpush1.bf16.msra.mxu0 %v2345
        %2361 = vmatprep.subr.bf16.mxu0 0
        %2362 = vmatpush1.bf16.msra.mxu0 %v2346
        %2363 = vmatprep.subr.bf16.mxu0 0
        %2364 = vmatpush1.bf16.msra.mxu0 0
        %2365 = vmatprep.subr.bf16.mxu0 0
        %2366 = vmatpush1.bf16.msra.mxu0 0
        %2367 = vmatprep.subr.bf16.mxu0 0
        %2368 = vmatpush1.bf16.msra.mxu0 0
        %2369 = vmatprep.subr.bf16.mxu0 0
        %2370 = vmatpush1.bf16.msra.mxu0 0
        %2371 = vmatprep.subr.bf16.mxu0 0
        %2372 = vmatpush1.bf16.msra.mxu0 0
        %2373 = vmatprep.subr.bf16.mxu0 0
        %2374 = vmatpush1.bf16.msra.mxu0 0
        %2375 = vmatprep.subr.bf16.mxu0 0
        %2376 = vmatpush1.bf16.msra.mxu0 0
        %2377 = vmatprep.subr.bf16.mxu0 0
        %2378 = vmatpush1.bf16.msra.mxu0 0
        %2379 = vmatprep.subr.bf16.mxu0 0
        %2380 = vmatpush1.bf16.msra.mxu0 0
        %2381 = vmatprep.subr.bf16.mxu0 0
        %2382 = vmatpush1.bf16.msra.mxu0 0
        %2383 = vmatprep.subr.bf16.mxu0 0
        %2384 = vmatpush1.bf16.msra.mxu0 0
        %2385 = vmatprep.subr.bf16.mxu0 0
        %2386 = vmatpush1.bf16.msra.mxu0 0
        %2387 = vmatprep.mubr.bf16.mxu0 0
        %2388 = vmatmul.mubr.bf16.gmra.mrb[0].mxu0 %v2353
        %v2389 = vpop.f32.mrb[0].mxu0
        %v2390 = vadd.f32 %v2325, %v2389
        %v2391 = vpop.f32.mrb[0].mxu0
        %v2392 = vpop.f32.mrb[0].mxu0
        %v2393 = vadd.f32 %v2325, %v2392
        %v2394 = vpop.f32.mrb[0].mxu0
        %2395 = vdwg.mxu0
        %v2396 = vadd.f32 %v2390, %v2239
        %v2397 = vadd.f32 %v2393, %v2240
        %v2398 = vsel %vm1059, %v2396, 0.0
        %2399 = vadd.xlane.f32.xlu0 %v2398
        %v2400 = vpop.xlane.xlu0 %2399
        %v2401 = vsel %vm1059, %v2397, 0.0
        %2402 = vadd.xlane.f32.xlu0 %v2401
        %v2403 = vpop.xlane.xlu0 %2402
        %v2404 = vrcp.pop 32.0
        %v2405 = vmul.f32 %v2400, %v2404
        %v2406 = vmul.f32 %v2403, %v2404
        %v2407 = vsub.f32 %v2396, %v2405
        %v2408 = vsub.f32 %v2397, %v2406
        %v2409 = vmul.f32 %v2407, %v2407
        %v2410 = vmul.f32 %v2408, %v2408
        %v2411 = vsel %vm1059, %v2409, 0.0
        %2412 = vadd.xlane.f32.xlu0 %v2411
        %v2413 = vpop.xlane.xlu0 %2412
        %v2414 = vsel %vm1059, %v2410, 0.0
        %2415 = vadd.xlane.f32.xlu0 %v2414
        %v2416 = vpop.xlane.xlu0 %2415
        %v2417 = vmul.f32 %v2413, %v2404
        %v2418 = vmul.f32 %v2416, %v2404
        %v2419 = vadd.f32 %v2417, 1e-05
        %v2420 = vadd.f32 %v2418, 1e-05
        %v2421 = vrsqrt.pop %v2419
        %v2422 = vrsqrt.pop %v2420
        %v2423 = vmul.f32 %v2407, %v2421
        %v2424 = vmul.f32 %v2408, %v2422
        %v2425 = vld [vmem:[%s795] sm:$0x1]
        %v2427 = vlaneseq
        %v2428 = vshrl.u32 %v2427, 7
        %v2429 = vsub.s32 0, %v2428
        %v2430 = vrot.slane %v2425, %v2429
        %v2432 = vmul.f32 %v2423, %v2430
        %v2433 = vmul.f32 %v2424, %v2430
        %v2434 = vld [vmem:[%s798] sm:$0x1]
        %v2436 = vlaneseq
        %v2437 = vshrl.u32 %v2436, 7
        %v2438 = vsub.s32 0, %v2437
        %v2439 = vrot.slane %v2434, %v2438
        %v2441 = vadd.f32 %v2432, %v2439
        %v2442 = vadd.f32 %v2433, %v2439
        %2443 = vst.msk [vmem:[#allocation7] sm:$0xff] %vm1059, %v2441
        %2444 = vst.msk [vmem:[#allocation7 + $0x8] sm:$0xff] %vm1059, %v2442
        // Predicated region
        $region101: #{tpu_custom_call.1} parent=83 // pred_check
          %p2445 = pneg %p473
        $region102: #{tpu_custom_call.1} parent=83 // pred_check_branch
          %2447 = sbr.rel (%p2445) target = $region104
        $region103: #{tpu_custom_call.1} parent=83 // pred_region
          %s2448 = smul.u32 2, %s36
          %s2450 = ssub.s32 256, 256
          %2451 = vsyncadd [#allocation4], %s2450
          %s2452 = smul.addr %s2448, 128
          %s2453 = scalar_lea.hbm %s16, %s2452
          %s2454 = sshll.u32 [#allocation7], 4
          %s2455 = int_to_ptr.vmem [resolvable:$true] %s2454
          %2460 = dma.vmem_to_hbm [thread:$0]  %s2455, 256, %s2453, [#allocation4], 128, 128, 8
        $region104: #{tpu_custom_call.1} parent=83 // pred_fallthru
          _
        // Predicated region
        $region105: #{tpu_custom_call.1} parent=83 // pred_check
          %p2461 = pneg %p473
        $region106: #{tpu_custom_call.1} parent=83 // pred_check_branch
          %2463 = sbr.rel (%p2461) target = $region108
        $region107: #{tpu_custom_call.1} parent=83 // pred_region
          %2464 = dma.done [#allocation4], 256
        $region108: #{tpu_custom_call.1} parent=83 // pred_fallthru
          _
      $region84: #{tpu_custom_call.1} parent=5 // pred_fallthru
        _
      %p2465 = scmp.le.s32.totalorder 2, %s27
      // Predicated region
      $region109: #{tpu_custom_call.1} parent=5 // pred_check
        %p2466 = pneg %p2465
      $region110: #{tpu_custom_call.1} parent=5 // pred_check_branch
        %2468 = sbr.rel (%p2466) target = $region112
      $region111: #{tpu_custom_call.1} parent=5 // pred_region
        %s2469 = ssub.s32 %s27, 2
      $region112: #{tpu_custom_call.1} parent=5 // pred_fallthru
        _
    $region6: #{tpu_custom_call.1} parent=1 // loop_footer
      %s31 = sadd.s32 1, %s27
    $region7: #{tpu_custom_call.1} parent=1 // loop_footer_branch
      %26 = sbr.rel target = $region3
    $region8: #{tpu_custom_call.1} parent=1 // loop_exit
      _
    %2470 = vsyncpa [#allocation3], 1
    %s2471 = scalar_lea.sflag [#allocation3], 1
    %2472 = vsyncpa %s2471, 1
    %2473 = vsyncpa [#allocation6], 1
    %s2474 = scalar_lea.sflag [#allocation6], 1
    %2475 = vsyncpa %s2474, 1
    %2476 = vsyncpa [#allocation4], 1
    %s2477 = scalar_lea.sflag [#allocation4], 1
    %2478 = vsyncpa %s2477, 1

</llo_original>
